<compile_context>
chip_gen: v7x
topology: tpu7x:2x2x1
jax: 0.10.0
libtpu: 0.0.40
codegen_flags: <defaults>
</compile_context>

<pallas_src>
import numpy as np
import jax
import jax.numpy as jnp
from jax import lax
from jax.experimental import pallas as pl
from jax.experimental.pallas import tpu as pltpu  # noqa: F401  (TPU backend)

# ---------------- configuration (consistent with the torch module) ----------------
B = 2                      # batch
PATCH = 6                  # patch_size; H = W = PATCH inside forward
N = PATCH * PATCH          # tokens (36); forward requires N == patch_size**2
C = 36                     # dim; this specialisation requires C == N (see TODO above)
NUM_HEADS = 4              # divides C
HD = C // NUM_HEADS        # head_dim (9)
MLP_RATIO = 2
HID = C * MLP_RATIO        # LAConv hidden_dim (72)
KS = 3                     # conv kernel (stride 1, padding 1)
D3 = 3 * C                 # LAConv outdim = 3*dim (108)
NQ = N // 3                # tokens per qkv chunk (12)
SCALE = float(HD) ** -0.5  # qk_scale = head_dim ** -0.5

assert C == N and N % 3 == 0 and C % NUM_HEADS == 0


# ---------------- static host-side constants (numpy) ----------------
def _im2col_token_indices():
    """(N, 9) token indices for the 3x3 / stride-1 / pad-1 window; N == zero-pad row."""
    idx = np.full((N, KS * KS), N, dtype=np.int32)
    for h in range(PATCH):
        for w in range(PATCH):
            for ki in range(KS):
                for kj in range(KS):
                    hh, ww = h + ki - 1, w + kj - 1
                    if 0 <= hh < PATCH and 0 <= ww < PATCH:
                        idx[h * PATCH + w, ki * KS + kj] = hh * PATCH + ww
    return idx


def _chunk_permutation_matrices():
    """sum_r PCALL[r] @ a_b[:, r*C:(r+1)*C] reproduces torch's flat chunk(3) + reshape +
    permute + view chain in the transposed frame:
        raw_b[i*N + e, c'] = a_b[i*NQ + e//3, (e%3)*C + c'],  chunks i = 0/1/2 -> q/k/v."""
    pc = np.zeros((3, 3 * N, N), np.float32)
    for i in range(3):
        for e in range(N):
            pc[e % 3, i * N + e, i * NQ + e // 3] = 1.0
    return pc


def _batch_join_matrices():
    """raw_b @ EB[b] places batch b's columns at lane offset b*N (cross-batch lane join
    done as an exact MXU matmul instead of an unaligned concatenate)."""
    eb = np.zeros((B, N, B * N), np.float32)
    for b in range(B):
        for c in range(N):
            eb[b, c, b * N + c] = 1.0
    return eb


def _batch_block_mask():
    """(B*N, B*N) additive mask: 0 on same-batch blocks, -1e30 on cross-batch blocks."""
    bid = np.repeat(np.arange(B), N)
    return np.where(bid[:, None] == bid[None, :], 0.0, -1e30).astype(np.float32)


IM2COL_IDX = _im2col_token_indices()
PCALL = _chunk_permutation_matrices()
EB = _batch_join_matrices()
AMASK = _batch_block_mask()


# ---------------- the fused Pallas kernel (whole forward, VMEM-resident) ----------------
def _dwattention_kernel(xq_ref, xf_ref, patches_ref, w1_ref, b1_ref, w2_ref,
                        b2_ref, w3_ref, b3_ref, pc_ref, eb_ref, wout_ref,
                        amask_ref, out_ref):
    f32, bf16 = jnp.float32, jnp.bfloat16

    # ---- LAConv.attention1: 3x3 conv (im2col matmul) + two 1x1 convs, ReLU/ReLU/Sigmoid,
    #      over ALL B*N pixels at once. bf16 MXU operands, f32 accumulation / elementwise.
    h = jnp.dot(patches_ref[...], w1_ref[...], preferred_element_type=f32) + b1_ref[...]
    h = jnp.maximum(h, 0.0)
    h = jnp.dot(h.astype(bf16), w2_ref[...], preferred_element_type=f32) + b2_ref[...]
    h = jnp.maximum(h, 0.0)
    z = jnp.dot(h.astype(bf16), w3_ref[...], preferred_element_type=f32) + b3_ref[...]
    a = pl.reciprocal(1.0 + jnp.exp(-z), approx=True)        # Sigmoid -> (B*N, 3C) f32
    a16 = a.astype(bf16)

    # ---- torch chunk(3)/reshape scramble + cross-batch lane join (exact 0/1 matmuls).
    #      raw[i*N + e, b*N + c'] = a[b*N + i*NQ + e//3, (e%3)*C + c']
    #      6 permutation matmuls + 2 join matmuls; everything downstream is batch-fused.
    raws = []
    for b in range(B):
        ab = a16[b * N:(b + 1) * N, :]                                 # (N, 3C)
        rb = (jnp.dot(pc_ref[0], ab[:, 0 * C:1 * C], preferred_element_type=f32)
              + jnp.dot(pc_ref[1], ab[:, 1 * C:2 * C], preferred_element_type=f32)
              + jnp.dot(pc_ref[2], ab[:, 2 * C:3 * C], preferred_element_type=f32))
        raws.append(rb.astype(bf16))                                   # (3N, N), exact
    raw = (jnp.dot(raws[0], eb_ref[0], preferred_element_type=f32)
           + jnp.dot(raws[1], eb_ref[1], preferred_element_type=f32))  # (3N, B*N) f32

    # q/k/v in the transposed frame: rows = attention channels (m_tok), cols = (b, token).
    # The LAConv "* y" multiplier is xf; qk_scale is pre-folded into xq by the wrapper.
    qt = (raw[0 * C:1 * C, :] * xq_ref[...]).astype(bf16)              # (C, B*N)
    kt = (raw[1 * C:2 * C, :] * xf_ref[...]).astype(bf16)
    vt = (raw[2 * C:3 * C, :] * xf_ref[...]).astype(bf16)

    # ---- multi-head attention, batch-fused; cross-batch blocks masked BEFORE softmax;
    #      head-concat folded into per-head out_proj partial matmuls (accumulated).
    out = jnp.zeros((C, B * N), f32)
    for hh in range(NUM_HEADS):
        lo, hi = hh * HD, (hh + 1) * HD
        qh, kh, vh = qt[lo:hi, :], kt[lo:hi, :], vt[lo:hi, :]          # (HD, B*N)
        s = lax.dot_general(qh, kh, (((0,), (0,)), ((), ())),
                            preferred_element_type=f32)                # (B*N, B*N)
        s = s + amask_ref[...]                                         # -1e30 off-diag
        s = s - jnp.max(s, axis=-1, keepdims=True)
        e = jnp.exp(s)
        p = (e * pl.reciprocal(jnp.sum(e, axis=-1, keepdims=True),
                               approx=True)).astype(bf16)              # softmax
        attn_t = lax.dot_general(vh, p, (((1,), (1,)), ((), ())),
                                 preferred_element_type=f32)           # (HD, B*N)
        out = out + lax.dot_general(wout_ref[lo:hi, :], attn_t.astype(bf16),
                                    (((0,), (0,)), ((), ())),
                                    preferred_element_type=f32)        # (C, B*N)

    out_ref[...] = out                                                 # 72-lane stores


# ---------------- wrapper: layout glue (one-time XLA ops) + one pallas_call ----------------
def dwattention_forward_pallas(params, x):
    Bx, Nx, Cx = x.shape
    # shape contract of this specialisation, tied to the actual params (not just constants)
    Cd = params['out_w'].shape[0]
    assert Cx == Cd and params['conv3_w'].shape[0] == 3 * Cd
    assert Nx == PATCH * PATCH and Cx == Nx and Nx % 3 == 0 and Cx % NUM_HEADS == 0
    assert (Bx, Nx, Cx) == (B, N, C)
    bf16 = jnp.bfloat16

    # F.unfold "y" in the transposed frame, both batches side by side on lanes:
    # xf[m_tok, b*N + n] = x[b, n, m_tok];  qk_scale pre-folded into the q-side copy.
    xf32 = jnp.transpose(x, (2, 0, 1)).reshape(Cx, Bx * Nx)
    xq = (xf32 * SCALE).astype(bf16)
    xf = xf32.astype(bf16)

    # im2col patch matrix for the 3x3/stride1/pad1 conv: (B*N, 9C), (ki,kj,c) column order.
    # TODO(synk): on v5e it could pay to build this inside the kernel from x (9 shifted
    # accumulations) instead of shipping the 9x-larger slab from HBM.
    x_pad = jnp.concatenate([x, jnp.zeros((Bx, 1, Cx), x.dtype)], axis=1)
    patches = x_pad[:, IM2COL_IDX, :].reshape(Bx * Nx, KS * KS * Cx).astype(bf16)

    w1 = jnp.transpose(params['conv1_w'], (2, 3, 1, 0)).reshape(KS * KS * Cx, HID).astype(bf16)
    b1 = params['conv1_b'].reshape(1, HID)
    w2 = params['conv2_w'][:, :, 0, 0].T.astype(bf16)
    b2 = params['conv2_b'].reshape(1, HID)
    w3 = params['conv3_w'][:, :, 0, 0].T.astype(bf16)
    b3 = params['conv3_b'].reshape(1, D3)
    wout_t = params['out_w'].T.astype(bf16)
    pc = jnp.asarray(PCALL, dtype=bf16)     # (3, 3N, N)  exact 0/1 in bf16
    eb = jnp.asarray(EB, dtype=bf16)        # (B, N, B*N) exact 0/1 in bf16
    amask = jnp.asarray(AMASK)              # (B*N, B*N)  f32 additive mask

    # Single grid-less pallas_call; all operands fit as whole-array VMEM blocks.
    # (v7x alternative: grid=(B,) with dimension_semantics=("parallel",) to use both
    #  TensorCores -- intentionally not done, it conflicts with the batch fusion and
    #  only adds per-step overhead on v5e/v6e.)
    out_t = pl.pallas_call(
        _dwattention_kernel,
        out_shape=jax.ShapeDtypeStruct((Cx, Bx * Nx), jnp.float32),
    )(xq, xf, patches, w1, b1, w2, b2, w3, b3, pc, eb, wout_t, amask)

    # out_t[o, b*N + n]  ->  (B, N, C)
    return jnp.transpose(out_t.reshape(Cx, Bx, Nx), (1, 2, 0))


# ---------------- pure-JAX reference (faithful replica of the torch forward) ----------------
def dwattention_forward_ref(params, x):
    Bx, Nx, Cx = x.shape
    Hh = Ww = PATCH
    x_img = jnp.transpose(x.reshape(Bx, Hh, Ww, Cx), (0, 3, 1, 2))    # (B, C, H, W)

    # LAConv: y = F.unfold(x, patch, stride=patch).permute(0, 2, 1); L == 1 here
    y = x_img.reshape(Bx, 1, Cx * Hh * Ww)

    def conv2d(inp, w, b, pad):
        o = lax.conv_general_dilated(inp, w, (1, 1), ((pad, pad), (pad, pad)),
                                     dimension_numbers=('NCHW', 'OIHW', 'NCHW'))
        return o + b[None, :, None, None]

    a = jnp.maximum(conv2d(x_img, params['conv1_w'], params['conv1_b'], 1), 0.0)
    a = jnp.maximum(conv2d(a, params['conv2_w'], params['conv2_b'], 0), 0.0)
    a = jax.nn.sigmoid(conv2d(a, params['conv3_w'], params['conv3_b'], 0))   # (B, 3C, H, W)

    xw = a.reshape(Bx, D3, Hh // PATCH, PATCH, Ww // PATCH, PATCH)
    xw = jnp.transpose(xw, (0, 2, 4, 3, 5, 1)).reshape(Bx, 1, PATCH * PATCH * D3)
    chunks = [xw[..., i * (Nx * Cx):(i + 1) * (Nx * Cx)] for i in range(3)]
    qkv = [jnp.transpose((ch * y).reshape(Bx, PATCH, PATCH, Cx), (0, 3, 1, 2))
           for ch in chunks]                                          # each (B, C, H, W)
    q, k, v = qkv
    q = q * SCALE

    def to_heads(t):     # torch: .contiguous().view(B, N, heads, hd).transpose(1, 2)
        return jnp.transpose(t.reshape(Bx, Nx, NUM_HEADS, HD), (0, 2, 1, 3))

    q, k, v = to_heads(q), to_heads(k), to_heads(v)
    s = jnp.einsum('bhnd,bhmd->bhnm', q, k)
    p = jax.nn.softmax(s, axis=-1)
    attn = jnp.einsum('bhnm,bhmd->bhnd', p, v)
    attn = jnp.transpose(attn, (0, 2, 1, 3)).reshape(Bx, Nx, Cx)
    return attn @ params['out_w'].T                                    # out_proj, no bias


# ---------------- deterministic parameter init (torch layouts) ----------------
def init_params(key):
    ks = jax.random.split(key, 8)
    s = 0.1
    return dict(
        conv1_w=jax.random.normal(ks[0], (HID, C, KS, KS), jnp.float32) * s,
        conv1_b=jax.random.normal(ks[1], (HID,), jnp.float32) * s,
        conv2_w=jax.random.normal(ks[2], (HID, HID, 1, 1), jnp.float32) * s,
        conv2_b=jax.random.normal(ks[3], (HID,), jnp.float32) * s,
        conv3_w=jax.random.normal(ks[4], (D3, HID, 1, 1), jnp.float32) * s,
        conv3_b=jax.random.normal(ks[5], (D3,), jnp.float32) * s,
        out_w=jax.random.normal(ks[6], (C, C), jnp.float32) * s,   # out_proj (bias=False)
        # in_proj_weight / in_proj_bias exist on the torch module but are unused in forward.
    )


if __name__ == "__main__":
    key = jax.random.PRNGKey(0)
    pkey, xkey = jax.random.split(key)
    params = init_params(pkey)
    x = jax.random.normal(xkey, (B, N, C), jnp.float32)   # (B, N, C) with N = patch_size**2

    fwd = jax.jit(lambda xx: dwattention_forward_pallas(params, xx))
    out = jax.block_until_ready(fwd(x))
    assert out.shape == (B, N, C)

    ref = jax.block_until_ready(jax.jit(lambda xx: dwattention_forward_ref(params, xx))(x))
    # Tolerance budgets for the bf16 quantisation of the kernel's matmul operands
    # (weights / patches / xf) against the all-f32 reference; a layout, permutation or
    # masking bug would show up as O(0.3+) discrepancies.
    np.testing.assert_allclose(np.asarray(out), np.asarray(ref), atol=4e-2, rtol=4e-2)

    print("KERNEL_OK")
</pallas_src>

<mosaic_0001>
module attributes {stable_mosaic.version = 11 : i64} {
  func.func @_dwattention_kernel(%arg0: memref<36x72xbf16, #tpu.memory_space<vmem>>, %arg1: memref<36x72xbf16, #tpu.memory_space<vmem>>, %arg2: memref<72x324xbf16, #tpu.memory_space<vmem>>, %arg3: memref<324x72xbf16, #tpu.memory_space<vmem>>, %arg4: memref<1x72xf32, #tpu.memory_space<vmem>>, %arg5: memref<72x72xbf16, #tpu.memory_space<vmem>>, %arg6: memref<1x72xf32, #tpu.memory_space<vmem>>, %arg7: memref<72x108xbf16, #tpu.memory_space<vmem>>, %arg8: memref<1x108xf32, #tpu.memory_space<vmem>>, %arg9: memref<3x108x36xbf16, #tpu.memory_space<vmem>>, %arg10: memref<2x36x72xbf16, #tpu.memory_space<vmem>>, %arg11: memref<36x36xbf16, #tpu.memory_space<vmem>>, %arg12: memref<72x72xf32, #tpu.memory_space<vmem>>, %arg13: memref<36x72xf32, #tpu.memory_space<vmem>>) attributes {dimension_semantics = [], scalar_prefetch = 0 : i64, scratch_operands = 0 : i64, tpu.core_type = #tpu.core_type<tc>} {
    %c0 = arith.constant 0 : index
    %c0_0 = arith.constant 0 : index
    %0 = vector.load %arg2[%c0, %c0_0] : memref<72x324xbf16, #tpu.memory_space<vmem>>, vector<72x324xbf16>
    %c0_1 = arith.constant 0 : index
    %c0_2 = arith.constant 0 : index
    %1 = vector.load %arg3[%c0_1, %c0_2] : memref<324x72xbf16, #tpu.memory_space<vmem>>, vector<324x72xbf16>
    %cst = arith.constant dense<0.000000e+00> : vector<72x72xf32>
    %2 = tpu.matmul %0, %1, %cst {dimension_numbers = #tpu.dot_dimension_numbers<[1], [0], [0], [1], [0, 0, 1, 1], [], []>} : vector<72x324xbf16>, vector<324x72xbf16>, vector<72x72xf32> -> vector<72x72xf32>
    %c0_3 = arith.constant 0 : index
    %c0_4 = arith.constant 0 : index
    %3 = vector.load %arg4[%c0_3, %c0_4] : memref<1x72xf32, #tpu.memory_space<vmem>>, vector<1x72xf32>
    %4 = vector.broadcast %3 : vector<1x72xf32> to vector<72x72xf32>
    %5 = arith.addf %2, %4 : vector<72x72xf32>
    %cst_5 = arith.constant 0.000000e+00 : f32
    %6 = vector.broadcast %cst_5 : f32 to vector<72x72xf32>
    %7 = arith.maximumf %5, %6 : vector<72x72xf32>
    %8 = arith.truncf %7 : vector<72x72xf32> to vector<72x72xbf16>
    %c0_6 = arith.constant 0 : index
    %c0_7 = arith.constant 0 : index
    %9 = vector.load %arg5[%c0_6, %c0_7] : memref<72x72xbf16, #tpu.memory_space<vmem>>, vector<72x72xbf16>
    %cst_8 = arith.constant dense<0.000000e+00> : vector<72x72xf32>
    %10 = tpu.matmul %8, %9, %cst_8 {dimension_numbers = #tpu.dot_dimension_numbers<[1], [0], [0], [1], [0, 0, 1, 1], [], []>} : vector<72x72xbf16>, vector<72x72xbf16>, vector<72x72xf32> -> vector<72x72xf32>
    %c0_9 = arith.constant 0 : index
    %c0_10 = arith.constant 0 : index
    %11 = vector.load %arg6[%c0_9, %c0_10] : memref<1x72xf32, #tpu.memory_space<vmem>>, vector<1x72xf32>
    %12 = vector.broadcast %11 : vector<1x72xf32> to vector<72x72xf32>
    %13 = arith.addf %10, %12 : vector<72x72xf32>
    %cst_11 = arith.constant 0.000000e+00 : f32
    %14 = vector.broadcast %cst_11 : f32 to vector<72x72xf32>
    %15 = arith.maximumf %13, %14 : vector<72x72xf32>
    %16 = arith.truncf %15 : vector<72x72xf32> to vector<72x72xbf16>
    %c0_12 = arith.constant 0 : index
    %c0_13 = arith.constant 0 : index
    %17 = vector.load %arg7[%c0_12, %c0_13] : memref<72x108xbf16, #tpu.memory_space<vmem>>, vector<72x108xbf16>
    %cst_14 = arith.constant dense<0.000000e+00> : vector<72x108xf32>
    %18 = tpu.matmul %16, %17, %cst_14 {dimension_numbers = #tpu.dot_dimension_numbers<[1], [0], [0], [1], [0, 0, 1, 1], [], []>} : vector<72x72xbf16>, vector<72x108xbf16>, vector<72x108xf32> -> vector<72x108xf32>
    %c0_15 = arith.constant 0 : index
    %c0_16 = arith.constant 0 : index
    %19 = vector.load %arg8[%c0_15, %c0_16] : memref<1x108xf32, #tpu.memory_space<vmem>>, vector<1x108xf32>
    %20 = vector.broadcast %19 : vector<1x108xf32> to vector<72x108xf32>
    %21 = arith.addf %18, %20 : vector<72x108xf32>
    %cst_17 = arith.constant 0.000000e+00 : f32
    %22 = vector.broadcast %cst_17 : f32 to vector<72x108xf32>
    %23 = arith.subf %22, %21 : vector<72x108xf32>
    %24 = math.exp %23 : vector<72x108xf32>
    %cst_18 = arith.constant 1.000000e+00 : f32
    %25 = vector.broadcast %cst_18 : f32 to vector<72x108xf32>
    %26 = arith.addf %25, %24 : vector<72x108xf32>
    %27 = tpu.reciprocal %26 {approx = true} : vector<72x108xf32> -> vector<72x108xf32>
    %28 = arith.truncf %27 : vector<72x108xf32> to vector<72x108xbf16>
    %29 = vector.extract_strided_slice %28 {offsets = [0, 0], sizes = [36, 108], strides = [1, 1]} : vector<72x108xbf16> to vector<36x108xbf16>
    %c0_19 = arith.constant 0 : index
    %c0_20 = arith.constant 0 : index
    %c0_21 = arith.constant 0 : index
    %30 = vector.load %arg9[%c0_19, %c0_20, %c0_21] : memref<3x108x36xbf16, #tpu.memory_space<vmem>>, vector<1x108x36xbf16>
    %31 = vector.shape_cast %30 : vector<1x108x36xbf16> to vector<108x36xbf16>
    %32 = vector.extract_strided_slice %29 {offsets = [0, 0], sizes = [36, 36], strides = [1, 1]} : vector<36x108xbf16> to vector<36x36xbf16>
    %cst_22 = arith.constant dense<0.000000e+00> : vector<108x36xf32>
    %33 = tpu.matmul %31, %32, %cst_22 {dimension_numbers = #tpu.dot_dimension_numbers<[1], [0], [0], [1], [0, 0, 1, 1], [], []>} : vector<108x36xbf16>, vector<36x36xbf16>, vector<108x36xf32> -> vector<108x36xf32>
    %c1 = arith.constant 1 : index
    %c0_23 = arith.constant 0 : index
    %c0_24 = arith.constant 0 : index
    %34 = vector.load %arg9[%c1, %c0_23, %c0_24] : memref<3x108x36xbf16, #tpu.memory_space<vmem>>, vector<1x108x36xbf16>
    %35 = vector.shape_cast %34 : vector<1x108x36xbf16> to vector<108x36xbf16>
    %36 = vector.extract_strided_slice %29 {offsets = [0, 36], sizes = [36, 36], strides = [1, 1]} : vector<36x108xbf16> to vector<36x36xbf16>
    %cst_25 = arith.constant dense<0.000000e+00> : vector<108x36xf32>
    %37 = tpu.matmul %35, %36, %cst_25 {dimension_numbers = #tpu.dot_dimension_numbers<[1], [0], [0], [1], [0, 0, 1, 1], [], []>} : vector<108x36xbf16>, vector<36x36xbf16>, vector<108x36xf32> -> vector<108x36xf32>
    %38 = arith.addf %33, %37 : vector<108x36xf32>
    %c2 = arith.constant 2 : index
    %c0_26 = arith.constant 0 : index
    %c0_27 = arith.constant 0 : index
    %39 = vector.load %arg9[%c2, %c0_26, %c0_27] : memref<3x108x36xbf16, #tpu.memory_space<vmem>>, vector<1x108x36xbf16>
    %40 = vector.shape_cast %39 : vector<1x108x36xbf16> to vector<108x36xbf16>
    %41 = vector.extract_strided_slice %29 {offsets = [0, 72], sizes = [36, 36], strides = [1, 1]} : vector<36x108xbf16> to vector<36x36xbf16>
    %cst_28 = arith.constant dense<0.000000e+00> : vector<108x36xf32>
    %42 = tpu.matmul %40, %41, %cst_28 {dimension_numbers = #tpu.dot_dimension_numbers<[1], [0], [0], [1], [0, 0, 1, 1], [], []>} : vector<108x36xbf16>, vector<36x36xbf16>, vector<108x36xf32> -> vector<108x36xf32>
    %43 = arith.addf %38, %42 : vector<108x36xf32>
    %44 = arith.truncf %43 : vector<108x36xf32> to vector<108x36xbf16>
    %45 = vector.extract_strided_slice %28 {offsets = [36, 0], sizes = [36, 108], strides = [1, 1]} : vector<72x108xbf16> to vector<36x108xbf16>
    %c0_29 = arith.constant 0 : index
    %c0_30 = arith.constant 0 : index
    %c0_31 = arith.constant 0 : index
    %46 = vector.load %arg9[%c0_29, %c0_30, %c0_31] : memref<3x108x36xbf16, #tpu.memory_space<vmem>>, vector<1x108x36xbf16>
    %47 = vector.shape_cast %46 : vector<1x108x36xbf16> to vector<108x36xbf16>
    %48 = vector.extract_strided_slice %45 {offsets = [0, 0], sizes = [36, 36], strides = [1, 1]} : vector<36x108xbf16> to vector<36x36xbf16>
    %cst_32 = arith.constant dense<0.000000e+00> : vector<108x36xf32>
    %49 = tpu.matmul %47, %48, %cst_32 {dimension_numbers = #tpu.dot_dimension_numbers<[1], [0], [0], [1], [0, 0, 1, 1], [], []>} : vector<108x36xbf16>, vector<36x36xbf16>, vector<108x36xf32> -> vector<108x36xf32>
    %c1_33 = arith.constant 1 : index
    %c0_34 = arith.constant 0 : index
    %c0_35 = arith.constant 0 : index
    %50 = vector.load %arg9[%c1_33, %c0_34, %c0_35] : memref<3x108x36xbf16, #tpu.memory_space<vmem>>, vector<1x108x36xbf16>
    %51 = vector.shape_cast %50 : vector<1x108x36xbf16> to vector<108x36xbf16>
    %52 = vector.extract_strided_slice %45 {offsets = [0, 36], sizes = [36, 36], strides = [1, 1]} : vector<36x108xbf16> to vector<36x36xbf16>
    %cst_36 = arith.constant dense<0.000000e+00> : vector<108x36xf32>
    %53 = tpu.matmul %51, %52, %cst_36 {dimension_numbers = #tpu.dot_dimension_numbers<[1], [0], [0], [1], [0, 0, 1, 1], [], []>} : vector<108x36xbf16>, vector<36x36xbf16>, vector<108x36xf32> -> vector<108x36xf32>
    %54 = arith.addf %49, %53 : vector<108x36xf32>
    %c2_37 = arith.constant 2 : index
    %c0_38 = arith.constant 0 : index
    %c0_39 = arith.constant 0 : index
    %55 = vector.load %arg9[%c2_37, %c0_38, %c0_39] : memref<3x108x36xbf16, #tpu.memory_space<vmem>>, vector<1x108x36xbf16>
    %56 = vector.shape_cast %55 : vector<1x108x36xbf16> to vector<108x36xbf16>
    %57 = vector.extract_strided_slice %45 {offsets = [0, 72], sizes = [36, 36], strides = [1, 1]} : vector<36x108xbf16> to vector<36x36xbf16>
    %cst_40 = arith.constant dense<0.000000e+00> : vector<108x36xf32>
    %58 = tpu.matmul %56, %57, %cst_40 {dimension_numbers = #tpu.dot_dimension_numbers<[1], [0], [0], [1], [0, 0, 1, 1], [], []>} : vector<108x36xbf16>, vector<36x36xbf16>, vector<108x36xf32> -> vector<108x36xf32>
    %59 = arith.addf %54, %58 : vector<108x36xf32>
    %60 = arith.truncf %59 : vector<108x36xf32> to vector<108x36xbf16>
    %c0_41 = arith.constant 0 : index
    %c0_42 = arith.constant 0 : index
    %c0_43 = arith.constant 0 : index
    %61 = vector.load %arg10[%c0_41, %c0_42, %c0_43] : memref<2x36x72xbf16, #tpu.memory_space<vmem>>, vector<1x36x72xbf16>
    %62 = vector.shape_cast %61 : vector<1x36x72xbf16> to vector<36x72xbf16>
    %cst_44 = arith.constant dense<0.000000e+00> : vector<108x72xf32>
    %63 = tpu.matmul %44, %62, %cst_44 {dimension_numbers = #tpu.dot_dimension_numbers<[1], [0], [0], [1], [0, 0, 1, 1], [], []>} : vector<108x36xbf16>, vector<36x72xbf16>, vector<108x72xf32> -> vector<108x72xf32>
    %c1_45 = arith.constant 1 : index
    %c0_46 = arith.constant 0 : index
    %c0_47 = arith.constant 0 : index
    %64 = vector.load %arg10[%c1_45, %c0_46, %c0_47] : memref<2x36x72xbf16, #tpu.memory_space<vmem>>, vector<1x36x72xbf16>
    %65 = vector.shape_cast %64 : vector<1x36x72xbf16> to vector<36x72xbf16>
    %cst_48 = arith.constant dense<0.000000e+00> : vector<108x72xf32>
    %66 = tpu.matmul %60, %65, %cst_48 {dimension_numbers = #tpu.dot_dimension_numbers<[1], [0], [0], [1], [0, 0, 1, 1], [], []>} : vector<108x36xbf16>, vector<36x72xbf16>, vector<108x72xf32> -> vector<108x72xf32>
    %67 = arith.addf %63, %66 : vector<108x72xf32>
    %68 = vector.extract_strided_slice %67 {offsets = [0, 0], sizes = [36, 72], strides = [1, 1]} : vector<108x72xf32> to vector<36x72xf32>
    %c0_49 = arith.constant 0 : index
    %c0_50 = arith.constant 0 : index
    %69 = vector.load %arg0[%c0_49, %c0_50] : memref<36x72xbf16, #tpu.memory_space<vmem>>, vector<36x72xbf16>
    %70 = arith.extf %69 : vector<36x72xbf16> to vector<36x72xf32>
    %71 = arith.mulf %68, %70 : vector<36x72xf32>
    %72 = arith.truncf %71 : vector<36x72xf32> to vector<36x72xbf16>
    %73 = vector.extract_strided_slice %67 {offsets = [36, 0], sizes = [36, 72], strides = [1, 1]} : vector<108x72xf32> to vector<36x72xf32>
    %c0_51 = arith.constant 0 : index
    %c0_52 = arith.constant 0 : index
    %74 = vector.load %arg1[%c0_51, %c0_52] : memref<36x72xbf16, #tpu.memory_space<vmem>>, vector<36x72xbf16>
    %75 = arith.extf %74 : vector<36x72xbf16> to vector<36x72xf32>
    %76 = arith.mulf %73, %75 : vector<36x72xf32>
    %77 = arith.truncf %76 : vector<36x72xf32> to vector<36x72xbf16>
    %78 = vector.extract_strided_slice %67 {offsets = [72, 0], sizes = [36, 72], strides = [1, 1]} : vector<108x72xf32> to vector<36x72xf32>
    %c0_53 = arith.constant 0 : index
    %c0_54 = arith.constant 0 : index
    %79 = vector.load %arg1[%c0_53, %c0_54] : memref<36x72xbf16, #tpu.memory_space<vmem>>, vector<36x72xbf16>
    %80 = arith.extf %79 : vector<36x72xbf16> to vector<36x72xf32>
    %81 = arith.mulf %78, %80 : vector<36x72xf32>
    %82 = arith.truncf %81 : vector<36x72xf32> to vector<36x72xbf16>
    %cst_55 = arith.constant 0.000000e+00 : f32
    %83 = vector.broadcast %cst_55 : f32 to vector<36x72xf32>
    %84 = vector.extract_strided_slice %72 {offsets = [0, 0], sizes = [9, 72], strides = [1, 1]} : vector<36x72xbf16> to vector<9x72xbf16>
    %85 = vector.extract_strided_slice %77 {offsets = [0, 0], sizes = [9, 72], strides = [1, 1]} : vector<36x72xbf16> to vector<9x72xbf16>
    %86 = vector.extract_strided_slice %82 {offsets = [0, 0], sizes = [9, 72], strides = [1, 1]} : vector<36x72xbf16> to vector<9x72xbf16>
    %cst_56 = arith.constant dense<0.000000e+00> : vector<72x72xf32>
    %87 = tpu.matmul %84, %85, %cst_56 {dimension_numbers = #tpu.dot_dimension_numbers<[0], [0], [1], [1], [0, 1, 1, 1], [], []>} : vector<9x72xbf16>, vector<9x72xbf16>, vector<72x72xf32> -> vector<72x72xf32>
    %c0_57 = arith.constant 0 : index
    %c0_58 = arith.constant 0 : index
    %88 = vector.load %arg12[%c0_57, %c0_58] : memref<72x72xf32, #tpu.memory_space<vmem>>, vector<72x72xf32>
    %89 = arith.addf %87, %88 : vector<72x72xf32>
    %cst_59 = arith.constant dense<0xFF800000> : vector<72xf32>
    %90 = vector.multi_reduction <maximumf>, %89, %cst_59 [1] : vector<72x72xf32> to vector<72xf32>
    %91 = vector.shape_cast %90 : vector<72xf32> to vector<72x1xf32>
    %92 = vector.broadcast %91 : vector<72x1xf32> to vector<72x72xf32>
    %93 = arith.subf %89, %92 : vector<72x72xf32>
    %94 = math.exp %93 : vector<72x72xf32>
    %cst_60 = arith.constant dense<0.000000e+00> : vector<72xf32>
    %95 = vector.multi_reduction <add>, %94, %cst_60 [1] : vector<72x72xf32> to vector<72xf32>
    %96 = vector.shape_cast %95 : vector<72xf32> to vector<72x1xf32>
    %97 = tpu.reciprocal %96 {approx = true} : vector<72x1xf32> -> vector<72x1xf32>
    %98 = vector.broadcast %97 : vector<72x1xf32> to vector<72x72xf32>
    %99 = arith.mulf %94, %98 : vector<72x72xf32>
    %100 = arith.truncf %99 : vector<72x72xf32> to vector<72x72xbf16>
    %cst_61 = arith.constant dense<0.000000e+00> : vector<9x72xf32>
    %101 = tpu.matmul %86, %100, %cst_61 {dimension_numbers = #tpu.dot_dimension_numbers<[1], [1], [0], [0], [0, 0, 1, 0], [], []>} : vector<9x72xbf16>, vector<72x72xbf16>, vector<9x72xf32> -> vector<9x72xf32>
    %c0_62 = arith.constant 0 : index
    %c0_63 = arith.constant 0 : index
    %102 = vector.load %arg11[%c0_62, %c0_63] : memref<36x36xbf16, #tpu.memory_space<vmem>>, vector<9x36xbf16>
    %103 = arith.truncf %101 : vector<9x72xf32> to vector<9x72xbf16>
    %cst_64 = arith.constant dense<0.000000e+00> : vector<36x72xf32>
    %104 = tpu.matmul %102, %103, %cst_64 {dimension_numbers = #tpu.dot_dimension_numbers<[0], [0], [1], [1], [0, 1, 1, 1], [], []>} : vector<9x36xbf16>, vector<9x72xbf16>, vector<36x72xf32> -> vector<36x72xf32>
    %105 = arith.addf %83, %104 : vector<36x72xf32>
    %106 = vector.extract_strided_slice %72 {offsets = [9, 0], sizes = [9, 72], strides = [1, 1]} : vector<36x72xbf16> to vector<9x72xbf16>
    %107 = vector.extract_strided_slice %77 {offsets = [9, 0], sizes = [9, 72], strides = [1, 1]} : vector<36x72xbf16> to vector<9x72xbf16>
    %108 = vector.extract_strided_slice %82 {offsets = [9, 0], sizes = [9, 72], strides = [1, 1]} : vector<36x72xbf16> to vector<9x72xbf16>
    %cst_65 = arith.constant dense<0.000000e+00> : vector<72x72xf32>
    %109 = tpu.matmul %106, %107, %cst_65 {dimension_numbers = #tpu.dot_dimension_numbers<[0], [0], [1], [1], [0, 1, 1, 1], [], []>} : vector<9x72xbf16>, vector<9x72xbf16>, vector<72x72xf32> -> vector<72x72xf32>
    %c0_66 = arith.constant 0 : index
    %c0_67 = arith.constant 0 : index
    %110 = vector.load %arg12[%c0_66, %c0_67] : memref<72x72xf32, #tpu.memory_space<vmem>>, vector<72x72xf32>
    %111 = arith.addf %109, %110 : vector<72x72xf32>
    %cst_68 = arith.constant dense<0xFF800000> : vector<72xf32>
    %112 = vector.multi_reduction <maximumf>, %111, %cst_68 [1] : vector<72x72xf32> to vector<72xf32>
    %113 = vector.shape_cast %112 : vector<72xf32> to vector<72x1xf32>
    %114 = vector.broadcast %113 : vector<72x1xf32> to vector<72x72xf32>
    %115 = arith.subf %111, %114 : vector<72x72xf32>
    %116 = math.exp %115 : vector<72x72xf32>
    %cst_69 = arith.constant dense<0.000000e+00> : vector<72xf32>
    %117 = vector.multi_reduction <add>, %116, %cst_69 [1] : vector<72x72xf32> to vector<72xf32>
    %118 = vector.shape_cast %117 : vector<72xf32> to vector<72x1xf32>
    %119 = tpu.reciprocal %118 {approx = true} : vector<72x1xf32> -> vector<72x1xf32>
    %120 = vector.broadcast %119 : vector<72x1xf32> to vector<72x72xf32>
    %121 = arith.mulf %116, %120 : vector<72x72xf32>
    %122 = arith.truncf %121 : vector<72x72xf32> to vector<72x72xbf16>
    %cst_70 = arith.constant dense<0.000000e+00> : vector<9x72xf32>
    %123 = tpu.matmul %108, %122, %cst_70 {dimension_numbers = #tpu.dot_dimension_numbers<[1], [1], [0], [0], [0, 0, 1, 0], [], []>} : vector<9x72xbf16>, vector<72x72xbf16>, vector<9x72xf32> -> vector<9x72xf32>
    %c9 = arith.constant 9 : index
    %c0_71 = arith.constant 0 : index
    %124 = vector.load %arg11[%c9, %c0_71] : memref<36x36xbf16, #tpu.memory_space<vmem>>, vector<9x36xbf16>
    %125 = arith.truncf %123 : vector<9x72xf32> to vector<9x72xbf16>
    %cst_72 = arith.constant dense<0.000000e+00> : vector<36x72xf32>
    %126 = tpu.matmul %124, %125, %cst_72 {dimension_numbers = #tpu.dot_dimension_numbers<[0], [0], [1], [1], [0, 1, 1, 1], [], []>} : vector<9x36xbf16>, vector<9x72xbf16>, vector<36x72xf32> -> vector<36x72xf32>
    %127 = arith.addf %105, %126 : vector<36x72xf32>
    %128 = vector.extract_strided_slice %72 {offsets = [18, 0], sizes = [9, 72], strides = [1, 1]} : vector<36x72xbf16> to vector<9x72xbf16>
    %129 = vector.extract_strided_slice %77 {offsets = [18, 0], sizes = [9, 72], strides = [1, 1]} : vector<36x72xbf16> to vector<9x72xbf16>
    %130 = vector.extract_strided_slice %82 {offsets = [18, 0], sizes = [9, 72], strides = [1, 1]} : vector<36x72xbf16> to vector<9x72xbf16>
    %cst_73 = arith.constant dense<0.000000e+00> : vector<72x72xf32>
    %131 = tpu.matmul %128, %129, %cst_73 {dimension_numbers = #tpu.dot_dimension_numbers<[0], [0], [1], [1], [0, 1, 1, 1], [], []>} : vector<9x72xbf16>, vector<9x72xbf16>, vector<72x72xf32> -> vector<72x72xf32>
    %c0_74 = arith.constant 0 : index
    %c0_75 = arith.constant 0 : index
    %132 = vector.load %arg12[%c0_74, %c0_75] : memref<72x72xf32, #tpu.memory_space<vmem>>, vector<72x72xf32>
    %133 = arith.addf %131, %132 : vector<72x72xf32>
    %cst_76 = arith.constant dense<0xFF800000> : vector<72xf32>
    %134 = vector.multi_reduction <maximumf>, %133, %cst_76 [1] : vector<72x72xf32> to vector<72xf32>
    %135 = vector.shape_cast %134 : vector<72xf32> to vector<72x1xf32>
    %136 = vector.broadcast %135 : vector<72x1xf32> to vector<72x72xf32>
    %137 = arith.subf %133, %136 : vector<72x72xf32>
    %138 = math.exp %137 : vector<72x72xf32>
    %cst_77 = arith.constant dense<0.000000e+00> : vector<72xf32>
    %139 = vector.multi_reduction <add>, %138, %cst_77 [1] : vector<72x72xf32> to vector<72xf32>
    %140 = vector.shape_cast %139 : vector<72xf32> to vector<72x1xf32>
    %141 = tpu.reciprocal %140 {approx = true} : vector<72x1xf32> -> vector<72x1xf32>
    %142 = vector.broadcast %141 : vector<72x1xf32> to vector<72x72xf32>
    %143 = arith.mulf %138, %142 : vector<72x72xf32>
    %144 = arith.truncf %143 : vector<72x72xf32> to vector<72x72xbf16>
    %cst_78 = arith.constant dense<0.000000e+00> : vector<9x72xf32>
    %145 = tpu.matmul %130, %144, %cst_78 {dimension_numbers = #tpu.dot_dimension_numbers<[1], [1], [0], [0], [0, 0, 1, 0], [], []>} : vector<9x72xbf16>, vector<72x72xbf16>, vector<9x72xf32> -> vector<9x72xf32>
    %c18 = arith.constant 18 : index
    %c0_79 = arith.constant 0 : index
    %146 = vector.load %arg11[%c18, %c0_79] : memref<36x36xbf16, #tpu.memory_space<vmem>>, vector<9x36xbf16>
    %147 = arith.truncf %145 : vector<9x72xf32> to vector<9x72xbf16>
    %cst_80 = arith.constant dense<0.000000e+00> : vector<36x72xf32>
    %148 = tpu.matmul %146, %147, %cst_80 {dimension_numbers = #tpu.dot_dimension_numbers<[0], [0], [1], [1], [0, 1, 1, 1], [], []>} : vector<9x36xbf16>, vector<9x72xbf16>, vector<36x72xf32> -> vector<36x72xf32>
    %149 = arith.addf %127, %148 : vector<36x72xf32>
    %150 = vector.extract_strided_slice %72 {offsets = [27, 0], sizes = [9, 72], strides = [1, 1]} : vector<36x72xbf16> to vector<9x72xbf16>
    %151 = vector.extract_strided_slice %77 {offsets = [27, 0], sizes = [9, 72], strides = [1, 1]} : vector<36x72xbf16> to vector<9x72xbf16>
    %152 = vector.extract_strided_slice %82 {offsets = [27, 0], sizes = [9, 72], strides = [1, 1]} : vector<36x72xbf16> to vector<9x72xbf16>
    %cst_81 = arith.constant dense<0.000000e+00> : vector<72x72xf32>
    %153 = tpu.matmul %150, %151, %cst_81 {dimension_numbers = #tpu.dot_dimension_numbers<[0], [0], [1], [1], [0, 1, 1, 1], [], []>} : vector<9x72xbf16>, vector<9x72xbf16>, vector<72x72xf32> -> vector<72x72xf32>
    %c0_82 = arith.constant 0 : index
    %c0_83 = arith.constant 0 : index
    %154 = vector.load %arg12[%c0_82, %c0_83] : memref<72x72xf32, #tpu.memory_space<vmem>>, vector<72x72xf32>
    %155 = arith.addf %153, %154 : vector<72x72xf32>
    %cst_84 = arith.constant dense<0xFF800000> : vector<72xf32>
    %156 = vector.multi_reduction <maximumf>, %155, %cst_84 [1] : vector<72x72xf32> to vector<72xf32>
    %157 = vector.shape_cast %156 : vector<72xf32> to vector<72x1xf32>
    %158 = vector.broadcast %157 : vector<72x1xf32> to vector<72x72xf32>
    %159 = arith.subf %155, %158 : vector<72x72xf32>
    %160 = math.exp %159 : vector<72x72xf32>
    %cst_85 = arith.constant dense<0.000000e+00> : vector<72xf32>
    %161 = vector.multi_reduction <add>, %160, %cst_85 [1] : vector<72x72xf32> to vector<72xf32>
    %162 = vector.shape_cast %161 : vector<72xf32> to vector<72x1xf32>
    %163 = tpu.reciprocal %162 {approx = true} : vector<72x1xf32> -> vector<72x1xf32>
    %164 = vector.broadcast %163 : vector<72x1xf32> to vector<72x72xf32>
    %165 = arith.mulf %160, %164 : vector<72x72xf32>
    %166 = arith.truncf %165 : vector<72x72xf32> to vector<72x72xbf16>
    %cst_86 = arith.constant dense<0.000000e+00> : vector<9x72xf32>
    %167 = tpu.matmul %152, %166, %cst_86 {dimension_numbers = #tpu.dot_dimension_numbers<[1], [1], [0], [0], [0, 0, 1, 0], [], []>} : vector<9x72xbf16>, vector<72x72xbf16>, vector<9x72xf32> -> vector<9x72xf32>
    %c27 = arith.constant 27 : index
    %c0_87 = arith.constant 0 : index
    %168 = vector.load %arg11[%c27, %c0_87] : memref<36x36xbf16, #tpu.memory_space<vmem>>, vector<9x36xbf16>
    %169 = arith.truncf %167 : vector<9x72xf32> to vector<9x72xbf16>
    %cst_88 = arith.constant dense<0.000000e+00> : vector<36x72xf32>
    %170 = tpu.matmul %168, %169, %cst_88 {dimension_numbers = #tpu.dot_dimension_numbers<[0], [0], [1], [1], [0, 1, 1, 1], [], []>} : vector<9x36xbf16>, vector<9x72xbf16>, vector<36x72xf32> -> vector<36x72xf32>
    %171 = arith.addf %149, %170 : vector<36x72xf32>
    %c0_89 = arith.constant 0 : index
    %c0_90 = arith.constant 0 : index
    %172 = vector.load %arg13[%c0_89, %c0_90] : memref<36x72xf32, #tpu.memory_space<vmem>>, vector<36x72xf32>
    tpu.vector_store %arg13[%c0_89, %c0_90], %171 {strides = array<i32>} : memref<36x72xf32, #tpu.memory_space<vmem>>, vector<36x72xf32>,
    return
  }
}

</mosaic_0001>

<llo_original>
// kernel: _lambda_.1
$region0: #{_lambda_.1}
  #allocation0 [shape = 'u32[]', space=smem, size = 0x4, offset = 0x4, fixed_abs, tag = 'smem constant byte address 0x4 - core index']
  #allocation1 [shape = 'u32[144,128]{1,0:T(1,128)}', space=vmem, size = 0x12000, scoped, tag = 'internal scratch']
  %s0 = inlined_call_operand.vmem [shape: bf16[36,72], index: 0, kind: input, shape index: {}]
  %s1 = inlined_call_operand.vmem [shape: bf16[36,72], index: 1, kind: input, shape index: {}]
  %s2 = inlined_call_operand.vmem [shape: bf16[72,324], index: 2, kind: input, shape index: {}]
  %s3 = inlined_call_operand.vmem [shape: bf16[324,72], index: 3, kind: input, shape index: {}]
  %s4 = inlined_call_operand.vmem [shape: f32[1,72], index: 4, kind: input, shape index: {}]
  %s5 = inlined_call_operand.vmem [shape: bf16[72,72], index: 5, kind: input, shape index: {}]
  %s6 = inlined_call_operand.vmem [shape: f32[1,72], index: 6, kind: input, shape index: {}]
  %s7 = inlined_call_operand.vmem [shape: bf16[72,108], index: 7, kind: input, shape index: {}]
  %s8 = inlined_call_operand.vmem [shape: f32[1,108], index: 8, kind: input, shape index: {}]
  %s9 = inlined_call_operand.vmem [shape: bf16[3,108,36], index: 9, kind: input, shape index: {}]
  %s10 = inlined_call_operand.vmem [shape: bf16[2,36,72], index: 10, kind: input, shape index: {}]
  %s11 = inlined_call_operand.vmem [shape: bf16[36,36], index: 11, kind: input, shape index: {}]
  %s12 = inlined_call_operand.vmem [shape: f32[72,72], index: 12, kind: input, shape index: {}]
  %s13 = inlined_call_operand.vmem [shape: f32[36,72], index: 13, kind: output, shape index: {}]
  %s14 = sld [smem:[#allocation0]]
  $region62: #{_lambda_.1} parent=0
    _
  %s16 = ssub.s32 1, %s14
  %s17 = scalar_select 0, %s16, %s14
  // Predicated region
  $region2: #{_lambda_.1} parent=0 // pred_check
    _
  $region3: #{_lambda_.1} parent=0 // pred_check_branch
    %19 = sbr.rel (0) target = $region5
  $region4: #{_lambda_.1} parent=0 // pred_region
    _
  $region5: #{_lambda_.1} parent=0 // pred_fallthru
    _
  // Predicated region
  $region6: #{_lambda_.1} parent=0 // pred_check
    _
  $region7: #{_lambda_.1} parent=0 // pred_check_branch
    %21 = sbr.rel (0) target = $region9
  $region8: #{_lambda_.1} parent=0 // pred_region
    _
  $region9: #{_lambda_.1} parent=0 // pred_fallthru
    _
  // Predicated region
  $region10: #{_lambda_.1} parent=0 // pred_check
    _
  $region11: #{_lambda_.1} parent=0 // pred_check_branch
    %23 = sbr.rel (0) target = $region13
  $region12: #{_lambda_.1} parent=0 // pred_region
    _
  $region13: #{_lambda_.1} parent=0 // pred_fallthru
    _
  // Predicated region
  $region14: #{_lambda_.1} parent=0 // pred_check
    _
  $region15: #{_lambda_.1} parent=0 // pred_check_branch
    %25 = sbr.rel (0) target = $region17
  $region16: #{_lambda_.1} parent=0 // pred_region
    _
  $region17: #{_lambda_.1} parent=0 // pred_fallthru
    _
  // Predicated region
  $region18: #{_lambda_.1} parent=0 // pred_check
    _
  $region19: #{_lambda_.1} parent=0 // pred_check_branch
    %27 = sbr.rel (0) target = $region21
  $region20: #{_lambda_.1} parent=0 // pred_region
    _
  $region21: #{_lambda_.1} parent=0 // pred_fallthru
    _
  // Predicated region
  $region22: #{_lambda_.1} parent=0 // pred_check
    _
  $region23: #{_lambda_.1} parent=0 // pred_check_branch
    %29 = sbr.rel (0) target = $region25
  $region24: #{_lambda_.1} parent=0 // pred_region
    _
  $region25: #{_lambda_.1} parent=0 // pred_fallthru
    _
  // Predicated region
  $region26: #{_lambda_.1} parent=0 // pred_check
    _
  $region27: #{_lambda_.1} parent=0 // pred_check_branch
    %31 = sbr.rel (0) target = $region29
  $region28: #{_lambda_.1} parent=0 // pred_region
    _
  $region29: #{_lambda_.1} parent=0 // pred_fallthru
    _
  // Predicated region
  $region30: #{_lambda_.1} parent=0 // pred_check
    _
  $region31: #{_lambda_.1} parent=0 // pred_check_branch
    %33 = sbr.rel (0) target = $region33
  $region32: #{_lambda_.1} parent=0 // pred_region
    _
  $region33: #{_lambda_.1} parent=0 // pred_fallthru
    _
  // Predicated region
  $region34: #{_lambda_.1} parent=0 // pred_check
    _
  $region35: #{_lambda_.1} parent=0 // pred_check_branch
    %35 = sbr.rel (0) target = $region37
  $region36: #{_lambda_.1} parent=0 // pred_region
    _
  $region37: #{_lambda_.1} parent=0 // pred_fallthru
    _
  // Predicated region
  $region38: #{_lambda_.1} parent=0 // pred_check
    _
  $region39: #{_lambda_.1} parent=0 // pred_check_branch
    %37 = sbr.rel (0) target = $region41
  $region40: #{_lambda_.1} parent=0 // pred_region
    _
  $region41: #{_lambda_.1} parent=0 // pred_fallthru
    _
  // Predicated region
  $region42: #{_lambda_.1} parent=0 // pred_check
    _
  $region43: #{_lambda_.1} parent=0 // pred_check_branch
    %39 = sbr.rel (0) target = $region45
  $region44: #{_lambda_.1} parent=0 // pred_region
    _
  $region45: #{_lambda_.1} parent=0 // pred_fallthru
    _
  // Predicated region
  $region46: #{_lambda_.1} parent=0 // pred_check
    _
  $region47: #{_lambda_.1} parent=0 // pred_check_branch
    %41 = sbr.rel (0) target = $region49
  $region48: #{_lambda_.1} parent=0 // pred_region
    _
  $region49: #{_lambda_.1} parent=0 // pred_fallthru
    _
  // Predicated region
  $region50: #{_lambda_.1} parent=0 // pred_check
    _
  $region51: #{_lambda_.1} parent=0 // pred_check_branch
    %43 = sbr.rel (0) target = $region53
  $region52: #{_lambda_.1} parent=0 // pred_region
    _
  $region53: #{_lambda_.1} parent=0 // pred_fallthru
    _
  %v45 = vld [vmem:[%s2] sm:$0xff]
  %v46 = vld [vmem:[%s2 + $0x8] sm:$0xf]
  %v47 = vld [vmem:[%s2 + $0xc] sm:$0xff]
  %v48 = vld [vmem:[%s2 + $0x14] sm:$0xf]
  %v49 = vld [vmem:[%s2 + $0x18] sm:$0xff]
  %v50 = vld [vmem:[%s2 + $0x20] sm:$0xf]
  %v51 = vld [vmem:[%s2 + $0x24] sm:$0xff]
  %v52 = vld [vmem:[%s2 + $0x2c] sm:$0xf]
  %v53 = vld [vmem:[%s2 + $0x30] sm:$0xff]
  %v54 = vld [vmem:[%s2 + $0x38] sm:$0xf]
  %v55 = vld [vmem:[%s2 + $0x3c] sm:$0xff]
  %v56 = vld [vmem:[%s2 + $0x44] sm:$0xf]
  %v57 = vld [vmem:[%s2 + $0x48] sm:$0xff]
  %v58 = vld [vmem:[%s2 + $0x50] sm:$0xf]
  %v59 = vld [vmem:[%s2 + $0x54] sm:$0xff]
  %v60 = vld [vmem:[%s2 + $0x5c] sm:$0xf]
  %v61 = vld [vmem:[%s2 + $0x60] sm:$0xff]
  %v62 = vld [vmem:[%s2 + $0x68] sm:$0xf]
  %v63 = vld [vmem:[%s3] sm:$0xf]
  %v64 = vld [vmem:[%s3 + $0x4] sm:$0xf]
  %v65 = vld [vmem:[%s3 + $0x8] sm:$0xf]
  %v66 = vld [vmem:[%s3 + $0xc] sm:$0xf]
  %v67 = vld [vmem:[%s3 + $0x10] sm:$0xf]
  %v68 = vld [vmem:[%s3 + $0x14] sm:$0xf]
  %v69 = vld [vmem:[%s3 + $0x18] sm:$0xf]
  %v70 = vld [vmem:[%s3 + $0x1c] sm:$0xf]
  %v71 = vld [vmem:[%s3 + $0x20] sm:$0xf]
  %v72 = vld [vmem:[%s3 + $0x24] sm:$0xf]
  %v73 = vld [vmem:[%s3 + $0x28] sm:$0xf]
  %v74 = vld [vmem:[%s3 + $0x2c] sm:$0xf]
  %v75 = vld [vmem:[%s3 + $0x30] sm:$0xf]
  %v76 = vld [vmem:[%s3 + $0x34] sm:$0xf]
  %v77 = vld [vmem:[%s3 + $0x38] sm:$0xf]
  %v78 = vld [vmem:[%s3 + $0x3c] sm:$0xf]
  %v79 = vld [vmem:[%s3 + $0x40] sm:$0xf]
  %v80 = vld [vmem:[%s3 + $0x44] sm:$0xf]
  %v81 = vld [vmem:[%s3 + $0x48] sm:$0xf]
  %v82 = vld [vmem:[%s3 + $0x4c] sm:$0xf]
  %v83 = vld [vmem:[%s3 + $0x50] sm:$0xf]
  %v84 = vld [vmem:[%s3 + $0x54] sm:$0xf]
  %v85 = vld [vmem:[%s3 + $0x58] sm:$0xf]
  %v86 = vld [vmem:[%s3 + $0x5c] sm:$0xf]
  %v87 = vld [vmem:[%s3 + $0x60] sm:$0xf]
  %v88 = vld [vmem:[%s3 + $0x64] sm:$0xf]
  %v89 = vld [vmem:[%s3 + $0x68] sm:$0xf]
  %v90 = vld [vmem:[%s3 + $0x6c] sm:$0xf]
  %v91 = vld [vmem:[%s3 + $0x70] sm:$0xf]
  %v92 = vld [vmem:[%s3 + $0x74] sm:$0xf]
  %v93 = vld [vmem:[%s3 + $0x78] sm:$0xf]
  %v94 = vld [vmem:[%s3 + $0x7c] sm:$0xf]
  %v95 = vld [vmem:[%s3 + $0x80] sm:$0xf]
  %v96 = vld [vmem:[%s3 + $0x84] sm:$0xf]
  %v97 = vld [vmem:[%s3 + $0x88] sm:$0xf]
  %v98 = vld [vmem:[%s3 + $0x8c] sm:$0xf]
  %v99 = vld [vmem:[%s3 + $0x90] sm:$0xf]
  %v100 = vld [vmem:[%s3 + $0x94] sm:$0xf]
  %v101 = vld [vmem:[%s3 + $0x98] sm:$0xf]
  %v102 = vld [vmem:[%s3 + $0x9c] sm:$0xf]
  %v103 = vld [vmem:[%s3 + $0xa0] sm:$0x3]
  %v104 = vld [vmem:[%s4] sm:$0x1]
  %v106 = vlaneseq
  %v107 = vshrl.u32 %v106, 7
  %v108 = vsub.s32 0, %v107
  %v109 = vrot.slane %v104, %v108
  %v129 = vunpack.c.l.b16 %v45
  %v130 = vunpack.c.h.b16 %v45
  %v131 = vunpack.c.l.b16 %v46
  %v132 = vunpack.c.l.b16 %v47
  %v133 = vunpack.c.h.b16 %v47
  %v134 = vunpack.c.l.b16 %v48
  %v135 = vunpack.c.l.b16 %v49
  %v136 = vunpack.c.h.b16 %v49
  %v137 = vunpack.c.l.b16 %v50
  %v138 = vunpack.c.l.b16 %v51
  %v139 = vunpack.c.h.b16 %v51
  %v140 = vunpack.c.l.b16 %v52
  %v141 = vunpack.c.l.b16 %v53
  %v142 = vunpack.c.h.b16 %v53
  %v143 = vunpack.c.l.b16 %v54
  %v144 = vunpack.c.l.b16 %v55
  %v145 = vunpack.c.h.b16 %v55
  %v146 = vunpack.c.l.b16 %v56
  %v147 = vunpack.c.l.b16 %v57
  %v148 = vunpack.c.h.b16 %v57
  %v149 = vunpack.c.l.b16 %v58
  %v150 = vunpack.c.l.b16 %v59
  %v151 = vunpack.c.h.b16 %v59
  %v152 = vunpack.c.l.b16 %v60
  %v153 = vunpack.c.l.b16 %v61
  %v154 = vunpack.c.h.b16 %v61
  %v155 = vunpack.c.l.b16 %v62
  %v156 = vpack.c.b16 %v132, %v129
  %v157 = vpack.c.b16 %v133, %v130
  %v158 = vpack.c.b16 %v134, %v131
  %v159 = vpack.c.b16 %v138, %v135
  %v160 = vpack.c.b16 %v139, %v136
  %v161 = vpack.c.b16 %v140, %v137
  %v162 = vpack.c.b16 %v144, %v141
  %v163 = vpack.c.b16 %v145, %v142
  %v164 = vpack.c.b16 %v146, %v143
  %v165 = vpack.c.b16 %v150, %v147
  %v166 = vpack.c.b16 %v151, %v148
  %v167 = vpack.c.b16 %v152, %v149
  %v168 = vpack.c.b16 %v153, %v153
  %v169 = vpack.c.b16 %v154, %v154
  %v170 = vpack.c.b16 %v155, %v155
  %v222 = vunpack.c.l.b16 %v63
  %v223 = vunpack.c.l.b16 %v64
  %v224 = vunpack.c.l.b16 %v65
  %v225 = vunpack.c.l.b16 %v66
  %v226 = vunpack.c.l.b16 %v67
  %v227 = vunpack.c.l.b16 %v68
  %v228 = vunpack.c.l.b16 %v69
  %v229 = vunpack.c.l.b16 %v70
  %v230 = vunpack.c.l.b16 %v71
  %v231 = vunpack.c.l.b16 %v72
  %v232 = vunpack.c.l.b16 %v73
  %v233 = vunpack.c.l.b16 %v74
  %v234 = vunpack.c.l.b16 %v75
  %v235 = vunpack.c.l.b16 %v76
  %v236 = vunpack.c.l.b16 %v77
  %v237 = vunpack.c.l.b16 %v78
  %v238 = vunpack.c.l.b16 %v79
  %v239 = vunpack.c.l.b16 %v80
  %v240 = vunpack.c.l.b16 %v81
  %v241 = vunpack.c.l.b16 %v82
  %v242 = vunpack.c.l.b16 %v83
  %v243 = vunpack.c.l.b16 %v84
  %v244 = vunpack.c.l.b16 %v85
  %v245 = vunpack.c.l.b16 %v86
  %v246 = vunpack.c.l.b16 %v87
  %v247 = vunpack.c.l.b16 %v88
  %v248 = vunpack.c.l.b16 %v89
  %v249 = vunpack.c.l.b16 %v90
  %v250 = vunpack.c.l.b16 %v91
  %v251 = vunpack.c.l.b16 %v92
  %v252 = vunpack.c.l.b16 %v93
  %v253 = vunpack.c.l.b16 %v94
  %v254 = vunpack.c.l.b16 %v95
  %v255 = vunpack.c.l.b16 %v96
  %v256 = vunpack.c.l.b16 %v97
  %v257 = vunpack.c.l.b16 %v98
  %v258 = vunpack.c.l.b16 %v99
  %v259 = vunpack.c.l.b16 %v100
  %v260 = vunpack.c.l.b16 %v101
  %v261 = vunpack.c.l.b16 %v102
  %v262 = vunpack.c.l.b16 %v103
  %v263 = vpack.c.b16 %v223, %v222
  %v264 = vpack.c.b16 %v225, %v224
  %v265 = vpack.c.b16 %v227, %v226
  %v266 = vpack.c.b16 %v229, %v228
  %v267 = vpack.c.b16 %v231, %v230
  %v268 = vpack.c.b16 %v233, %v232
  %v269 = vpack.c.b16 %v235, %v234
  %v270 = vpack.c.b16 %v237, %v236
  %v271 = vpack.c.b16 %v239, %v238
  %v272 = vpack.c.b16 %v241, %v240
  %v273 = vpack.c.b16 %v243, %v242
  %v274 = vpack.c.b16 %v245, %v244
  %v275 = vpack.c.b16 %v247, %v246
  %v276 = vpack.c.b16 %v249, %v248
  %v277 = vpack.c.b16 %v251, %v250
  %v278 = vpack.c.b16 %v253, %v252
  %v279 = vpack.c.b16 %v255, %v254
  %v280 = vpack.c.b16 %v257, %v256
  %v281 = vpack.c.b16 %v259, %v258
  %v282 = vpack.c.b16 %v261, %v260
  %v283 = vpack.c.b16 %v262, %v262
  %vm304 = vcmask 556032
  %v306 = vsel %vm304, %v158, 0
  %v309 = vsel %vm304, %v161, 0
  %v312 = vsel %vm304, %v164, 0
  %v315 = vsel %vm304, %v167, 0
  %v318 = vsel %vm304, %v170, 0
  %vm320 = vcmask 1041408
  %v322 = vsel %vm320, %v283, 0
  %324 = vmatprep.subr.bf16.mxu0 0
  %325 = vmatpush1.bf16.msra.mxu0 %v263
  %326 = vmatprep.subr.bf16.mxu0 0
  %327 = vmatpush1.bf16.msra.mxu0 %v264
  %328 = vmatprep.subr.bf16.mxu0 0
  %329 = vmatpush1.bf16.msra.mxu0 %v265
  %330 = vmatprep.subr.bf16.mxu0 0
  %331 = vmatpush1.bf16.msra.mxu0 %v266
  %332 = vmatprep.subr.bf16.mxu0 0
  %333 = vmatpush1.bf16.msra.mxu0 %v267
  %334 = vmatprep.subr.bf16.mxu0 0
  %335 = vmatpush1.bf16.msra.mxu0 %v268
  %336 = vmatprep.subr.bf16.mxu0 0
  %337 = vmatpush1.bf16.msra.mxu0 %v269
  %338 = vmatprep.subr.bf16.mxu0 0
  %339 = vmatpush1.bf16.msra.mxu0 %v270
  %340 = vmatprep.subr.bf16.mxu0 0
  %341 = vmatpush1.bf16.msra.mxu0 %v271
  %342 = vmatprep.subr.bf16.mxu0 0
  %343 = vmatpush1.bf16.msra.mxu0 %v272
  %344 = vmatprep.subr.bf16.mxu0 0
  %345 = vmatpush1.bf16.msra.mxu0 %v273
  %346 = vmatprep.subr.bf16.mxu0 0
  %347 = vmatpush1.bf16.msra.mxu0 %v274
  %348 = vmatprep.subr.bf16.mxu0 0
  %349 = vmatpush1.bf16.msra.mxu0 %v275
  %350 = vmatprep.subr.bf16.mxu0 0
  %351 = vmatpush1.bf16.msra.mxu0 %v276
  %352 = vmatprep.subr.bf16.mxu0 0
  %353 = vmatpush1.bf16.msra.mxu0 %v277
  %354 = vmatprep.subr.bf16.mxu0 0
  %355 = vmatpush1.bf16.msra.mxu0 %v278
  %356 = vmatprep.mubr.bf16.mxu0 %v157
  %357 = vmatmul.mubr.bf16.gmra.mrb[0].mxu0 %v156
  %v358 = vpop.f32.mrb[0].mxu0
  %v359 = vadd.f32 %v109, %v358
  %v360 = vpop.f32.mrb[0].mxu0
  %v361 = vpop.f32.mrb[0].mxu0
  %v362 = vadd.f32 %v109, %v361
  %v363 = vpop.f32.mrb[0].mxu0
  %364 = vmatprep.mubr.bf16.mxu0 %v160
  %365 = vmatmul.mubr.bf16.gmra.mrb[0].mxu0 %v159
  %v366 = vpop.f32.mrb[0].mxu0
  %v367 = vadd.f32 %v109, %v366
  %v368 = vpop.f32.mrb[0].mxu0
  %v369 = vpop.f32.mrb[0].mxu0
  %v370 = vadd.f32 %v109, %v369
  %v371 = vpop.f32.mrb[0].mxu0
  %372 = vmatprep.mubr.bf16.mxu0 %v163
  %373 = vmatmul.mubr.bf16.gmra.mrb[0].mxu0 %v162
  %v374 = vpop.f32.mrb[0].mxu0
  %v375 = vadd.f32 %v109, %v374
  %v376 = vpop.f32.mrb[0].mxu0
  %v377 = vpop.f32.mrb[0].mxu0
  %v378 = vadd.f32 %v109, %v377
  %v379 = vpop.f32.mrb[0].mxu0
  %380 = vmatprep.mubr.bf16.mxu0 %v166
  %381 = vmatmul.mubr.bf16.gmra.mrb[0].mxu0 %v165
  %v382 = vpop.f32.mrb[0].mxu0
  %v383 = vadd.f32 %v109, %v382
  %v384 = vpop.f32.mrb[0].mxu0
  %v385 = vpop.f32.mrb[0].mxu0
  %v386 = vadd.f32 %v109, %v385
  %v387 = vpop.f32.mrb[0].mxu0
  %388 = vmatprep.mubr.bf16.mxu0 %v169
  %389 = vmatmul.mubr.bf16.gmra.mrb[0].mxu0 %v168
  %v390 = vpop.f32.mrb[0].mxu0
  %v391 = vadd.f32 %v109, %v390
  %v392 = vpop.f32.mrb[0].mxu0
  %v393 = vpop.f32.mrb[0].mxu0
  %v394 = vpop.f32.mrb[0].mxu0
  %395 = vdwg.mxu0
  %396 = vmatprep.subr.bf16.mxu0 0
  %397 = vmatpush1.bf16.msra.mxu0 %v279
  %398 = vmatprep.subr.bf16.mxu0 0
  %399 = vmatpush1.bf16.msra.mxu0 %v280
  %400 = vmatprep.subr.bf16.mxu0 0
  %401 = vmatpush1.bf16.msra.mxu0 %v281
  %402 = vmatprep.subr.bf16.mxu0 0
  %403 = vmatpush1.bf16.msra.mxu0 %v282
  %404 = vmatprep.subr.bf16.mxu0 0
  %405 = vmatpush1.bf16.msra.mxu0 %v322
  %406 = vmatprep.subr.bf16.mxu0 0
  %407 = vmatpush1.bf16.msra.mxu0 0
  %408 = vmatprep.subr.bf16.mxu0 0
  %409 = vmatpush1.bf16.msra.mxu0 0
  %410 = vmatprep.subr.bf16.mxu0 0
  %411 = vmatpush1.bf16.msra.mxu0 0
  %412 = vmatprep.subr.bf16.mxu0 0
  %413 = vmatpush1.bf16.msra.mxu0 0
  %414 = vmatprep.subr.bf16.mxu0 0
  %415 = vmatpush1.bf16.msra.mxu0 0
  %416 = vmatprep.subr.bf16.mxu0 0
  %417 = vmatpush1.bf16.msra.mxu0 0
  %418 = vmatprep.subr.bf16.mxu0 0
  %419 = vmatpush1.bf16.msra.mxu0 0
  %420 = vmatprep.subr.bf16.mxu0 0
  %421 = vmatpush1.bf16.msra.mxu0 0
  %422 = vmatprep.subr.bf16.mxu0 0
  %423 = vmatpush1.bf16.msra.mxu0 0
  %424 = vmatprep.subr.bf16.mxu0 0
  %425 = vmatpush1.bf16.msra.mxu0 0
  %426 = vmatprep.subr.bf16.mxu0 0
  %427 = vmatpush1.bf16.msra.mxu0 0
  %428 = vmatprep.mubr.bf16.mxu0 0
  %429 = vmatmul.mubr.bf16.gmra.mrb[0].mxu0 %v306
  %v430 = vpop.f32.mrb[0].mxu0
  %v431 = vadd.f32 %v359, %v430
  %v432 = vpop.f32.mrb[0].mxu0
  %v433 = vpop.f32.mrb[0].mxu0
  %v434 = vadd.f32 %v362, %v433
  %v435 = vpop.f32.mrb[0].mxu0
  %436 = vmatprep.mubr.bf16.mxu0 0
  %437 = vmatmul.mubr.bf16.gmra.mrb[0].mxu0 %v309
  %v438 = vpop.f32.mrb[0].mxu0
  %v439 = vadd.f32 %v367, %v438
  %v440 = vpop.f32.mrb[0].mxu0
  %v441 = vpop.f32.mrb[0].mxu0
  %v442 = vadd.f32 %v370, %v441
  %v443 = vpop.f32.mrb[0].mxu0
  %444 = vmatprep.mubr.bf16.mxu0 0
  %445 = vmatmul.mubr.bf16.gmra.mrb[0].mxu0 %v312
  %v446 = vpop.f32.mrb[0].mxu0
  %v447 = vadd.f32 %v375, %v446
  %v448 = vpop.f32.mrb[0].mxu0
  %v449 = vpop.f32.mrb[0].mxu0
  %v450 = vadd.f32 %v378, %v449
  %v451 = vpop.f32.mrb[0].mxu0
  %452 = vmatprep.mubr.bf16.mxu0 0
  %453 = vmatmul.mubr.bf16.gmra.mrb[0].mxu0 %v315
  %v454 = vpop.f32.mrb[0].mxu0
  %v455 = vadd.f32 %v383, %v454
  %v456 = vpop.f32.mrb[0].mxu0
  %v457 = vpop.f32.mrb[0].mxu0
  %v458 = vadd.f32 %v386, %v457
  %v459 = vpop.f32.mrb[0].mxu0
  %460 = vmatprep.mubr.bf16.mxu0 0
  %461 = vmatmul.mubr.bf16.gmra.mrb[0].mxu0 %v318
  %v462 = vpop.f32.mrb[0].mxu0
  %v463 = vadd.f32 %v391, %v462
  %v464 = vpop.f32.mrb[0].mxu0
  %v465 = vpop.f32.mrb[0].mxu0
  %v466 = vpop.f32.mrb[0].mxu0
  %467 = vdwg.mxu0
  %v468 = vmax.f32 %v431, 0.0
  %v469 = vmax.f32 %v434, 0.0
  %v470 = vmax.f32 %v439, 0.0
  %v471 = vmax.f32 %v442, 0.0
  %v472 = vmax.f32 %v447, 0.0
  %v473 = vmax.f32 %v450, 0.0
  %v474 = vmax.f32 %v455, 0.0
  %v475 = vmax.f32 %v458, 0.0
  %v476 = vmax.f32 %v463, 0.0
  %v477 = vpack.c.bf16 %v469, %v468
  %v478 = vpack.c.bf16 %v471, %v470
  %v479 = vpack.c.bf16 %v473, %v472
  %v480 = vpack.c.bf16 %v475, %v474
  %v481 = vpack.c.bf16 %v476, %v476
  %v482 = vld [vmem:[%s5] sm:$0xf]
  %v483 = vld [vmem:[%s5 + $0x4] sm:$0xf]
  %v484 = vld [vmem:[%s5 + $0x8] sm:$0xf]
  %v485 = vld [vmem:[%s5 + $0xc] sm:$0xf]
  %v486 = vld [vmem:[%s5 + $0x10] sm:$0xf]
  %v487 = vld [vmem:[%s5 + $0x14] sm:$0xf]
  %v488 = vld [vmem:[%s5 + $0x18] sm:$0xf]
  %v489 = vld [vmem:[%s5 + $0x1c] sm:$0xf]
  %v490 = vld [vmem:[%s5 + $0x20] sm:$0xf]
  %v491 = vld [vmem:[%s6] sm:$0x1]
  %v493 = vlaneseq
  %v494 = vshrl.u32 %v493, 7
  %v495 = vsub.s32 0, %v494
  %v496 = vrot.slane %v491, %v495
  %v507 = vunpack.c.l.b16 %v482
  %v508 = vunpack.c.l.b16 %v483
  %v509 = vunpack.c.l.b16 %v484
  %v510 = vunpack.c.l.b16 %v485
  %v511 = vunpack.c.l.b16 %v486
  %v512 = vunpack.c.l.b16 %v487
  %v513 = vunpack.c.l.b16 %v488
  %v514 = vunpack.c.l.b16 %v489
  %v515 = vunpack.c.l.b16 %v490
  %v516 = vpack.c.b16 %v508, %v507
  %v517 = vpack.c.b16 %v510, %v509
  %v518 = vpack.c.b16 %v512, %v511
  %v519 = vpack.c.b16 %v514, %v513
  %v520 = vpack.c.b16 %v515, %v515
  %vm525 = vcmask 588800
  %v527 = vsel %vm525, %v477, 0
  %v530 = vsel %vm525, %v478, 0
  %v533 = vsel %vm525, %v479, 0
  %v536 = vsel %vm525, %v480, 0
  %v539 = vsel %vm525, %v481, 0
  %vm541 = vcmask 1043456
  %v543 = vsel %vm541, %v520, 0
  %545 = vmatprep.subr.bf16.mxu0 0
  %546 = vmatpush1.bf16.msra.mxu0 %v516
  %547 = vmatprep.subr.bf16.mxu0 0
  %548 = vmatpush1.bf16.msra.mxu0 %v517
  %549 = vmatprep.subr.bf16.mxu0 0
  %550 = vmatpush1.bf16.msra.mxu0 %v518
  %551 = vmatprep.subr.bf16.mxu0 0
  %552 = vmatpush1.bf16.msra.mxu0 %v519
  %553 = vmatprep.subr.bf16.mxu0 0
  %554 = vmatpush1.bf16.msra.mxu0 %v543
  %555 = vmatprep.subr.bf16.mxu0 0
  %556 = vmatpush1.bf16.msra.mxu0 0
  %557 = vmatprep.subr.bf16.mxu0 0
  %558 = vmatpush1.bf16.msra.mxu0 0
  %559 = vmatprep.subr.bf16.mxu0 0
  %560 = vmatpush1.bf16.msra.mxu0 0
  %561 = vmatprep.subr.bf16.mxu0 0
  %562 = vmatpush1.bf16.msra.mxu0 0
  %563 = vmatprep.subr.bf16.mxu0 0
  %564 = vmatpush1.bf16.msra.mxu0 0
  %565 = vmatprep.subr.bf16.mxu0 0
  %566 = vmatpush1.bf16.msra.mxu0 0
  %567 = vmatprep.subr.bf16.mxu0 0
  %568 = vmatpush1.bf16.msra.mxu0 0
  %569 = vmatprep.subr.bf16.mxu0 0
  %570 = vmatpush1.bf16.msra.mxu0 0
  %571 = vmatprep.subr.bf16.mxu0 0
  %572 = vmatpush1.bf16.msra.mxu0 0
  %573 = vmatprep.subr.bf16.mxu0 0
  %574 = vmatpush1.bf16.msra.mxu0 0
  %575 = vmatprep.subr.bf16.mxu0 0
  %576 = vmatpush1.bf16.msra.mxu0 0
  %577 = vmatprep.mubr.bf16.mxu0 0
  %578 = vmatmul.mubr.bf16.gmra.mrb[0].mxu0 %v527
  %v579 = vpop.f32.mrb[0].mxu0
  %v580 = vadd.f32 %v496, %v579
  %v581 = vpop.f32.mrb[0].mxu0
  %v582 = vpop.f32.mrb[0].mxu0
  %v583 = vadd.f32 %v496, %v582
  %v584 = vpop.f32.mrb[0].mxu0
  %585 = vmatprep.mubr.bf16.mxu0 0
  %586 = vmatmul.mubr.bf16.gmra.mrb[0].mxu0 %v530
  %v587 = vpop.f32.mrb[0].mxu0
  %v588 = vadd.f32 %v496, %v587
  %v589 = vpop.f32.mrb[0].mxu0
  %v590 = vpop.f32.mrb[0].mxu0
  %v591 = vadd.f32 %v496, %v590
  %v592 = vpop.f32.mrb[0].mxu0
  %593 = vmatprep.mubr.bf16.mxu0 0
  %594 = vmatmul.mubr.bf16.gmra.mrb[0].mxu0 %v533
  %v595 = vpop.f32.mrb[0].mxu0
  %v596 = vadd.f32 %v496, %v595
  %v597 = vpop.f32.mrb[0].mxu0
  %v598 = vpop.f32.mrb[0].mxu0
  %v599 = vadd.f32 %v496, %v598
  %v600 = vpop.f32.mrb[0].mxu0
  %601 = vmatprep.mubr.bf16.mxu0 0
  %602 = vmatmul.mubr.bf16.gmra.mrb[0].mxu0 %v536
  %v603 = vpop.f32.mrb[0].mxu0
  %v604 = vadd.f32 %v496, %v603
  %v605 = vpop.f32.mrb[0].mxu0
  %v606 = vpop.f32.mrb[0].mxu0
  %v607 = vadd.f32 %v496, %v606
  %v608 = vpop.f32.mrb[0].mxu0
  %609 = vmatprep.mubr.bf16.mxu0 0
  %610 = vmatmul.mubr.bf16.gmra.mrb[0].mxu0 %v539
  %v611 = vpop.f32.mrb[0].mxu0
  %v612 = vadd.f32 %v496, %v611
  %v613 = vpop.f32.mrb[0].mxu0
  %v614 = vpop.f32.mrb[0].mxu0
  %v615 = vpop.f32.mrb[0].mxu0
  %616 = vdwg.mxu0
  %v617 = vmax.f32 %v580, 0.0
  %v618 = vmax.f32 %v583, 0.0
  %v619 = vmax.f32 %v588, 0.0
  %v620 = vmax.f32 %v591, 0.0
  %v621 = vmax.f32 %v596, 0.0
  %v622 = vmax.f32 %v599, 0.0
  %v623 = vmax.f32 %v604, 0.0
  %v624 = vmax.f32 %v607, 0.0
  %v625 = vmax.f32 %v612, 0.0
  %v626 = vpack.c.bf16 %v618, %v617
  %v627 = vpack.c.bf16 %v620, %v619
  %v628 = vpack.c.bf16 %v622, %v621
  %v629 = vpack.c.bf16 %v624, %v623
  %v630 = vpack.c.bf16 %v625, %v625
  %v631 = vld [vmem:[%s7] sm:$0xf]
  %v632 = vld [vmem:[%s7 + $0x4] sm:$0xf]
  %v633 = vld [vmem:[%s7 + $0x8] sm:$0xf]
  %v634 = vld [vmem:[%s7 + $0xc] sm:$0xf]
  %v635 = vld [vmem:[%s7 + $0x10] sm:$0xf]
  %v636 = vld [vmem:[%s7 + $0x14] sm:$0xf]
  %v637 = vld [vmem:[%s7 + $0x18] sm:$0xf]
  %v638 = vld [vmem:[%s7 + $0x1c] sm:$0xf]
  %v639 = vld [vmem:[%s7 + $0x20] sm:$0xf]
  %v640 = vld [vmem:[%s8] sm:$0x1]
  %v642 = vlaneseq
  %v643 = vshrl.u32 %v642, 7
  %v644 = vsub.s32 0, %v643
  %v645 = vrot.slane %v640, %v644
  %v656 = vunpack.c.l.b16 %v631
  %v657 = vunpack.c.l.b16 %v632
  %v658 = vunpack.c.l.b16 %v633
  %v659 = vunpack.c.l.b16 %v634
  %v660 = vunpack.c.l.b16 %v635
  %v661 = vunpack.c.l.b16 %v636
  %v662 = vunpack.c.l.b16 %v637
  %v663 = vunpack.c.l.b16 %v638
  %v664 = vunpack.c.l.b16 %v639
  %v665 = vpack.c.b16 %v657, %v656
  %v666 = vpack.c.b16 %v659, %v658
  %v667 = vpack.c.b16 %v661, %v660
  %v668 = vpack.c.b16 %v663, %v662
  %v669 = vpack.c.b16 %v664, %v664
  %v675 = vsel %vm525, %v626, 0
  %v678 = vsel %vm525, %v627, 0
  %v681 = vsel %vm525, %v628, 0
  %v684 = vsel %vm525, %v629, 0
  %v687 = vsel %vm525, %v630, 0
  %v690 = vsel %vm541, %v669, 0
  %692 = vmatprep.subr.bf16.mxu0 0
  %693 = vmatpush1.bf16.msra.mxu0 %v665
  %694 = vmatprep.subr.bf16.mxu0 0
  %695 = vmatpush1.bf16.msra.mxu0 %v666
  %696 = vmatprep.subr.bf16.mxu0 0
  %697 = vmatpush1.bf16.msra.mxu0 %v667
  %698 = vmatprep.subr.bf16.mxu0 0
  %699 = vmatpush1.bf16.msra.mxu0 %v668
  %700 = vmatprep.subr.bf16.mxu0 0
  %701 = vmatpush1.bf16.msra.mxu0 %v690
  %702 = vmatprep.subr.bf16.mxu0 0
  %703 = vmatpush1.bf16.msra.mxu0 0
  %704 = vmatprep.subr.bf16.mxu0 0
  %705 = vmatpush1.bf16.msra.mxu0 0
  %706 = vmatprep.subr.bf16.mxu0 0
  %707 = vmatpush1.bf16.msra.mxu0 0
  %708 = vmatprep.subr.bf16.mxu0 0
  %709 = vmatpush1.bf16.msra.mxu0 0
  %710 = vmatprep.subr.bf16.mxu0 0
  %711 = vmatpush1.bf16.msra.mxu0 0
  %712 = vmatprep.subr.bf16.mxu0 0
  %713 = vmatpush1.bf16.msra.mxu0 0
  %714 = vmatprep.subr.bf16.mxu0 0
  %715 = vmatpush1.bf16.msra.mxu0 0
  %716 = vmatprep.subr.bf16.mxu0 0
  %717 = vmatpush1.bf16.msra.mxu0 0
  %718 = vmatprep.subr.bf16.mxu0 0
  %719 = vmatpush1.bf16.msra.mxu0 0
  %720 = vmatprep.subr.bf16.mxu0 0
  %721 = vmatpush1.bf16.msra.mxu0 0
  %722 = vmatprep.subr.bf16.mxu0 0
  %723 = vmatpush1.bf16.msra.mxu0 0
  %724 = vmatprep.mubr.bf16.mxu0 0
  %725 = vmatmul.mubr.bf16.gmra.mrb[0].mxu0 %v675
  %v726 = vpop.f32.mrb[0].mxu0
  %v727 = vadd.f32 %v645, %v726
  %v728 = vpop.f32.mrb[0].mxu0
  %v729 = vpop.f32.mrb[0].mxu0
  %v730 = vadd.f32 %v645, %v729
  %v731 = vpop.f32.mrb[0].mxu0
  %732 = vmatprep.mubr.bf16.mxu0 0
  %733 = vmatmul.mubr.bf16.gmra.mrb[0].mxu0 %v678
  %v734 = vpop.f32.mrb[0].mxu0
  %v735 = vadd.f32 %v645, %v734
  %v736 = vpop.f32.mrb[0].mxu0
  %v737 = vpop.f32.mrb[0].mxu0
  %v738 = vadd.f32 %v645, %v737
  %v739 = vpop.f32.mrb[0].mxu0
  %740 = vmatprep.mubr.bf16.mxu0 0
  %741 = vmatmul.mubr.bf16.gmra.mrb[0].mxu0 %v681
  %v742 = vpop.f32.mrb[0].mxu0
  %v743 = vadd.f32 %v645, %v742
  %v744 = vpop.f32.mrb[0].mxu0
  %v745 = vpop.f32.mrb[0].mxu0
  %v746 = vadd.f32 %v645, %v745
  %v747 = vpop.f32.mrb[0].mxu0
  %748 = vmatprep.mubr.bf16.mxu0 0
  %749 = vmatmul.mubr.bf16.gmra.mrb[0].mxu0 %v684
  %v750 = vpop.f32.mrb[0].mxu0
  %v751 = vadd.f32 %v645, %v750
  %v752 = vpop.f32.mrb[0].mxu0
  %v753 = vpop.f32.mrb[0].mxu0
  %v754 = vadd.f32 %v645, %v753
  %v755 = vpop.f32.mrb[0].mxu0
  %756 = vmatprep.mubr.bf16.mxu0 0
  %757 = vmatmul.mubr.bf16.gmra.mrb[0].mxu0 %v687
  %v758 = vpop.f32.mrb[0].mxu0
  %v759 = vadd.f32 %v645, %v758
  %v760 = vpop.f32.mrb[0].mxu0
  %v761 = vpop.f32.mrb[0].mxu0
  %v762 = vpop.f32.mrb[0].mxu0
  %763 = vdwg.mxu0
  %v764 = vsub.f32 0.0, %v727
  %v765 = vsub.f32 0.0, %v730
  %v766 = vsub.f32 0.0, %v735
  %v767 = vsub.f32 0.0, %v738
  %v768 = vsub.f32 0.0, %v743
  %v769 = vsub.f32 0.0, %v746
  %v770 = vsub.f32 0.0, %v751
  %v771 = vsub.f32 0.0, %v754
  %v772 = vsub.f32 0.0, %v759
  %v773 = vmul.f32 %v764, 1.442695
  %v774 = vpow.pop %v773
  %v775 = vmul.f32 %v765, 1.442695
  %v776 = vpow.pop %v775
  %v777 = vmul.f32 %v766, 1.442695
  %v778 = vpow.pop %v777
  %v779 = vmul.f32 %v767, 1.442695
  %v780 = vpow.pop %v779
  %v781 = vmul.f32 %v768, 1.442695
  %v782 = vpow.pop %v781
  %v783 = vmul.f32 %v769, 1.442695
  %v784 = vpow.pop %v783
  %v785 = vmul.f32 %v770, 1.442695
  %v786 = vpow.pop %v785
  %v787 = vmul.f32 %v771, 1.442695
  %v788 = vpow.pop %v787
  %v789 = vmul.f32 %v772, 1.442695
  %v790 = vpow.pop %v789
  %v791 = vadd.f32 %v774, 1.0
  %v792 = vadd.f32 %v776, 1.0
  %v793 = vadd.f32 %v778, 1.0
  %v794 = vadd.f32 %v780, 1.0
  %v795 = vadd.f32 %v782, 1.0
  %v796 = vadd.f32 %v784, 1.0
  %v797 = vadd.f32 %v786, 1.0
  %v798 = vadd.f32 %v788, 1.0
  %v799 = vadd.f32 %v790, 1.0
  %v800 = vrcp.pop %v791
  %v801 = vrcp.pop %v792
  %v802 = vrcp.pop %v793
  %v803 = vrcp.pop %v794
  %v804 = vrcp.pop %v795
  %v805 = vrcp.pop %v796
  %v806 = vrcp.pop %v797
  %v807 = vrcp.pop %v798
  %v808 = vrcp.pop %v799
  %v809 = vpack.c.bf16 %v801, %v800
  %v810 = vpack.c.bf16 %v803, %v802
  %v811 = vpack.c.bf16 %v805, %v804
  %v812 = vpack.c.bf16 %v807, %v806
  %v813 = vpack.c.bf16 %v808, %v808
  %v814 = vld [vmem:[%s9] sm:$0xf]
  %v815 = vld [vmem:[%s9 + $0x4] sm:$0xf]
  %v816 = vld [vmem:[%s9 + $0x8] sm:$0xf]
  %v817 = vld [vmem:[%s9 + $0xc] sm:$0xf]
  %v818 = vld [vmem:[%s9 + $0x10] sm:$0xf]
  %v819 = vld [vmem:[%s9 + $0x14] sm:$0xf]
  %v820 = vld [vmem:[%s9 + $0x18] sm:$0xf]
  %v821 = vld [vmem:[%s9 + $0x1c] sm:$0xf]
  %v822 = vld [vmem:[%s9 + $0x20] sm:$0xf]
  %v823 = vld [vmem:[%s9 + $0x24] sm:$0xf]
  %v824 = vld [vmem:[%s9 + $0x28] sm:$0xf]
  %v825 = vld [vmem:[%s9 + $0x2c] sm:$0xf]
  %v826 = vld [vmem:[%s9 + $0x30] sm:$0xf]
  %v827 = vld [vmem:[%s9 + $0x34] sm:$0x3]
  %s828 = scalar_lea.vmem %s9, 56
  %v829 = vld [vmem:[%s828] sm:$0xf]
  %v830 = vld [vmem:[%s828 + $0x4] sm:$0xf]
  %v831 = vld [vmem:[%s828 + $0x8] sm:$0xf]
  %v832 = vld [vmem:[%s828 + $0xc] sm:$0xf]
  %v833 = vld [vmem:[%s828 + $0x10] sm:$0xf]
  %v834 = vld [vmem:[%s828 + $0x14] sm:$0xf]
  %v835 = vld [vmem:[%s828 + $0x18] sm:$0xf]
  %v836 = vld [vmem:[%s828 + $0x1c] sm:$0xf]
  %v837 = vld [vmem:[%s828 + $0x20] sm:$0xf]
  %v838 = vld [vmem:[%s828 + $0x24] sm:$0xf]
  %v839 = vld [vmem:[%s828 + $0x28] sm:$0xf]
  %v840 = vld [vmem:[%s828 + $0x2c] sm:$0xf]
  %v841 = vld [vmem:[%s828 + $0x30] sm:$0xf]
  %v842 = vld [vmem:[%s828 + $0x34] sm:$0x3]
  %v857 = vunpack.c.l.b16 %v829
  %v858 = vunpack.c.l.b16 %v830
  %v859 = vunpack.c.l.b16 %v831
  %v860 = vunpack.c.l.b16 %v832
  %v861 = vunpack.c.l.b16 %v833
  %v862 = vunpack.c.l.b16 %v834
  %v863 = vunpack.c.l.b16 %v835
  %v864 = vunpack.c.l.b16 %v836
  %v865 = vunpack.c.l.b16 %v837
  %v866 = vunpack.c.l.b16 %v838
  %v867 = vunpack.c.l.b16 %v839
  %v868 = vunpack.c.l.b16 %v840
  %v869 = vunpack.c.l.b16 %v841
  %v870 = vunpack.c.l.b16 %v842
  %v871 = vpack.c.b16 %v858, %v857
  %v872 = vpack.c.b16 %v860, %v859
  %v873 = vpack.c.b16 %v862, %v861
  %v874 = vpack.c.b16 %v864, %v863
  %v875 = vpack.c.b16 %v866, %v865
  %v876 = vpack.c.b16 %v868, %v867
  %v877 = vpack.c.b16 %v870, %v869
  %881 = vrot.lane.b32.xlu0 %v809, 92
  %v882 = vpop.permute.xlu0 %881
  %883 = vrot.lane.b32.xlu0 %v810, 92
  %v884 = vpop.permute.xlu0 %883
  %885 = vrot.lane.b32.xlu0 %v811, 92
  %v886 = vpop.permute.xlu0 %885
  %vm889 = vcmask 293888
  %v891 = vsel %vm889, %v871, 0
  %v894 = vsel %vm889, %v872, 0
  %v897 = vsel %vm889, %v873, 0
  %v900 = vsel %vm889, %v874, 0
  %v903 = vsel %vm889, %v875, 0
  %v906 = vsel %vm889, %v876, 0
  %v909 = vsel %vm889, %v877, 0
  %v912 = vsel %vm320, %v886, 0
  %914 = vmatprep.subr.bf16.mxu0 0
  %915 = vmatpush1.bf16.msra.mxu0 %v882
  %916 = vmatprep.subr.bf16.mxu0 0
  %917 = vmatpush1.bf16.msra.mxu0 %v884
  %918 = vmatprep.subr.bf16.mxu0 0
  %919 = vmatpush1.bf16.msra.mxu0 %v912
  %920 = vmatprep.subr.bf16.mxu0 0
  %921 = vmatpush1.bf16.msra.mxu0 0
  %922 = vmatprep.subr.bf16.mxu0 0
  %923 = vmatpush1.bf16.msra.mxu0 0
  %924 = vmatprep.subr.bf16.mxu0 0
  %925 = vmatpush1.bf16.msra.mxu0 0
  %926 = vmatprep.subr.bf16.mxu0 0
  %927 = vmatpush1.bf16.msra.mxu0 0
  %928 = vmatprep.subr.bf16.mxu0 0
  %929 = vmatpush1.bf16.msra.mxu0 0
  %930 = vmatprep.subr.bf16.mxu0 0
  %931 = vmatpush1.bf16.msra.mxu0 0
  %932 = vmatprep.subr.bf16.mxu0 0
  %933 = vmatpush1.bf16.msra.mxu0 0
  %934 = vmatprep.subr.bf16.mxu0 0
  %935 = vmatpush1.bf16.msra.mxu0 0
  %936 = vmatprep.subr.bf16.mxu0 0
  %937 = vmatpush1.bf16.msra.mxu0 0
  %938 = vmatprep.subr.bf16.mxu0 0
  %939 = vmatpush1.bf16.msra.mxu0 0
  %940 = vmatprep.subr.bf16.mxu0 0
  %941 = vmatpush1.bf16.msra.mxu0 0
  %942 = vmatprep.subr.bf16.mxu0 0
  %943 = vmatpush1.bf16.msra.mxu0 0
  %944 = vmatprep.subr.bf16.mxu0 0
  %945 = vmatpush1.bf16.msra.mxu0 0
  %946 = vmatprep.mubr.bf16.mxu0 0
  %947 = vmatmul.mubr.bf16.gmra.mrb[0].mxu0 %v891
  %v948 = vpop.f32.mrb[0].mxu0
  %v949 = vadd.f32 0.0, %v948
  %v950 = vpop.f32.mrb[0].mxu0
  %v951 = vpop.f32.mrb[0].mxu0
  %v952 = vadd.f32 0.0, %v951
  %v953 = vpop.f32.mrb[0].mxu0
  %954 = vmatprep.mubr.bf16.mxu0 0
  %955 = vmatmul.mubr.bf16.gmra.mrb[0].mxu0 %v894
  %v956 = vpop.f32.mrb[0].mxu0
  %v957 = vadd.f32 0.0, %v956
  %v958 = vpop.f32.mrb[0].mxu0
  %v959 = vpop.f32.mrb[0].mxu0
  %v960 = vadd.f32 0.0, %v959
  %v961 = vpop.f32.mrb[0].mxu0
  %962 = vmatprep.mubr.bf16.mxu0 0
  %963 = vmatmul.mubr.bf16.gmra.mrb[0].mxu0 %v897
  %v964 = vpop.f32.mrb[0].mxu0
  %v965 = vadd.f32 0.0, %v964
  %v966 = vpop.f32.mrb[0].mxu0
  %v967 = vpop.f32.mrb[0].mxu0
  %v968 = vadd.f32 0.0, %v967
  %v969 = vpop.f32.mrb[0].mxu0
  %970 = vmatprep.mubr.bf16.mxu0 0
  %971 = vmatmul.mubr.bf16.gmra.mrb[0].mxu0 %v900
  %v972 = vpop.f32.mrb[0].mxu0
  %v973 = vadd.f32 0.0, %v972
  %v974 = vpop.f32.mrb[0].mxu0
  %v975 = vpop.f32.mrb[0].mxu0
  %v976 = vadd.f32 0.0, %v975
  %v977 = vpop.f32.mrb[0].mxu0
  %978 = vmatprep.mubr.bf16.mxu0 0
  %979 = vmatmul.mubr.bf16.gmra.mrb[0].mxu0 %v903
  %v980 = vpop.f32.mrb[0].mxu0
  %v981 = vadd.f32 0.0, %v980
  %v982 = vpop.f32.mrb[0].mxu0
  %v983 = vpop.f32.mrb[0].mxu0
  %v984 = vadd.f32 0.0, %v983
  %v985 = vpop.f32.mrb[0].mxu0
  %986 = vmatprep.mubr.bf16.mxu0 0
  %987 = vmatmul.mubr.bf16.gmra.mrb[0].mxu0 %v906
  %v988 = vpop.f32.mrb[0].mxu0
  %v989 = vadd.f32 0.0, %v988
  %v990 = vpop.f32.mrb[0].mxu0
  %v991 = vpop.f32.mrb[0].mxu0
  %v992 = vadd.f32 0.0, %v991
  %v993 = vpop.f32.mrb[0].mxu0
  %994 = vmatprep.mubr.bf16.mxu0 0
  %995 = vmatmul.mubr.bf16.gmra.mrb[0].mxu0 %v909
  %v996 = vpop.f32.mrb[0].mxu0
  %v997 = vadd.f32 0.0, %v996
  %v998 = vpop.f32.mrb[0].mxu0
  %v999 = vpop.f32.mrb[0].mxu0
  %v1000 = vadd.f32 0.0, %v999
  %v1001 = vpop.f32.mrb[0].mxu0
  %1002 = vdwg.mxu0
  %v1017 = vunpack.c.l.b16 %v814
  %v1018 = vunpack.c.l.b16 %v815
  %v1019 = vunpack.c.l.b16 %v816
  %v1020 = vunpack.c.l.b16 %v817
  %v1021 = vunpack.c.l.b16 %v818
  %v1022 = vunpack.c.l.b16 %v819
  %v1023 = vunpack.c.l.b16 %v820
  %v1024 = vunpack.c.l.b16 %v821
  %v1025 = vunpack.c.l.b16 %v822
  %v1026 = vunpack.c.l.b16 %v823
  %v1027 = vunpack.c.l.b16 %v824
  %v1028 = vunpack.c.l.b16 %v825
  %v1029 = vunpack.c.l.b16 %v826
  %v1030 = vunpack.c.l.b16 %v827
  %v1031 = vpack.c.b16 %v1018, %v1017
  %v1032 = vpack.c.b16 %v1020, %v1019
  %v1033 = vpack.c.b16 %v1022, %v1021
  %v1034 = vpack.c.b16 %v1024, %v1023
  %v1035 = vpack.c.b16 %v1026, %v1025
  %v1036 = vpack.c.b16 %v1028, %v1027
  %v1037 = vpack.c.b16 %v1030, %v1029
  %v1039 = vsel %vm889, %v1031, 0
  %v1042 = vsel %vm889, %v1032, 0
  %v1045 = vsel %vm889, %v1033, 0
  %v1048 = vsel %vm889, %v1034, 0
  %v1051 = vsel %vm889, %v1035, 0
  %v1054 = vsel %vm889, %v1036, 0
  %v1057 = vsel %vm889, %v1037, 0
  %v1060 = vsel %vm320, %v811, 0
  %1062 = vmatprep.subr.bf16.mxu0 0
  %1063 = vmatpush1.bf16.msra.mxu0 %v809
  %1064 = vmatprep.subr.bf16.mxu0 0
  %1065 = vmatpush1.bf16.msra.mxu0 %v810
  %1066 = vmatprep.subr.bf16.mxu0 0
  %1067 = vmatpush1.bf16.msra.mxu0 %v1060
  %1068 = vmatprep.subr.bf16.mxu0 0
  %1069 = vmatpush1.bf16.msra.mxu0 0
  %1070 = vmatprep.subr.bf16.mxu0 0
  %1071 = vmatpush1.bf16.msra.mxu0 0
  %1072 = vmatprep.subr.bf16.mxu0 0
  %1073 = vmatpush1.bf16.msra.mxu0 0
  %1074 = vmatprep.subr.bf16.mxu0 0
  %1075 = vmatpush1.bf16.msra.mxu0 0
  %1076 = vmatprep.subr.bf16.mxu0 0
  %1077 = vmatpush1.bf16.msra.mxu0 0
  %1078 = vmatprep.subr.bf16.mxu0 0
  %1079 = vmatpush1.bf16.msra.mxu0 0
  %1080 = vmatprep.subr.bf16.mxu0 0
  %1081 = vmatpush1.bf16.msra.mxu0 0
  %1082 = vmatprep.subr.bf16.mxu0 0
  %1083 = vmatpush1.bf16.msra.mxu0 0
  %1084 = vmatprep.subr.bf16.mxu0 0
  %1085 = vmatpush1.bf16.msra.mxu0 0
  %1086 = vmatprep.subr.bf16.mxu0 0
  %1087 = vmatpush1.bf16.msra.mxu0 0
  %1088 = vmatprep.subr.bf16.mxu0 0
  %1089 = vmatpush1.bf16.msra.mxu0 0
  %1090 = vmatprep.subr.bf16.mxu0 0
  %1091 = vmatpush1.bf16.msra.mxu0 0
  %1092 = vmatprep.subr.bf16.mxu0 0
  %1093 = vmatpush1.bf16.msra.mxu0 0
  %1094 = vmatprep.mubr.bf16.mxu0 0
  %1095 = vmatmul.mubr.bf16.gmra.mrb[0].mxu0 %v1039
  %v1096 = vpop.f32.mrb[0].mxu0
  %v1097 = vadd.f32 %v949, %v1096
  %v1098 = vpop.f32.mrb[0].mxu0
  %v1099 = vpop.f32.mrb[0].mxu0
  %v1100 = vadd.f32 %v952, %v1099
  %v1101 = vpop.f32.mrb[0].mxu0
  %1102 = vmatprep.mubr.bf16.mxu0 0
  %1103 = vmatmul.mubr.bf16.gmra.mrb[0].mxu0 %v1042
  %v1104 = vpop.f32.mrb[0].mxu0
  %v1105 = vadd.f32 %v957, %v1104
  %v1106 = vpop.f32.mrb[0].mxu0
  %v1107 = vpop.f32.mrb[0].mxu0
  %v1108 = vadd.f32 %v960, %v1107
  %v1109 = vpop.f32.mrb[0].mxu0
  %1110 = vmatprep.mubr.bf16.mxu0 0
  %1111 = vmatmul.mubr.bf16.gmra.mrb[0].mxu0 %v1045
  %v1112 = vpop.f32.mrb[0].mxu0
  %v1113 = vadd.f32 %v965, %v1112
  %v1114 = vpop.f32.mrb[0].mxu0
  %v1115 = vpop.f32.mrb[0].mxu0
  %v1116 = vadd.f32 %v968, %v1115
  %v1117 = vpop.f32.mrb[0].mxu0
  %1118 = vmatprep.mubr.bf16.mxu0 0
  %1119 = vmatmul.mubr.bf16.gmra.mrb[0].mxu0 %v1048
  %v1120 = vpop.f32.mrb[0].mxu0
  %v1121 = vadd.f32 %v973, %v1120
  %v1122 = vpop.f32.mrb[0].mxu0
  %v1123 = vpop.f32.mrb[0].mxu0
  %v1124 = vadd.f32 %v976, %v1123
  %v1125 = vpop.f32.mrb[0].mxu0
  %1126 = vmatprep.mubr.bf16.mxu0 0
  %1127 = vmatmul.mubr.bf16.gmra.mrb[0].mxu0 %v1051
  %v1128 = vpop.f32.mrb[0].mxu0
  %v1129 = vadd.f32 %v981, %v1128
  %v1130 = vpop.f32.mrb[0].mxu0
  %v1131 = vpop.f32.mrb[0].mxu0
  %v1132 = vadd.f32 %v984, %v1131
  %v1133 = vpop.f32.mrb[0].mxu0
  %1134 = vmatprep.mubr.bf16.mxu0 0
  %1135 = vmatmul.mubr.bf16.gmra.mrb[0].mxu0 %v1054
  %v1136 = vpop.f32.mrb[0].mxu0
  %v1137 = vadd.f32 %v989, %v1136
  %v1138 = vpop.f32.mrb[0].mxu0
  %v1139 = vpop.f32.mrb[0].mxu0
  %v1140 = vadd.f32 %v992, %v1139
  %v1141 = vpop.f32.mrb[0].mxu0
  %1142 = vmatprep.mubr.bf16.mxu0 0
  %1143 = vmatmul.mubr.bf16.gmra.mrb[0].mxu0 %v1057
  %v1144 = vpop.f32.mrb[0].mxu0
  %v1145 = vadd.f32 %v997, %v1144
  %v1146 = vpop.f32.mrb[0].mxu0
  %v1147 = vpop.f32.mrb[0].mxu0
  %v1148 = vadd.f32 %v1000, %v1147
  %v1149 = vpop.f32.mrb[0].mxu0
  %1150 = vdwg.mxu0
  %s1151 = scalar_lea.vmem %s9, 112
  %v1152 = vld [vmem:[%s1151] sm:$0xf]
  %v1153 = vld [vmem:[%s1151 + $0x4] sm:$0xf]
  %v1154 = vld [vmem:[%s1151 + $0x8] sm:$0xf]
  %v1155 = vld [vmem:[%s1151 + $0xc] sm:$0xf]
  %v1156 = vld [vmem:[%s1151 + $0x10] sm:$0xf]
  %v1157 = vld [vmem:[%s1151 + $0x14] sm:$0xf]
  %v1158 = vld [vmem:[%s1151 + $0x18] sm:$0xf]
  %v1159 = vld [vmem:[%s1151 + $0x1c] sm:$0xf]
  %v1160 = vld [vmem:[%s1151 + $0x20] sm:$0xf]
  %v1161 = vld [vmem:[%s1151 + $0x24] sm:$0xf]
  %v1162 = vld [vmem:[%s1151 + $0x28] sm:$0xf]
  %v1163 = vld [vmem:[%s1151 + $0x2c] sm:$0xf]
  %v1164 = vld [vmem:[%s1151 + $0x30] sm:$0xf]
  %v1165 = vld [vmem:[%s1151 + $0x34] sm:$0x3]
  %v1180 = vunpack.c.l.b16 %v1152
  %v1181 = vunpack.c.l.b16 %v1153
  %v1182 = vunpack.c.l.b16 %v1154
  %v1183 = vunpack.c.l.b16 %v1155
  %v1184 = vunpack.c.l.b16 %v1156
  %v1185 = vunpack.c.l.b16 %v1157
  %v1186 = vunpack.c.l.b16 %v1158
  %v1187 = vunpack.c.l.b16 %v1159
  %v1188 = vunpack.c.l.b16 %v1160
  %v1189 = vunpack.c.l.b16 %v1161
  %v1190 = vunpack.c.l.b16 %v1162
  %v1191 = vunpack.c.l.b16 %v1163
  %v1192 = vunpack.c.l.b16 %v1164
  %v1193 = vunpack.c.l.b16 %v1165
  %v1194 = vpack.c.b16 %v1181, %v1180
  %v1195 = vpack.c.b16 %v1183, %v1182
  %v1196 = vpack.c.b16 %v1185, %v1184
  %v1197 = vpack.c.b16 %v1187, %v1186
  %v1198 = vpack.c.b16 %v1189, %v1188
  %v1199 = vpack.c.b16 %v1191, %v1190
  %v1200 = vpack.c.b16 %v1193, %v1192
  %1201 = vrot.lane.b32.xlu0 %v809, 56
  %v1202 = vpop.permute.xlu0 %1201
  %1203 = vrot.lane.b32.xlu0 %v810, 56
  %v1204 = vpop.permute.xlu0 %1203
  %1205 = vrot.lane.b32.xlu0 %v811, 56
  %v1206 = vpop.permute.xlu0 %1205
  %v1210 = vsel %vm889, %v1194, 0
  %v1213 = vsel %vm889, %v1195, 0
  %v1216 = vsel %vm889, %v1196, 0
  %v1219 = vsel %vm889, %v1197, 0
  %v1222 = vsel %vm889, %v1198, 0
  %v1225 = vsel %vm889, %v1199, 0
  %v1228 = vsel %vm889, %v1200, 0
  %v1231 = vsel %vm320, %v1206, 0
  %1233 = vmatprep.subr.bf16.mxu0 0
  %1234 = vmatpush1.bf16.msra.mxu0 %v1202
  %1235 = vmatprep.subr.bf16.mxu0 0
  %1236 = vmatpush1.bf16.msra.mxu0 %v1204
  %1237 = vmatprep.subr.bf16.mxu0 0
  %1238 = vmatpush1.bf16.msra.mxu0 %v1231
  %1239 = vmatprep.subr.bf16.mxu0 0
  %1240 = vmatpush1.bf16.msra.mxu0 0
  %1241 = vmatprep.subr.bf16.mxu0 0
  %1242 = vmatpush1.bf16.msra.mxu0 0
  %1243 = vmatprep.subr.bf16.mxu0 0
  %1244 = vmatpush1.bf16.msra.mxu0 0
  %1245 = vmatprep.subr.bf16.mxu0 0
  %1246 = vmatpush1.bf16.msra.mxu0 0
  %1247 = vmatprep.subr.bf16.mxu0 0
  %1248 = vmatpush1.bf16.msra.mxu0 0
  %1249 = vmatprep.subr.bf16.mxu0 0
  %1250 = vmatpush1.bf16.msra.mxu0 0
  %1251 = vmatprep.subr.bf16.mxu0 0
  %1252 = vmatpush1.bf16.msra.mxu0 0
  %1253 = vmatprep.subr.bf16.mxu0 0
  %1254 = vmatpush1.bf16.msra.mxu0 0
  %1255 = vmatprep.subr.bf16.mxu0 0
  %1256 = vmatpush1.bf16.msra.mxu0 0
  %1257 = vmatprep.subr.bf16.mxu0 0
  %1258 = vmatpush1.bf16.msra.mxu0 0
  %1259 = vmatprep.subr.bf16.mxu0 0
  %1260 = vmatpush1.bf16.msra.mxu0 0
  %1261 = vmatprep.subr.bf16.mxu0 0
  %1262 = vmatpush1.bf16.msra.mxu0 0
  %1263 = vmatprep.subr.bf16.mxu0 0
  %1264 = vmatpush1.bf16.msra.mxu0 0
  %1265 = vmatprep.mubr.bf16.mxu0 0
  %1266 = vmatmul.mubr.bf16.gmra.mrb[0].mxu0 %v1210
  %v1267 = vpop.f32.mrb[0].mxu0
  %v1268 = vadd.f32 0.0, %v1267
  %v1269 = vpop.f32.mrb[0].mxu0
  %v1270 = vpop.f32.mrb[0].mxu0
  %v1271 = vadd.f32 0.0, %v1270
  %v1272 = vpop.f32.mrb[0].mxu0
  %1273 = vmatprep.mubr.bf16.mxu0 0
  %1274 = vmatmul.mubr.bf16.gmra.mrb[0].mxu0 %v1213
  %v1275 = vpop.f32.mrb[0].mxu0
  %v1276 = vadd.f32 0.0, %v1275
  %v1277 = vpop.f32.mrb[0].mxu0
  %v1278 = vpop.f32.mrb[0].mxu0
  %v1279 = vadd.f32 0.0, %v1278
  %v1280 = vpop.f32.mrb[0].mxu0
  %1281 = vmatprep.mubr.bf16.mxu0 0
  %1282 = vmatmul.mubr.bf16.gmra.mrb[0].mxu0 %v1216
  %v1283 = vpop.f32.mrb[0].mxu0
  %v1284 = vadd.f32 0.0, %v1283
  %v1285 = vpop.f32.mrb[0].mxu0
  %v1286 = vpop.f32.mrb[0].mxu0
  %v1287 = vadd.f32 0.0, %v1286
  %v1288 = vpop.f32.mrb[0].mxu0
  %1289 = vmatprep.mubr.bf16.mxu0 0
  %1290 = vmatmul.mubr.bf16.gmra.mrb[0].mxu0 %v1219
  %v1291 = vpop.f32.mrb[0].mxu0
  %v1292 = vadd.f32 0.0, %v1291
  %v1293 = vpop.f32.mrb[0].mxu0
  %v1294 = vpop.f32.mrb[0].mxu0
  %v1295 = vadd.f32 0.0, %v1294
  %v1296 = vpop.f32.mrb[0].mxu0
  %1297 = vmatprep.mubr.bf16.mxu0 0
  %1298 = vmatmul.mubr.bf16.gmra.mrb[0].mxu0 %v1222
  %v1299 = vpop.f32.mrb[0].mxu0
  %v1300 = vadd.f32 0.0, %v1299
  %v1301 = vpop.f32.mrb[0].mxu0
  %v1302 = vpop.f32.mrb[0].mxu0
  %v1303 = vadd.f32 0.0, %v1302
  %v1304 = vpop.f32.mrb[0].mxu0
  %1305 = vmatprep.mubr.bf16.mxu0 0
  %1306 = vmatmul.mubr.bf16.gmra.mrb[0].mxu0 %v1225
  %v1307 = vpop.f32.mrb[0].mxu0
  %v1308 = vadd.f32 0.0, %v1307
  %v1309 = vpop.f32.mrb[0].mxu0
  %v1310 = vpop.f32.mrb[0].mxu0
  %v1311 = vadd.f32 0.0, %v1310
  %v1312 = vpop.f32.mrb[0].mxu0
  %1313 = vmatprep.mubr.bf16.mxu0 0
  %1314 = vmatmul.mubr.bf16.gmra.mrb[0].mxu0 %v1228
  %v1315 = vpop.f32.mrb[0].mxu0
  %v1316 = vadd.f32 0.0, %v1315
  %v1317 = vpop.f32.mrb[0].mxu0
  %v1318 = vpop.f32.mrb[0].mxu0
  %v1319 = vadd.f32 0.0, %v1318
  %v1320 = vpop.f32.mrb[0].mxu0
  %1321 = vdwg.mxu0
  %v1322 = vadd.f32 %v1097, %v1268
  %v1323 = vadd.f32 %v1100, %v1271
  %v1324 = vadd.f32 %v1105, %v1276
  %v1325 = vadd.f32 %v1108, %v1279
  %v1326 = vadd.f32 %v1113, %v1284
  %v1327 = vadd.f32 %v1116, %v1287
  %v1328 = vadd.f32 %v1121, %v1292
  %v1329 = vadd.f32 %v1124, %v1295
  %v1330 = vadd.f32 %v1129, %v1300
  %v1331 = vadd.f32 %v1132, %v1303
  %v1332 = vadd.f32 %v1137, %v1308
  %v1333 = vadd.f32 %v1140, %v1311
  %v1334 = vadd.f32 %v1145, %v1316
  %v1335 = vadd.f32 %v1148, %v1319
  %v1336 = vpack.c.bf16 %v1323, %v1322
  %v1337 = vpack.c.bf16 %v1325, %v1324
  %v1338 = vpack.c.bf16 %v1327, %v1326
  %v1339 = vpack.c.bf16 %v1329, %v1328
  %v1340 = vpack.c.bf16 %v1331, %v1330
  %v1341 = vpack.c.bf16 %v1333, %v1332
  %v1342 = vpack.c.bf16 %v1335, %v1334
  %vm1345 = vcmask 1045504
  %v1346 = vrot.slane %v811, 2
  %v1347 = vrot.slane %v812, 2
  %v1348 = vsel %vm1345, %v1346, %v1347
  %v1349 = vrot.slane %v813, 2
  %v1350 = vsel %vm1345, %v1347, %v1349
  %1351 = vrot.lane.b32.xlu0 %v1348, 92
  %v1352 = vpop.permute.xlu0 %1351
  %1353 = vrot.lane.b32.xlu0 %v1350, 92
  %v1354 = vpop.permute.xlu0 %1353
  %1355 = vrot.lane.b32.xlu0 %v1349, 92
  %v1356 = vpop.permute.xlu0 %1355
  %v1360 = vsel %vm320, %v1356, 0
  %1362 = vmatprep.subr.bf16.mxu0 0
  %1363 = vmatpush1.bf16.msra.mxu0 %v1352
  %1364 = vmatprep.subr.bf16.mxu0 0
  %1365 = vmatpush1.bf16.msra.mxu0 %v1354
  %1366 = vmatprep.subr.bf16.mxu0 0
  %1367 = vmatpush1.bf16.msra.mxu0 %v1360
  %1368 = vmatprep.subr.bf16.mxu0 0
  %1369 = vmatpush1.bf16.msra.mxu0 0
  %1370 = vmatprep.subr.bf16.mxu0 0
  %1371 = vmatpush1.bf16.msra.mxu0 0
  %1372 = vmatprep.subr.bf16.mxu0 0
  %1373 = vmatpush1.bf16.msra.mxu0 0
  %1374 = vmatprep.subr.bf16.mxu0 0
  %1375 = vmatpush1.bf16.msra.mxu0 0
  %1376 = vmatprep.subr.bf16.mxu0 0
  %1377 = vmatpush1.bf16.msra.mxu0 0
  %1378 = vmatprep.subr.bf16.mxu0 0
  %1379 = vmatpush1.bf16.msra.mxu0 0
  %1380 = vmatprep.subr.bf16.mxu0 0
  %1381 = vmatpush1.bf16.msra.mxu0 0
  %1382 = vmatprep.subr.bf16.mxu0 0
  %1383 = vmatpush1.bf16.msra.mxu0 0
  %1384 = vmatprep.subr.bf16.mxu0 0
  %1385 = vmatpush1.bf16.msra.mxu0 0
  %1386 = vmatprep.subr.bf16.mxu0 0
  %1387 = vmatpush1.bf16.msra.mxu0 0
  %1388 = vmatprep.subr.bf16.mxu0 0
  %1389 = vmatpush1.bf16.msra.mxu0 0
  %1390 = vmatprep.subr.bf16.mxu0 0
  %1391 = vmatpush1.bf16.msra.mxu0 0
  %1392 = vmatprep.subr.bf16.mxu0 0
  %1393 = vmatpush1.bf16.msra.mxu0 0
  %1394 = vmatprep.mubr.bf16.mxu0 0
  %1395 = vmatmul.mubr.bf16.gmra.mrb[0].mxu0 %v891
  %v1396 = vpop.f32.mrb[0].mxu0
  %v1397 = vadd.f32 0.0, %v1396
  %v1398 = vpop.f32.mrb[0].mxu0
  %v1399 = vpop.f32.mrb[0].mxu0
  %v1400 = vadd.f32 0.0, %v1399
  %v1401 = vpop.f32.mrb[0].mxu0
  %1402 = vmatprep.mubr.bf16.mxu0 0
  %1403 = vmatmul.mubr.bf16.gmra.mrb[0].mxu0 %v894
  %v1404 = vpop.f32.mrb[0].mxu0
  %v1405 = vadd.f32 0.0, %v1404
  %v1406 = vpop.f32.mrb[0].mxu0
  %v1407 = vpop.f32.mrb[0].mxu0
  %v1408 = vadd.f32 0.0, %v1407
  %v1409 = vpop.f32.mrb[0].mxu0
  %1410 = vmatprep.mubr.bf16.mxu0 0
  %1411 = vmatmul.mubr.bf16.gmra.mrb[0].mxu0 %v897
  %v1412 = vpop.f32.mrb[0].mxu0
  %v1413 = vadd.f32 0.0, %v1412
  %v1414 = vpop.f32.mrb[0].mxu0
  %v1415 = vpop.f32.mrb[0].mxu0
  %v1416 = vadd.f32 0.0, %v1415
  %v1417 = vpop.f32.mrb[0].mxu0
  %1418 = vmatprep.mubr.bf16.mxu0 0
  %1419 = vmatmul.mubr.bf16.gmra.mrb[0].mxu0 %v900
  %v1420 = vpop.f32.mrb[0].mxu0
  %v1421 = vadd.f32 0.0, %v1420
  %v1422 = vpop.f32.mrb[0].mxu0
  %v1423 = vpop.f32.mrb[0].mxu0
  %v1424 = vadd.f32 0.0, %v1423
  %v1425 = vpop.f32.mrb[0].mxu0
  %1426 = vmatprep.mubr.bf16.mxu0 0
  %1427 = vmatmul.mubr.bf16.gmra.mrb[0].mxu0 %v903
  %v1428 = vpop.f32.mrb[0].mxu0
  %v1429 = vadd.f32 0.0, %v1428
  %v1430 = vpop.f32.mrb[0].mxu0
  %v1431 = vpop.f32.mrb[0].mxu0
  %v1432 = vadd.f32 0.0, %v1431
  %v1433 = vpop.f32.mrb[0].mxu0
  %1434 = vmatprep.mubr.bf16.mxu0 0
  %1435 = vmatmul.mubr.bf16.gmra.mrb[0].mxu0 %v906
  %v1436 = vpop.f32.mrb[0].mxu0
  %v1437 = vadd.f32 0.0, %v1436
  %v1438 = vpop.f32.mrb[0].mxu0
  %v1439 = vpop.f32.mrb[0].mxu0
  %v1440 = vadd.f32 0.0, %v1439
  %v1441 = vpop.f32.mrb[0].mxu0
  %1442 = vmatprep.mubr.bf16.mxu0 0
  %1443 = vmatmul.mubr.bf16.gmra.mrb[0].mxu0 %v909
  %v1444 = vpop.f32.mrb[0].mxu0
  %v1445 = vadd.f32 0.0, %v1444
  %v1446 = vpop.f32.mrb[0].mxu0
  %v1447 = vpop.f32.mrb[0].mxu0
  %v1448 = vadd.f32 0.0, %v1447
  %v1449 = vpop.f32.mrb[0].mxu0
  %1450 = vdwg.mxu0
  %v1454 = vsel %vm320, %v1349, 0
  %1456 = vmatprep.subr.bf16.mxu0 0
  %1457 = vmatpush1.bf16.msra.mxu0 %v1348
  %1458 = vmatprep.subr.bf16.mxu0 0
  %1459 = vmatpush1.bf16.msra.mxu0 %v1350
  %1460 = vmatprep.subr.bf16.mxu0 0
  %1461 = vmatpush1.bf16.msra.mxu0 %v1454
  %1462 = vmatprep.subr.bf16.mxu0 0
  %1463 = vmatpush1.bf16.msra.mxu0 0
  %1464 = vmatprep.subr.bf16.mxu0 0
  %1465 = vmatpush1.bf16.msra.mxu0 0
  %1466 = vmatprep.subr.bf16.mxu0 0
  %1467 = vmatpush1.bf16.msra.mxu0 0
  %1468 = vmatprep.subr.bf16.mxu0 0
  %1469 = vmatpush1.bf16.msra.mxu0 0
  %1470 = vmatprep.subr.bf16.mxu0 0
  %1471 = vmatpush1.bf16.msra.mxu0 0
  %1472 = vmatprep.subr.bf16.mxu0 0
  %1473 = vmatpush1.bf16.msra.mxu0 0
  %1474 = vmatprep.subr.bf16.mxu0 0
  %1475 = vmatpush1.bf16.msra.mxu0 0
  %1476 = vmatprep.subr.bf16.mxu0 0
  %1477 = vmatpush1.bf16.msra.mxu0 0
  %1478 = vmatprep.subr.bf16.mxu0 0
  %1479 = vmatpush1.bf16.msra.mxu0 0
  %1480 = vmatprep.subr.bf16.mxu0 0
  %1481 = vmatpush1.bf16.msra.mxu0 0
  %1482 = vmatprep.subr.bf16.mxu0 0
  %1483 = vmatpush1.bf16.msra.mxu0 0
  %1484 = vmatprep.subr.bf16.mxu0 0
  %1485 = vmatpush1.bf16.msra.mxu0 0
  %1486 = vmatprep.subr.bf16.mxu0 0
  %1487 = vmatpush1.bf16.msra.mxu0 0
  %1488 = vmatprep.mubr.bf16.mxu0 0
  %1489 = vmatmul.mubr.bf16.gmra.mrb[0].mxu0 %v1039
  %v1490 = vpop.f32.mrb[0].mxu0
  %v1491 = vadd.f32 %v1397, %v1490
  %v1492 = vpop.f32.mrb[0].mxu0
  %v1493 = vpop.f32.mrb[0].mxu0
  %v1494 = vadd.f32 %v1400, %v1493
  %v1495 = vpop.f32.mrb[0].mxu0
  %1496 = vmatprep.mubr.bf16.mxu0 0
  %1497 = vmatmul.mubr.bf16.gmra.mrb[0].mxu0 %v1042
  %v1498 = vpop.f32.mrb[0].mxu0
  %v1499 = vadd.f32 %v1405, %v1498
  %v1500 = vpop.f32.mrb[0].mxu0
  %v1501 = vpop.f32.mrb[0].mxu0
  %v1502 = vadd.f32 %v1408, %v1501
  %v1503 = vpop.f32.mrb[0].mxu0
  %1504 = vmatprep.mubr.bf16.mxu0 0
  %1505 = vmatmul.mubr.bf16.gmra.mrb[0].mxu0 %v1045
  %v1506 = vpop.f32.mrb[0].mxu0
  %v1507 = vadd.f32 %v1413, %v1506
  %v1508 = vpop.f32.mrb[0].mxu0
  %v1509 = vpop.f32.mrb[0].mxu0
  %v1510 = vadd.f32 %v1416, %v1509
  %v1511 = vpop.f32.mrb[0].mxu0
  %1512 = vmatprep.mubr.bf16.mxu0 0
  %1513 = vmatmul.mubr.bf16.gmra.mrb[0].mxu0 %v1048
  %v1514 = vpop.f32.mrb[0].mxu0
  %v1515 = vadd.f32 %v1421, %v1514
  %v1516 = vpop.f32.mrb[0].mxu0
  %v1517 = vpop.f32.mrb[0].mxu0
  %v1518 = vadd.f32 %v1424, %v1517
  %v1519 = vpop.f32.mrb[0].mxu0
  %1520 = vmatprep.mubr.bf16.mxu0 0
  %1521 = vmatmul.mubr.bf16.gmra.mrb[0].mxu0 %v1051
  %v1522 = vpop.f32.mrb[0].mxu0
  %v1523 = vadd.f32 %v1429, %v1522
  %v1524 = vpop.f32.mrb[0].mxu0
  %v1525 = vpop.f32.mrb[0].mxu0
  %v1526 = vadd.f32 %v1432, %v1525
  %v1527 = vpop.f32.mrb[0].mxu0
  %1528 = vmatprep.mubr.bf16.mxu0 0
  %1529 = vmatmul.mubr.bf16.gmra.mrb[0].mxu0 %v1054
  %v1530 = vpop.f32.mrb[0].mxu0
  %v1531 = vadd.f32 %v1437, %v1530
  %v1532 = vpop.f32.mrb[0].mxu0
  %v1533 = vpop.f32.mrb[0].mxu0
  %v1534 = vadd.f32 %v1440, %v1533
  %v1535 = vpop.f32.mrb[0].mxu0
  %1536 = vmatprep.mubr.bf16.mxu0 0
  %1537 = vmatmul.mubr.bf16.gmra.mrb[0].mxu0 %v1057
  %v1538 = vpop.f32.mrb[0].mxu0
  %v1539 = vadd.f32 %v1445, %v1538
  %v1540 = vpop.f32.mrb[0].mxu0
  %v1541 = vpop.f32.mrb[0].mxu0
  %v1542 = vadd.f32 %v1448, %v1541
  %v1543 = vpop.f32.mrb[0].mxu0
  %1544 = vdwg.mxu0
  %1545 = vrot.lane.b32.xlu0 %v1348, 56
  %v1546 = vpop.permute.xlu0 %1545
  %1547 = vrot.lane.b32.xlu0 %v1350, 56
  %v1548 = vpop.permute.xlu0 %1547
  %1549 = vrot.lane.b32.xlu0 %v1349, 56
  %v1550 = vpop.permute.xlu0 %1549
  %v1554 = vsel %vm320, %v1550, 0
  %1556 = vmatprep.subr.bf16.mxu0 0
  %1557 = vmatpush1.bf16.msra.mxu0 %v1546
  %1558 = vmatprep.subr.bf16.mxu0 0
  %1559 = vmatpush1.bf16.msra.mxu0 %v1548
  %1560 = vmatprep.subr.bf16.mxu0 0
  %1561 = vmatpush1.bf16.msra.mxu0 %v1554
  %1562 = vmatprep.subr.bf16.mxu0 0
  %1563 = vmatpush1.bf16.msra.mxu0 0
  %1564 = vmatprep.subr.bf16.mxu0 0
  %1565 = vmatpush1.bf16.msra.mxu0 0
  %1566 = vmatprep.subr.bf16.mxu0 0
  %1567 = vmatpush1.bf16.msra.mxu0 0
  %1568 = vmatprep.subr.bf16.mxu0 0
  %1569 = vmatpush1.bf16.msra.mxu0 0
  %1570 = vmatprep.subr.bf16.mxu0 0
  %1571 = vmatpush1.bf16.msra.mxu0 0
  %1572 = vmatprep.subr.bf16.mxu0 0
  %1573 = vmatpush1.bf16.msra.mxu0 0
  %1574 = vmatprep.subr.bf16.mxu0 0
  %1575 = vmatpush1.bf16.msra.mxu0 0
  %1576 = vmatprep.subr.bf16.mxu0 0
  %1577 = vmatpush1.bf16.msra.mxu0 0
  %1578 = vmatprep.subr.bf16.mxu0 0
  %1579 = vmatpush1.bf16.msra.mxu0 0
  %1580 = vmatprep.subr.bf16.mxu0 0
  %1581 = vmatpush1.bf16.msra.mxu0 0
  %1582 = vmatprep.subr.bf16.mxu0 0
  %1583 = vmatpush1.bf16.msra.mxu0 0
  %1584 = vmatprep.subr.bf16.mxu0 0
  %1585 = vmatpush1.bf16.msra.mxu0 0
  %1586 = vmatprep.subr.bf16.mxu0 0
  %1587 = vmatpush1.bf16.msra.mxu0 0
  %1588 = vmatprep.mubr.bf16.mxu0 0
  %1589 = vmatmul.mubr.bf16.gmra.mrb[0].mxu0 %v1210
  %v1590 = vpop.f32.mrb[0].mxu0
  %v1591 = vadd.f32 0.0, %v1590
  %v1592 = vpop.f32.mrb[0].mxu0
  %v1593 = vpop.f32.mrb[0].mxu0
  %v1594 = vadd.f32 0.0, %v1593
  %v1595 = vpop.f32.mrb[0].mxu0
  %1596 = vmatprep.mubr.bf16.mxu0 0
  %1597 = vmatmul.mubr.bf16.gmra.mrb[0].mxu0 %v1213
  %v1598 = vpop.f32.mrb[0].mxu0
  %v1599 = vadd.f32 0.0, %v1598
  %v1600 = vpop.f32.mrb[0].mxu0
  %v1601 = vpop.f32.mrb[0].mxu0
  %v1602 = vadd.f32 0.0, %v1601
  %v1603 = vpop.f32.mrb[0].mxu0
  %1604 = vmatprep.mubr.bf16.mxu0 0
  %1605 = vmatmul.mubr.bf16.gmra.mrb[0].mxu0 %v1216
  %v1606 = vpop.f32.mrb[0].mxu0
  %v1607 = vadd.f32 0.0, %v1606
  %v1608 = vpop.f32.mrb[0].mxu0
  %v1609 = vpop.f32.mrb[0].mxu0
  %v1610 = vadd.f32 0.0, %v1609
  %v1611 = vpop.f32.mrb[0].mxu0
  %1612 = vmatprep.mubr.bf16.mxu0 0
  %1613 = vmatmul.mubr.bf16.gmra.mrb[0].mxu0 %v1219
  %v1614 = vpop.f32.mrb[0].mxu0
  %v1615 = vadd.f32 0.0, %v1614
  %v1616 = vpop.f32.mrb[0].mxu0
  %v1617 = vpop.f32.mrb[0].mxu0
  %v1618 = vadd.f32 0.0, %v1617
  %v1619 = vpop.f32.mrb[0].mxu0
  %1620 = vmatprep.mubr.bf16.mxu0 0
  %1621 = vmatmul.mubr.bf16.gmra.mrb[0].mxu0 %v1222
  %v1622 = vpop.f32.mrb[0].mxu0
  %v1623 = vadd.f32 0.0, %v1622
  %v1624 = vpop.f32.mrb[0].mxu0
  %v1625 = vpop.f32.mrb[0].mxu0
  %v1626 = vadd.f32 0.0, %v1625
  %v1627 = vpop.f32.mrb[0].mxu0
  %1628 = vmatprep.mubr.bf16.mxu0 0
  %1629 = vmatmul.mubr.bf16.gmra.mrb[0].mxu0 %v1225
  %v1630 = vpop.f32.mrb[0].mxu0
  %v1631 = vadd.f32 0.0, %v1630
  %v1632 = vpop.f32.mrb[0].mxu0
  %v1633 = vpop.f32.mrb[0].mxu0
  %v1634 = vadd.f32 0.0, %v1633
  %v1635 = vpop.f32.mrb[0].mxu0
  %1636 = vmatprep.mubr.bf16.mxu0 0
  %1637 = vmatmul.mubr.bf16.gmra.mrb[0].mxu0 %v1228
  %v1638 = vpop.f32.mrb[0].mxu0
  %v1639 = vadd.f32 0.0, %v1638
  %v1640 = vpop.f32.mrb[0].mxu0
  %v1641 = vpop.f32.mrb[0].mxu0
  %v1642 = vadd.f32 0.0, %v1641
  %v1643 = vpop.f32.mrb[0].mxu0
  %1644 = vdwg.mxu0
  %v1645 = vadd.f32 %v1491, %v1591
  %v1646 = vadd.f32 %v1494, %v1594
  %v1647 = vadd.f32 %v1499, %v1599
  %v1648 = vadd.f32 %v1502, %v1602
  %v1649 = vadd.f32 %v1507, %v1607
  %v1650 = vadd.f32 %v1510, %v1610
  %v1651 = vadd.f32 %v1515, %v1615
  %v1652 = vadd.f32 %v1518, %v1618
  %v1653 = vadd.f32 %v1523, %v1623
  %v1654 = vadd.f32 %v1526, %v1626
  %v1655 = vadd.f32 %v1531, %v1631
  %v1656 = vadd.f32 %v1534, %v1634
  %v1657 = vadd.f32 %v1539, %v1639
  %v1658 = vadd.f32 %v1542, %v1642
  %v1659 = vpack.c.bf16 %v1646, %v1645
  %v1660 = vpack.c.bf16 %v1648, %v1647
  %v1661 = vpack.c.bf16 %v1650, %v1649
  %v1662 = vpack.c.bf16 %v1652, %v1651
  %v1663 = vpack.c.bf16 %v1654, %v1653
  %v1664 = vpack.c.bf16 %v1656, %v1655
  %v1665 = vpack.c.bf16 %v1658, %v1657
  %v1666 = vld [vmem:[%s10] sm:$0xf]
  %v1667 = vld [vmem:[%s10 + $0x4] sm:$0xf]
  %v1668 = vld [vmem:[%s10 + $0x8] sm:$0xf]
  %v1669 = vld [vmem:[%s10 + $0xc] sm:$0xf]
  %v1670 = vld [vmem:[%s10 + $0x10] sm:$0x3]
  %s1671 = scalar_lea.vmem %s10, 20
  %v1672 = vld [vmem:[%s1671] sm:$0xf]
  %v1673 = vld [vmem:[%s1671 + $0x4] sm:$0xf]
  %v1674 = vld [vmem:[%s1671 + $0x8] sm:$0xf]
  %v1675 = vld [vmem:[%s1671 + $0xc] sm:$0xf]
  %v1676 = vld [vmem:[%s1671 + $0x10] sm:$0x3]
  %v1682 = vunpack.c.l.b16 %v1672
  %v1683 = vunpack.c.l.b16 %v1673
  %v1684 = vunpack.c.l.b16 %v1674
  %v1685 = vunpack.c.l.b16 %v1675
  %v1686 = vunpack.c.l.b16 %v1676
  %v1687 = vpack.c.b16 %v1683, %v1682
  %v1688 = vpack.c.b16 %v1685, %v1684
  %v1689 = vpack.c.b16 %v1686, %v1686
  %v1693 = vsel %vm889, %v1659, 0
  %v1696 = vsel %vm889, %v1660, 0
  %v1699 = vsel %vm889, %v1661, 0
  %v1702 = vsel %vm889, %v1662, 0
  %v1705 = vsel %vm889, %v1663, 0
  %v1708 = vsel %vm889, %v1664, 0
  %v1711 = vsel %vm889, %v1665, 0
  %v1714 = vsel %vm320, %v1689, 0
  %1716 = vmatprep.subr.bf16.mxu0 0
  %1717 = vmatpush1.bf16.msra.mxu0 %v1687
  %1718 = vmatprep.subr.bf16.mxu0 0
  %1719 = vmatpush1.bf16.msra.mxu0 %v1688
  %1720 = vmatprep.subr.bf16.mxu0 0
  %1721 = vmatpush1.bf16.msra.mxu0 %v1714
  %1722 = vmatprep.subr.bf16.mxu0 0
  %1723 = vmatpush1.bf16.msra.mxu0 0
  %1724 = vmatprep.subr.bf16.mxu0 0
  %1725 = vmatpush1.bf16.msra.mxu0 0
  %1726 = vmatprep.subr.bf16.mxu0 0
  %1727 = vmatpush1.bf16.msra.mxu0 0
  %1728 = vmatprep.subr.bf16.mxu0 0
  %1729 = vmatpush1.bf16.msra.mxu0 0
  %1730 = vmatprep.subr.bf16.mxu0 0
  %1731 = vmatpush1.bf16.msra.mxu0 0
  %1732 = vmatprep.subr.bf16.mxu0 0
  %1733 = vmatpush1.bf16.msra.mxu0 0
  %1734 = vmatprep.subr.bf16.mxu0 0
  %1735 = vmatpush1.bf16.msra.mxu0 0
  %1736 = vmatprep.subr.bf16.mxu0 0
  %1737 = vmatpush1.bf16.msra.mxu0 0
  %1738 = vmatprep.subr.bf16.mxu0 0
  %1739 = vmatpush1.bf16.msra.mxu0 0
  %1740 = vmatprep.subr.bf16.mxu0 0
  %1741 = vmatpush1.bf16.msra.mxu0 0
  %1742 = vmatprep.subr.bf16.mxu0 0
  %1743 = vmatpush1.bf16.msra.mxu0 0
  %1744 = vmatprep.subr.bf16.mxu0 0
  %1745 = vmatpush1.bf16.msra.mxu0 0
  %1746 = vmatprep.subr.bf16.mxu0 0
  %1747 = vmatpush1.bf16.msra.mxu0 0
  %1748 = vmatprep.mubr.bf16.mxu0 0
  %1749 = vmatmul.mubr.bf16.gmra.mrb[0].mxu0 %v1693
  %v1750 = vpop.f32.mrb[0].mxu0
  %v1751 = vadd.f32 0.0, %v1750
  %v1752 = vpop.f32.mrb[0].mxu0
  %v1753 = vpop.f32.mrb[0].mxu0
  %v1754 = vadd.f32 0.0, %v1753
  %v1755 = vpop.f32.mrb[0].mxu0
  %1756 = vmatprep.mubr.bf16.mxu0 0
  %1757 = vmatmul.mubr.bf16.gmra.mrb[0].mxu0 %v1696
  %v1758 = vpop.f32.mrb[0].mxu0
  %v1759 = vadd.f32 0.0, %v1758
  %v1760 = vpop.f32.mrb[0].mxu0
  %v1761 = vpop.f32.mrb[0].mxu0
  %v1762 = vadd.f32 0.0, %v1761
  %v1763 = vpop.f32.mrb[0].mxu0
  %1764 = vmatprep.mubr.bf16.mxu0 0
  %1765 = vmatmul.mubr.bf16.gmra.mrb[0].mxu0 %v1699
  %v1766 = vpop.f32.mrb[0].mxu0
  %v1767 = vadd.f32 0.0, %v1766
  %v1768 = vpop.f32.mrb[0].mxu0
  %v1769 = vpop.f32.mrb[0].mxu0
  %v1770 = vadd.f32 0.0, %v1769
  %v1771 = vpop.f32.mrb[0].mxu0
  %1772 = vmatprep.mubr.bf16.mxu0 0
  %1773 = vmatmul.mubr.bf16.gmra.mrb[0].mxu0 %v1702
  %v1774 = vpop.f32.mrb[0].mxu0
  %v1775 = vadd.f32 0.0, %v1774
  %v1776 = vpop.f32.mrb[0].mxu0
  %v1777 = vpop.f32.mrb[0].mxu0
  %v1778 = vadd.f32 0.0, %v1777
  %v1779 = vpop.f32.mrb[0].mxu0
  %1780 = vmatprep.mubr.bf16.mxu0 0
  %1781 = vmatmul.mubr.bf16.gmra.mrb[0].mxu0 %v1705
  %v1782 = vpop.f32.mrb[0].mxu0
  %v1783 = vadd.f32 0.0, %v1782
  %v1784 = vpop.f32.mrb[0].mxu0
  %v1785 = vpop.f32.mrb[0].mxu0
  %v1786 = vadd.f32 0.0, %v1785
  %v1787 = vpop.f32.mrb[0].mxu0
  %1788 = vmatprep.mubr.bf16.mxu0 0
  %1789 = vmatmul.mubr.bf16.gmra.mrb[0].mxu0 %v1708
  %v1790 = vpop.f32.mrb[0].mxu0
  %v1791 = vadd.f32 0.0, %v1790
  %v1792 = vpop.f32.mrb[0].mxu0
  %v1793 = vpop.f32.mrb[0].mxu0
  %v1794 = vadd.f32 0.0, %v1793
  %v1795 = vpop.f32.mrb[0].mxu0
  %1796 = vmatprep.mubr.bf16.mxu0 0
  %1797 = vmatmul.mubr.bf16.gmra.mrb[0].mxu0 %v1711
  %v1798 = vpop.f32.mrb[0].mxu0
  %v1799 = vadd.f32 0.0, %v1798
  %v1800 = vpop.f32.mrb[0].mxu0
  %v1801 = vpop.f32.mrb[0].mxu0
  %v1802 = vadd.f32 0.0, %v1801
  %v1803 = vpop.f32.mrb[0].mxu0
  %1804 = vdwg.mxu0
  %v1810 = vunpack.c.l.b16 %v1666
  %v1811 = vunpack.c.l.b16 %v1667
  %v1812 = vunpack.c.l.b16 %v1668
  %v1813 = vunpack.c.l.b16 %v1669
  %v1814 = vunpack.c.l.b16 %v1670
  %v1815 = vpack.c.b16 %v1811, %v1810
  %v1816 = vpack.c.b16 %v1813, %v1812
  %v1817 = vpack.c.b16 %v1814, %v1814
  %v1821 = vsel %vm889, %v1336, 0
  %v1824 = vsel %vm889, %v1337, 0
  %v1827 = vsel %vm889, %v1338, 0
  %v1830 = vsel %vm889, %v1339, 0
  %v1833 = vsel %vm889, %v1340, 0
  %v1836 = vsel %vm889, %v1341, 0
  %v1839 = vsel %vm889, %v1342, 0
  %v1842 = vsel %vm320, %v1817, 0
  %1844 = vmatprep.subr.bf16.mxu0 0
  %1845 = vmatpush1.bf16.msra.mxu0 %v1815
  %1846 = vmatprep.subr.bf16.mxu0 0
  %1847 = vmatpush1.bf16.msra.mxu0 %v1816
  %1848 = vmatprep.subr.bf16.mxu0 0
  %1849 = vmatpush1.bf16.msra.mxu0 %v1842
  %1850 = vmatprep.subr.bf16.mxu0 0
  %1851 = vmatpush1.bf16.msra.mxu0 0
  %1852 = vmatprep.subr.bf16.mxu0 0
  %1853 = vmatpush1.bf16.msra.mxu0 0
  %1854 = vmatprep.subr.bf16.mxu0 0
  %1855 = vmatpush1.bf16.msra.mxu0 0
  %1856 = vmatprep.subr.bf16.mxu0 0
  %1857 = vmatpush1.bf16.msra.mxu0 0
  %1858 = vmatprep.subr.bf16.mxu0 0
  %1859 = vmatpush1.bf16.msra.mxu0 0
  %1860 = vmatprep.subr.bf16.mxu0 0
  %1861 = vmatpush1.bf16.msra.mxu0 0
  %1862 = vmatprep.subr.bf16.mxu0 0
  %1863 = vmatpush1.bf16.msra.mxu0 0
  %1864 = vmatprep.subr.bf16.mxu0 0
  %1865 = vmatpush1.bf16.msra.mxu0 0
  %1866 = vmatprep.subr.bf16.mxu0 0
  %1867 = vmatpush1.bf16.msra.mxu0 0
  %1868 = vmatprep.subr.bf16.mxu0 0
  %1869 = vmatpush1.bf16.msra.mxu0 0
  %1870 = vmatprep.subr.bf16.mxu0 0
  %1871 = vmatpush1.bf16.msra.mxu0 0
  %1872 = vmatprep.subr.bf16.mxu0 0
  %1873 = vmatpush1.bf16.msra.mxu0 0
  %1874 = vmatprep.subr.bf16.mxu0 0
  %1875 = vmatpush1.bf16.msra.mxu0 0
  %1876 = vmatprep.mubr.bf16.mxu0 0
  %1877 = vmatmul.mubr.bf16.gmra.mrb[0].mxu0 %v1821
  %v1878 = vpop.f32.mrb[0].mxu0
  %v1879 = vadd.f32 %v1751, %v1878
  %v1880 = vpop.f32.mrb[0].mxu0
  %v1881 = vpop.f32.mrb[0].mxu0
  %v1882 = vadd.f32 %v1754, %v1881
  %v1883 = vpop.f32.mrb[0].mxu0
  %1884 = vmatprep.mubr.bf16.mxu0 0
  %1885 = vmatmul.mubr.bf16.gmra.mrb[0].mxu0 %v1824
  %v1886 = vpop.f32.mrb[0].mxu0
  %v1887 = vadd.f32 %v1759, %v1886
  %v1888 = vpop.f32.mrb[0].mxu0
  %v1889 = vpop.f32.mrb[0].mxu0
  %v1890 = vadd.f32 %v1762, %v1889
  %v1891 = vpop.f32.mrb[0].mxu0
  %1892 = vmatprep.mubr.bf16.mxu0 0
  %1893 = vmatmul.mubr.bf16.gmra.mrb[0].mxu0 %v1827
  %v1894 = vpop.f32.mrb[0].mxu0
  %v1895 = vadd.f32 %v1767, %v1894
  %v1896 = vpop.f32.mrb[0].mxu0
  %v1897 = vpop.f32.mrb[0].mxu0
  %v1898 = vadd.f32 %v1770, %v1897
  %v1899 = vpop.f32.mrb[0].mxu0
  %1900 = vmatprep.mubr.bf16.mxu0 0
  %1901 = vmatmul.mubr.bf16.gmra.mrb[0].mxu0 %v1830
  %v1902 = vpop.f32.mrb[0].mxu0
  %v1903 = vadd.f32 %v1775, %v1902
  %v1904 = vpop.f32.mrb[0].mxu0
  %v1905 = vpop.f32.mrb[0].mxu0
  %v1906 = vadd.f32 %v1778, %v1905
  %v1907 = vpop.f32.mrb[0].mxu0
  %1908 = vmatprep.mubr.bf16.mxu0 0
  %1909 = vmatmul.mubr.bf16.gmra.mrb[0].mxu0 %v1833
  %v1910 = vpop.f32.mrb[0].mxu0
  %v1911 = vadd.f32 %v1783, %v1910
  %v1912 = vpop.f32.mrb[0].mxu0
  %v1913 = vpop.f32.mrb[0].mxu0
  %v1914 = vadd.f32 %v1786, %v1913
  %v1915 = vpop.f32.mrb[0].mxu0
  %1916 = vmatprep.mubr.bf16.mxu0 0
  %1917 = vmatmul.mubr.bf16.gmra.mrb[0].mxu0 %v1836
  %v1918 = vpop.f32.mrb[0].mxu0
  %v1919 = vadd.f32 %v1791, %v1918
  %v1920 = vpop.f32.mrb[0].mxu0
  %v1921 = vpop.f32.mrb[0].mxu0
  %v1922 = vadd.f32 %v1794, %v1921
  %v1923 = vpop.f32.mrb[0].mxu0
  %1924 = vmatprep.mubr.bf16.mxu0 0
  %1925 = vmatmul.mubr.bf16.gmra.mrb[0].mxu0 %v1839
  %v1926 = vpop.f32.mrb[0].mxu0
  %v1927 = vadd.f32 %v1799, %v1926
  %v1928 = vpop.f32.mrb[0].mxu0
  %v1929 = vpop.f32.mrb[0].mxu0
  %v1930 = vadd.f32 %v1802, %v1929
  %v1931 = vpop.f32.mrb[0].mxu0
  %1932 = vdwg.mxu0
  %v1933 = vld [vmem:[%s0] sm:$0xf]
  %v1934 = vld [vmem:[%s0 + $0x4] sm:$0xf]
  %v1935 = vld [vmem:[%s0 + $0x8] sm:$0xf]
  %v1936 = vld [vmem:[%s0 + $0xc] sm:$0xf]
  %v1937 = vld [vmem:[%s0 + $0x10] sm:$0x3]
  %v1938 = vunpack.c.l.bf16 %v1933
  %v1939 = vunpack.c.l.bf16 %v1934
  %v1940 = vunpack.c.l.bf16 %v1935
  %v1941 = vunpack.c.l.bf16 %v1936
  %v1942 = vunpack.c.l.bf16 %v1937
  %v1943 = vmul.f32 %v1879, %v1938
  %v1944 = vmul.f32 %v1882, %v1939
  %v1945 = vmul.f32 %v1887, %v1940
  %v1946 = vmul.f32 %v1890, %v1941
  %v1947 = vmul.f32 %v1895, %v1942
  %v1948 = vpack.c.bf16 %v1944, %v1943
  %v1949 = vpack.c.bf16 %v1946, %v1945
  %v1950 = vpack.c.bf16 %v1947, %v1947
  %v1951 = vld [vmem:[%s1] sm:$0xf]
  %v1952 = vld [vmem:[%s1 + $0x4] sm:$0xf]
  %v1953 = vld [vmem:[%s1 + $0x8] sm:$0xf]
  %v1954 = vld [vmem:[%s1 + $0xc] sm:$0xf]
  %v1955 = vld [vmem:[%s1 + $0x10] sm:$0x3]
  %v1956 = vunpack.c.l.bf16 %v1951
  %v1957 = vunpack.c.l.bf16 %v1952
  %v1958 = vunpack.c.l.bf16 %v1953
  %v1959 = vunpack.c.l.bf16 %v1954
  %v1960 = vunpack.c.l.bf16 %v1955
  %v1966 = vrot.slane %v1956, 4
  %v1967 = vrot.slane %v1957, 4
  %v1968 = vsel %vm541, %v1966, %v1967
  %v1969 = vrot.slane %v1958, 4
  %v1970 = vsel %vm541, %v1967, %v1969
  %v1971 = vrot.slane %v1959, 4
  %v1972 = vsel %vm541, %v1969, %v1971
  %v1973 = vrot.slane %v1960, 4
  %v1974 = vsel %vm541, %v1971, %v1973
  %v1980 = vmul.f32 %v1895, %v1966
  %v1981 = vmul.f32 %v1898, %v1968
  %v1982 = vmul.f32 %v1903, %v1970
  %v1983 = vmul.f32 %v1906, %v1972
  %v1984 = vmul.f32 %v1911, %v1974
  %v1985 = vpack.c.bf16 %v1981, %v1980
  %v1986 = vpack.c.bf16 %v1983, %v1982
  %v1987 = vpack.c.bf16 %v1984, %v1984
  %v1988 = vmul.f32 %v1914, %v1956
  %v1989 = vmul.f32 %v1919, %v1957
  %v1990 = vmul.f32 %v1922, %v1958
  %v1991 = vmul.f32 %v1927, %v1959
  %v1992 = vmul.f32 %v1930, %v1960
  %v1993 = vpack.c.bf16 %v1989, %v1988
  %v1994 = vpack.c.bf16 %v1991, %v1990
  %v1995 = vpack.c.bf16 %v1992, %v1992
  %v1996 = vld [vmem:[%s12] sm:$0xff]
  %v1997 = vld [vmem:[%s12 + $0x8] sm:$0xff]
  %v1998 = vld [vmem:[%s12 + $0x10] sm:$0xff]
  %v1999 = vld [vmem:[%s12 + $0x18] sm:$0xff]
  %v2000 = vld [vmem:[%s12 + $0x20] sm:$0xff]
  %v2001 = vld [vmem:[%s12 + $0x28] sm:$0xff]
  %v2002 = vld [vmem:[%s12 + $0x30] sm:$0xff]
  %v2003 = vld [vmem:[%s12 + $0x38] sm:$0xff]
  %v2004 = vld [vmem:[%s12 + $0x40] sm:$0xff]
  %2005 = vxpose.xlu0.c.b16.start [1/8] %v1948, 128
  %2006 = vxpose.xlu0.c.b16.cont [2/8] 0, 128
  %2007 = vxpose.xlu0.c.b16.cont [3/8] 0, 128
  %2008 = vxpose.xlu0.c.b16.cont [4/8] 0, 128
  %2009 = vxpose.xlu0.c.b16.cont [5/8] 0, 128
  %2010 = vxpose.xlu0.c.b16.cont [6/8] 0, 128
  %2011 = vxpose.xlu0.c.b16.cont [7/8] 0, 128
  %2012 = vxpose.xlu0.c.b16.end [8/8] 0, 128
  %v2013 = vpop.trf.xlu0
  %v2014 = vpop.trf.xlu0
  %v2015 = vpop.trf.xlu0
  %v2016 = vpop.trf.xlu0
  %v2017 = vpop.trf.xlu0
  %v2018 = vpop.trf.xlu0
  %v2019 = vpop.trf.xlu0
  %v2020 = vpop.trf.xlu0
  %v2022 = vrot.slane %v1985, 2
  %vm2023 = vcmask 72704
  %v2025 = vsel %vm2023, %v2013, 0
  %v2028 = vsel %vm2023, %v2014, 0
  %v2031 = vsel %vm2023, %v2015, 0
  %v2034 = vsel %vm2023, %v2016, 0
  %v2037 = vsel %vm2023, %v2017, 0
  %vm2039 = vcmask 1044480
  %v2040 = vsel %vm541, 4294967295, 65535
  %v2041 = vsel %vm2039, %v2040, 0
  %v2043 = vand.u32 %v2022, %v2041
  %2045 = vmatprep.subr.bf16.mxu0 0
  %2046 = vmatpush1.bf16.msra.mxu0 %v2043
  %2047 = vmatprep.subr.bf16.mxu0 0
  %2048 = vmatpush1.bf16.msra.mxu0 0
  %2049 = vmatprep.subr.bf16.mxu0 0
  %2050 = vmatpush1.bf16.msra.mxu0 0
  %2051 = vmatprep.subr.bf16.mxu0 0
  %2052 = vmatpush1.bf16.msra.mxu0 0
  %2053 = vmatprep.subr.bf16.mxu0 0
  %2054 = vmatpush1.bf16.msra.mxu0 0
  %2055 = vmatprep.subr.bf16.mxu0 0
  %2056 = vmatpush1.bf16.msra.mxu0 0
  %2057 = vmatprep.subr.bf16.mxu0 0
  %2058 = vmatpush1.bf16.msra.mxu0 0
  %2059 = vmatprep.subr.bf16.mxu0 0
  %2060 = vmatpush1.bf16.msra.mxu0 0
  %2061 = vmatprep.subr.bf16.mxu0 0
  %2062 = vmatpush1.bf16.msra.mxu0 0
  %2063 = vmatprep.subr.bf16.mxu0 0
  %2064 = vmatpush1.bf16.msra.mxu0 0
  %2065 = vmatprep.subr.bf16.mxu0 0
  %2066 = vmatpush1.bf16.msra.mxu0 0
  %2067 = vmatprep.subr.bf16.mxu0 0
  %2068 = vmatpush1.bf16.msra.mxu0 0
  %2069 = vmatprep.subr.bf16.mxu0 0
  %2070 = vmatpush1.bf16.msra.mxu0 0
  %2071 = vmatprep.subr.bf16.mxu0 0
  %2072 = vmatpush1.bf16.msra.mxu0 0
  %2073 = vmatprep.subr.bf16.mxu0 0
  %2074 = vmatpush1.bf16.msra.mxu0 0
  %2075 = vmatprep.subr.bf16.mxu0 0
  %2076 = vmatpush1.bf16.msra.mxu0 0
  %2077 = vmatprep.mubr.bf16.mxu0 0
  %2078 = vmatmul.mubr.bf16.gmra.mrb[0].mxu0 %v2025
  %v2079 = vpop.f32.mrb[0].mxu0
  %v2080 = vadd.f32 %v1996, %v2079
  %v2081 = vpop.f32.mrb[0].mxu0
  %v2082 = vpop.f32.mrb[0].mxu0
  %v2083 = vadd.f32 %v1997, %v2082
  %v2084 = vpop.f32.mrb[0].mxu0
  %2085 = vmatprep.mubr.bf16.mxu0 0
  %2086 = vmatmul.mubr.bf16.gmra.mrb[0].mxu0 %v2028
  %v2087 = vpop.f32.mrb[0].mxu0
  %v2088 = vadd.f32 %v1998, %v2087
  %v2089 = vpop.f32.mrb[0].mxu0
  %v2090 = vpop.f32.mrb[0].mxu0
  %v2091 = vadd.f32 %v1999, %v2090
  %v2092 = vpop.f32.mrb[0].mxu0
  %2093 = vmatprep.mubr.bf16.mxu0 0
  %2094 = vmatmul.mubr.bf16.gmra.mrb[0].mxu0 %v2031
  %v2095 = vpop.f32.mrb[0].mxu0
  %v2096 = vadd.f32 %v2000, %v2095
  %v2097 = vpop.f32.mrb[0].mxu0
  %v2098 = vpop.f32.mrb[0].mxu0
  %v2099 = vadd.f32 %v2001, %v2098
  %v2100 = vpop.f32.mrb[0].mxu0
  %2101 = vmatprep.mubr.bf16.mxu0 0
  %2102 = vmatmul.mubr.bf16.gmra.mrb[0].mxu0 %v2034
  %v2103 = vpop.f32.mrb[0].mxu0
  %v2104 = vadd.f32 %v2002, %v2103
  %v2105 = vpop.f32.mrb[0].mxu0
  %v2106 = vpop.f32.mrb[0].mxu0
  %v2107 = vadd.f32 %v2003, %v2106
  %v2108 = vpop.f32.mrb[0].mxu0
  %2109 = vmatprep.mubr.bf16.mxu0 0
  %2110 = vmatmul.mubr.bf16.gmra.mrb[0].mxu0 %v2037
  %v2111 = vpop.f32.mrb[0].mxu0
  %v2112 = vadd.f32 %v2004, %v2111
  %v2113 = vpop.f32.mrb[0].mxu0
  %v2114 = vpop.f32.mrb[0].mxu0
  %v2115 = vpop.f32.mrb[0].mxu0
  %2116 = vdwg.mxu0
  %v2117 = vsel %vm525, %v2080, -inf
  %2118 = vmax.xlane.f32.xlu0 %v2117
  %v2119 = vpop.xlane.xlu0 %2118
  %v2120 = vsel %vm525, %v2083, -inf
  %2121 = vmax.xlane.f32.xlu0 %v2120
  %v2122 = vpop.xlane.xlu0 %2121
  %v2123 = vsel %vm525, %v2088, -inf
  %2124 = vmax.xlane.f32.xlu0 %v2123
  %v2125 = vpop.xlane.xlu0 %2124
  %v2126 = vsel %vm525, %v2091, -inf
  %2127 = vmax.xlane.f32.xlu0 %v2126
  %v2128 = vpop.xlane.xlu0 %2127
  %v2129 = vsel %vm525, %v2096, -inf
  %2130 = vmax.xlane.f32.xlu0 %v2129
  %v2131 = vpop.xlane.xlu0 %2130
  %v2132 = vsel %vm525, %v2099, -inf
  %2133 = vmax.xlane.f32.xlu0 %v2132
  %v2134 = vpop.xlane.xlu0 %2133
  %v2135 = vsel %vm525, %v2104, -inf
  %2136 = vmax.xlane.f32.xlu0 %v2135
  %v2137 = vpop.xlane.xlu0 %2136
  %v2138 = vsel %vm525, %v2107, -inf
  %2139 = vmax.xlane.f32.xlu0 %v2138
  %v2140 = vpop.xlane.xlu0 %2139
  %v2141 = vsel %vm525, %v2112, -inf
  %2142 = vmax.xlane.f32.xlu0 %v2141
  %v2143 = vpop.xlane.xlu0 %2142
  %v2144 = vsub.f32 %v2080, %v2119
  %v2145 = vsub.f32 %v2083, %v2122
  %v2146 = vsub.f32 %v2088, %v2125
  %v2147 = vsub.f32 %v2091, %v2128
  %v2148 = vsub.f32 %v2096, %v2131
  %v2149 = vsub.f32 %v2099, %v2134
  %v2150 = vsub.f32 %v2104, %v2137
  %v2151 = vsub.f32 %v2107, %v2140
  %v2152 = vsub.f32 %v2112, %v2143
  %v2153 = vmul.f32 %v2144, 1.442695
  %v2154 = vpow.pop %v2153
  %v2155 = vmul.f32 %v2145, 1.442695
  %v2156 = vpow.pop %v2155
  %v2157 = vmul.f32 %v2146, 1.442695
  %v2158 = vpow.pop %v2157
  %v2159 = vmul.f32 %v2147, 1.442695
  %v2160 = vpow.pop %v2159
  %v2161 = vmul.f32 %v2148, 1.442695
  %v2162 = vpow.pop %v2161
  %v2163 = vmul.f32 %v2149, 1.442695
  %v2164 = vpow.pop %v2163
  %v2165 = vmul.f32 %v2150, 1.442695
  %v2166 = vpow.pop %v2165
  %v2167 = vmul.f32 %v2151, 1.442695
  %v2168 = vpow.pop %v2167
  %v2169 = vmul.f32 %v2152, 1.442695
  %v2170 = vpow.pop %v2169
  %v2171 = vsel %vm525, %v2154, 0.0
  %2172 = vadd.xlane.f32.xlu0 %v2171
  %v2173 = vpop.xlane.xlu0 %2172
  %v2174 = vsel %vm525, %v2156, 0.0
  %2175 = vadd.xlane.f32.xlu0 %v2174
  %v2176 = vpop.xlane.xlu0 %2175
  %v2177 = vsel %vm525, %v2158, 0.0
  %2178 = vadd.xlane.f32.xlu0 %v2177
  %v2179 = vpop.xlane.xlu0 %2178
  %v2180 = vsel %vm525, %v2160, 0.0
  %2181 = vadd.xlane.f32.xlu0 %v2180
  %v2182 = vpop.xlane.xlu0 %2181
  %v2183 = vsel %vm525, %v2162, 0.0
  %2184 = vadd.xlane.f32.xlu0 %v2183
  %v2185 = vpop.xlane.xlu0 %2184
  %v2186 = vsel %vm525, %v2164, 0.0
  %2187 = vadd.xlane.f32.xlu0 %v2186
  %v2188 = vpop.xlane.xlu0 %2187
  %v2189 = vsel %vm525, %v2166, 0.0
  %2190 = vadd.xlane.f32.xlu0 %v2189
  %v2191 = vpop.xlane.xlu0 %2190
  %v2192 = vsel %vm525, %v2168, 0.0
  %2193 = vadd.xlane.f32.xlu0 %v2192
  %v2194 = vpop.xlane.xlu0 %2193
  %v2195 = vsel %vm525, %v2170, 0.0
  %2196 = vadd.xlane.f32.xlu0 %v2195
  %v2197 = vpop.xlane.xlu0 %2196
  %v2198 = vrcp.pop %v2173
  %v2199 = vrcp.pop %v2176
  %v2200 = vrcp.pop %v2179
  %v2201 = vrcp.pop %v2182
  %v2202 = vrcp.pop %v2185
  %v2203 = vrcp.pop %v2188
  %v2204 = vrcp.pop %v2191
  %v2205 = vrcp.pop %v2194
  %v2206 = vrcp.pop %v2197
  %v2207 = vmul.f32 %v2154, %v2198
  %v2208 = vmul.f32 %v2156, %v2199
  %v2209 = vmul.f32 %v2158, %v2200
  %v2210 = vmul.f32 %v2160, %v2201
  %v2211 = vmul.f32 %v2162, %v2202
  %v2212 = vmul.f32 %v2164, %v2203
  %v2213 = vmul.f32 %v2166, %v2204
  %v2214 = vmul.f32 %v2168, %v2205
  %v2215 = vmul.f32 %v2170, %v2206
  %v2216 = vpack.c.bf16 %v2208, %v2207
  %v2217 = vpack.c.bf16 %v2210, %v2209
  %v2218 = vpack.c.bf16 %v2212, %v2211
  %v2219 = vpack.c.bf16 %v2214, %v2213
  %v2220 = vpack.c.bf16 %v2215, %v2215
  %v2222 = vsel %vm525, %v1993, 0
  %v2225 = vsel %vm525, %v2216, 0
  %v2228 = vsel %vm525, %v2217, 0
  %v2231 = vsel %vm525, %v2218, 0
  %v2234 = vsel %vm525, %v2219, 0
  %v2237 = vsel %vm525, %v2220, 0
  %2239 = vmatprep.subr.bf16.mxu0 0
  %2240 = vmatpush1.bf16.xpose.msra.mxu0 %v2225
  %2241 = vmatprep.subr.bf16.mxu0 0
  %2242 = vmatpush1.bf16.xpose.msra.mxu0 %v2228
  %2243 = vmatprep.subr.bf16.mxu0 0
  %2244 = vmatpush1.bf16.xpose.msra.mxu0 %v2231
  %2245 = vmatprep.subr.bf16.mxu0 0
  %2246 = vmatpush1.bf16.xpose.msra.mxu0 %v2234
  %2247 = vmatprep.subr.bf16.mxu0 0
  %2248 = vmatpush1.bf16.xpose.msra.mxu0 %v2237
  %2249 = vmatprep.subr.bf16.mxu0 0
  %2250 = vmatpush1.bf16.xpose.msra.mxu0 0
  %2251 = vmatprep.subr.bf16.mxu0 0
  %2252 = vmatpush1.bf16.xpose.msra.mxu0 0
  %2253 = vmatprep.subr.bf16.mxu0 0
  %2254 = vmatpush1.bf16.xpose.msra.mxu0 0
  %2255 = vmatprep.subr.bf16.mxu0 0
  %2256 = vmatpush1.bf16.xpose.msra.mxu0 0
  %2257 = vmatprep.subr.bf16.mxu0 0
  %2258 = vmatpush1.bf16.xpose.msra.mxu0 0
  %2259 = vmatprep.subr.bf16.mxu0 0
  %2260 = vmatpush1.bf16.xpose.msra.mxu0 0
  %2261 = vmatprep.subr.bf16.mxu0 0
  %2262 = vmatpush1.bf16.xpose.msra.mxu0 0
  %2263 = vmatprep.subr.bf16.mxu0 0
  %2264 = vmatpush1.bf16.xpose.msra.mxu0 0
  %2265 = vmatprep.subr.bf16.mxu0 0
  %2266 = vmatpush1.bf16.xpose.msra.mxu0 0
  %2267 = vmatprep.subr.bf16.mxu0 0
  %2268 = vmatpush1.bf16.xpose.msra.mxu0 0
  %2269 = vmatprep.subr.bf16.mxu0 0
  %2270 = vmatpush1.bf16.xpose.msra.mxu0 0
  %2271 = vmatprep.mubr.bf16.mxu0 0
  %2272 = vmatmul.mubr.bf16.gmra.mrb[0].mxu0 %v2222
  %v2273 = vpop.f32.mrb[0].mxu0
  %v2274 = vadd.f32 0.0, %v2273
  %v2275 = vpop.f32.mrb[0].mxu0
  %v2276 = vpop.f32.mrb[0].mxu0
  %v2277 = vadd.f32 0.0, %v2276
  %v2278 = vpop.f32.mrb[0].mxu0
  %2279 = vdwg.mxu0
  %v2280 = vld [vmem:[%s11] sm:$0xf]
  %v2281 = vld [vmem:[%s11 + $0x4] sm:$0x1]
  %v2282 = vpack.c.bf16 %v2277, %v2274
  %vm2283 = vsmask.f32 3328
  %v2285 = vshrl.u32 %v1948, 16
  %v2287 = vrot.slane %v2285, 4
  %v2288 = vshll.u32 %v1948, 16
  %v2290 = vrot.slane %v2288, 5
  %v2291 = vor.u32 %v2287, %v2290
  %v2293 = vshrl.u32 %v1949, 16
  %v2295 = vrot.slane %v2293, 4
  %v2296 = vshll.u32 %v1949, 16
  %v2298 = vrot.slane %v2296, 5
  %v2299 = vor.u32 %v2295, %v2298
  %v2300 = vsel %vm2283, %v2291, %v2299
  %2302 = vxpose.xlu0.c.b16.start [1/8] %v2300, 128
  %2303 = vxpose.xlu0.c.b16.cont [2/8] 0, 128
  %2304 = vxpose.xlu0.c.b16.cont [3/8] 0, 128
  %2305 = vxpose.xlu0.c.b16.cont [4/8] 0, 128
  %2306 = vxpose.xlu0.c.b16.cont [5/8] 0, 128
  %2307 = vxpose.xlu0.c.b16.cont [6/8] 0, 128
  %2308 = vxpose.xlu0.c.b16.cont [7/8] 0, 128
  %2309 = vxpose.xlu0.c.b16.end [8/8] 0, 128
  %v2310 = vpop.trf.xlu0
  %v2311 = vpop.trf.xlu0
  %v2312 = vpop.trf.xlu0
  %v2313 = vpop.trf.xlu0
  %v2314 = vpop.trf.xlu0
  %v2315 = vpop.trf.xlu0
  %v2316 = vpop.trf.xlu0
  %v2317 = vpop.trf.xlu0
  %vm2318 = vsmask.f32 1280
  %v2320 = vshrl.u32 %v1985, 16
  %v2322 = vrot.slane %v2320, 6
  %v2323 = vshll.u32 %v1985, 16
  %v2325 = vrot.slane %v2323, 7
  %v2326 = vor.u32 %v2322, %v2325
  %v2328 = vshrl.u32 %v1986, 16
  %v2330 = vrot.slane %v2328, 6
  %v2331 = vshll.u32 %v1986, 16
  %v2333 = vrot.slane %v2331, 7
  %v2334 = vor.u32 %v2330, %v2333
  %v2335 = vsel %vm2318, %v2326, %v2334
  %v2337 = vsel %vm2023, %v2310, 0
  %v2340 = vsel %vm2023, %v2311, 0
  %v2343 = vsel %vm2023, %v2312, 0
  %v2346 = vsel %vm2023, %v2313, 0
  %v2349 = vsel %vm2023, %v2314, 0
  %v2352 = vand.u32 %v2335, %v2041
  %2354 = vmatprep.subr.bf16.mxu0 0
  %2355 = vmatpush1.bf16.msra.mxu0 %v2352
  %2356 = vmatprep.subr.bf16.mxu0 0
  %2357 = vmatpush1.bf16.msra.mxu0 0
  %2358 = vmatprep.subr.bf16.mxu0 0
  %2359 = vmatpush1.bf16.msra.mxu0 0
  %2360 = vmatprep.subr.bf16.mxu0 0
  %2361 = vmatpush1.bf16.msra.mxu0 0
  %2362 = vmatprep.subr.bf16.mxu0 0
  %2363 = vmatpush1.bf16.msra.mxu0 0
  %2364 = vmatprep.subr.bf16.mxu0 0
  %2365 = vmatpush1.bf16.msra.mxu0 0
  %2366 = vmatprep.subr.bf16.mxu0 0
  %2367 = vmatpush1.bf16.msra.mxu0 0
  %2368 = vmatprep.subr.bf16.mxu0 0
  %2369 = vmatpush1.bf16.msra.mxu0 0
  %2370 = vmatprep.subr.bf16.mxu0 0
  %2371 = vmatpush1.bf16.msra.mxu0 0
  %2372 = vmatprep.subr.bf16.mxu0 0
  %2373 = vmatpush1.bf16.msra.mxu0 0
  %2374 = vmatprep.subr.bf16.mxu0 0
  %2375 = vmatpush1.bf16.msra.mxu0 0
  %2376 = vmatprep.subr.bf16.mxu0 0
  %2377 = vmatpush1.bf16.msra.mxu0 0
  %2378 = vmatprep.subr.bf16.mxu0 0
  %2379 = vmatpush1.bf16.msra.mxu0 0
  %2380 = vmatprep.subr.bf16.mxu0 0
  %2381 = vmatpush1.bf16.msra.mxu0 0
  %2382 = vmatprep.subr.bf16.mxu0 0
  %2383 = vmatpush1.bf16.msra.mxu0 0
  %2384 = vmatprep.subr.bf16.mxu0 0
  %2385 = vmatpush1.bf16.msra.mxu0 0
  %2386 = vmatprep.mubr.bf16.mxu0 0
  %2387 = vmatmul.mubr.bf16.gmra.mrb[0].mxu0 %v2337
  %v2388 = vpop.f32.mrb[0].mxu0
  %v2389 = vadd.f32 %v1996, %v2388
  %v2390 = vpop.f32.mrb[0].mxu0
  %v2391 = vpop.f32.mrb[0].mxu0
  %v2392 = vadd.f32 %v1997, %v2391
  %v2393 = vpop.f32.mrb[0].mxu0
  %2394 = vmatprep.mubr.bf16.mxu0 0
  %2395 = vmatmul.mubr.bf16.gmra.mrb[0].mxu0 %v2340
  %v2396 = vpop.f32.mrb[0].mxu0
  %v2397 = vadd.f32 %v1998, %v2396
  %v2398 = vpop.f32.mrb[0].mxu0
  %v2399 = vpop.f32.mrb[0].mxu0
  %v2400 = vadd.f32 %v1999, %v2399
  %v2401 = vpop.f32.mrb[0].mxu0
  %2402 = vmatprep.mubr.bf16.mxu0 0
  %2403 = vmatmul.mubr.bf16.gmra.mrb[0].mxu0 %v2343
  %v2404 = vpop.f32.mrb[0].mxu0
  %v2405 = vadd.f32 %v2000, %v2404
  %v2406 = vpop.f32.mrb[0].mxu0
  %v2407 = vpop.f32.mrb[0].mxu0
  %v2408 = vadd.f32 %v2001, %v2407
  %v2409 = vpop.f32.mrb[0].mxu0
  %2410 = vmatprep.mubr.bf16.mxu0 0
  %2411 = vmatmul.mubr.bf16.gmra.mrb[0].mxu0 %v2346
  %v2412 = vpop.f32.mrb[0].mxu0
  %v2413 = vadd.f32 %v2002, %v2412
  %v2414 = vpop.f32.mrb[0].mxu0
  %v2415 = vpop.f32.mrb[0].mxu0
  %v2416 = vadd.f32 %v2003, %v2415
  %v2417 = vpop.f32.mrb[0].mxu0
  %2418 = vmatprep.mubr.bf16.mxu0 0
  %2419 = vmatmul.mubr.bf16.gmra.mrb[0].mxu0 %v2349
  %v2420 = vpop.f32.mrb[0].mxu0
  %v2421 = vadd.f32 %v2004, %v2420
  %v2422 = vpop.f32.mrb[0].mxu0
  %v2423 = vpop.f32.mrb[0].mxu0
  %v2424 = vpop.f32.mrb[0].mxu0
  %2425 = vdwg.mxu0
  %v2426 = vsel %vm525, %v2389, -inf
  %2427 = vmax.xlane.f32.xlu0 %v2426
  %v2428 = vpop.xlane.xlu0 %2427
  %v2429 = vsel %vm525, %v2392, -inf
  %2430 = vmax.xlane.f32.xlu0 %v2429
  %v2431 = vpop.xlane.xlu0 %2430
  %v2432 = vsel %vm525, %v2397, -inf
  %2433 = vmax.xlane.f32.xlu0 %v2432
  %v2434 = vpop.xlane.xlu0 %2433
  %v2435 = vsel %vm525, %v2400, -inf
  %2436 = vmax.xlane.f32.xlu0 %v2435
  %v2437 = vpop.xlane.xlu0 %2436
  %v2438 = vsel %vm525, %v2405, -inf
  %2439 = vmax.xlane.f32.xlu0 %v2438
  %v2440 = vpop.xlane.xlu0 %2439
  %v2441 = vsel %vm525, %v2408, -inf
  %2442 = vmax.xlane.f32.xlu0 %v2441
  %v2443 = vpop.xlane.xlu0 %2442
  %v2444 = vsel %vm525, %v2413, -inf
  %2445 = vmax.xlane.f32.xlu0 %v2444
  %v2446 = vpop.xlane.xlu0 %2445
  %v2447 = vsel %vm525, %v2416, -inf
  %2448 = vmax.xlane.f32.xlu0 %v2447
  %v2449 = vpop.xlane.xlu0 %2448
  %v2450 = vsel %vm525, %v2421, -inf
  %2451 = vmax.xlane.f32.xlu0 %v2450
  %v2452 = vpop.xlane.xlu0 %2451
  %v2453 = vsub.f32 %v2389, %v2428
  %v2454 = vsub.f32 %v2392, %v2431
  %v2455 = vsub.f32 %v2397, %v2434
  %v2456 = vsub.f32 %v2400, %v2437
  %v2457 = vsub.f32 %v2405, %v2440
  %v2458 = vsub.f32 %v2408, %v2443
  %v2459 = vsub.f32 %v2413, %v2446
  %v2460 = vsub.f32 %v2416, %v2449
  %v2461 = vsub.f32 %v2421, %v2452
  %v2462 = vmul.f32 %v2453, 1.442695
  %v2463 = vpow.pop %v2462
  %v2464 = vmul.f32 %v2454, 1.442695
  %v2465 = vpow.pop %v2464
  %v2466 = vmul.f32 %v2455, 1.442695
  %v2467 = vpow.pop %v2466
  %v2468 = vmul.f32 %v2456, 1.442695
  %v2469 = vpow.pop %v2468
  %v2470 = vmul.f32 %v2457, 1.442695
  %v2471 = vpow.pop %v2470
  %v2472 = vmul.f32 %v2458, 1.442695
  %v2473 = vpow.pop %v2472
  %v2474 = vmul.f32 %v2459, 1.442695
  %v2475 = vpow.pop %v2474
  %v2476 = vmul.f32 %v2460, 1.442695
  %v2477 = vpow.pop %v2476
  %v2478 = vmul.f32 %v2461, 1.442695
  %v2479 = vpow.pop %v2478
  %v2480 = vsel %vm525, %v2463, 0.0
  %2481 = vadd.xlane.f32.xlu0 %v2480
  %v2482 = vpop.xlane.xlu0 %2481
  %v2483 = vsel %vm525, %v2465, 0.0
  %2484 = vadd.xlane.f32.xlu0 %v2483
  %v2485 = vpop.xlane.xlu0 %2484
  %v2486 = vsel %vm525, %v2467, 0.0
  %2487 = vadd.xlane.f32.xlu0 %v2486
  %v2488 = vpop.xlane.xlu0 %2487
  %v2489 = vsel %vm525, %v2469, 0.0
  %2490 = vadd.xlane.f32.xlu0 %v2489
  %v2491 = vpop.xlane.xlu0 %2490
  %v2492 = vsel %vm525, %v2471, 0.0
  %2493 = vadd.xlane.f32.xlu0 %v2492
  %v2494 = vpop.xlane.xlu0 %2493
  %v2495 = vsel %vm525, %v2473, 0.0
  %2496 = vadd.xlane.f32.xlu0 %v2495
  %v2497 = vpop.xlane.xlu0 %2496
  %v2498 = vsel %vm525, %v2475, 0.0
  %2499 = vadd.xlane.f32.xlu0 %v2498
  %v2500 = vpop.xlane.xlu0 %2499
  %v2501 = vsel %vm525, %v2477, 0.0
  %2502 = vadd.xlane.f32.xlu0 %v2501
  %v2503 = vpop.xlane.xlu0 %2502
  %v2504 = vsel %vm525, %v2479, 0.0
  %2505 = vadd.xlane.f32.xlu0 %v2504
  %v2506 = vpop.xlane.xlu0 %2505
  %v2507 = vrcp.pop %v2482
  %v2508 = vrcp.pop %v2485
  %v2509 = vrcp.pop %v2488
  %v2510 = vrcp.pop %v2491
  %v2511 = vrcp.pop %v2494
  %v2512 = vrcp.pop %v2497
  %v2513 = vrcp.pop %v2500
  %v2514 = vrcp.pop %v2503
  %v2515 = vrcp.pop %v2506
  %v2516 = vmul.f32 %v2463, %v2507
  %v2517 = vmul.f32 %v2465, %v2508
  %v2518 = vmul.f32 %v2467, %v2509
  %v2519 = vmul.f32 %v2469, %v2510
  %v2520 = vmul.f32 %v2471, %v2511
  %v2521 = vmul.f32 %v2473, %v2512
  %v2522 = vmul.f32 %v2475, %v2513
  %v2523 = vmul.f32 %v2477, %v2514
  %v2524 = vmul.f32 %v2479, %v2515
  %v2525 = vpack.c.bf16 %v2517, %v2516
  %v2526 = vpack.c.bf16 %v2519, %v2518
  %v2527 = vpack.c.bf16 %v2521, %v2520
  %v2528 = vpack.c.bf16 %v2523, %v2522
  %v2529 = vpack.c.bf16 %v2524, %v2524
  %v2530 = vshrl.u32 %v1993, 16
  %v2532 = vrot.slane %v2530, 4
  %v2533 = vshll.u32 %v1993, 16
  %v2535 = vrot.slane %v2533, 5
  %v2536 = vor.u32 %v2532, %v2535
  %v2538 = vshrl.u32 %v1994, 16
  %v2540 = vrot.slane %v2538, 4
  %v2541 = vshll.u32 %v1994, 16
  %v2543 = vrot.slane %v2541, 5
  %v2544 = vor.u32 %v2540, %v2543
  %v2545 = vsel %vm2283, %v2536, %v2544
  %v2547 = vsel %vm525, %v2545, 0
  %v2550 = vsel %vm525, %v2525, 0
  %v2553 = vsel %vm525, %v2526, 0
  %v2556 = vsel %vm525, %v2527, 0
  %v2559 = vsel %vm525, %v2528, 0
  %v2562 = vsel %vm525, %v2529, 0
  %2564 = vmatprep.subr.bf16.mxu0 0
  %2565 = vmatpush1.bf16.xpose.msra.mxu0 %v2550
  %2566 = vmatprep.subr.bf16.mxu0 0
  %2567 = vmatpush1.bf16.xpose.msra.mxu0 %v2553
  %2568 = vmatprep.subr.bf16.mxu0 0
  %2569 = vmatpush1.bf16.xpose.msra.mxu0 %v2556
  %2570 = vmatprep.subr.bf16.mxu0 0
  %2571 = vmatpush1.bf16.xpose.msra.mxu0 %v2559
  %2572 = vmatprep.subr.bf16.mxu0 0
  %2573 = vmatpush1.bf16.xpose.msra.mxu0 %v2562
  %2574 = vmatprep.subr.bf16.mxu0 0
  %2575 = vmatpush1.bf16.xpose.msra.mxu0 0
  %2576 = vmatprep.subr.bf16.mxu0 0
  %2577 = vmatpush1.bf16.xpose.msra.mxu0 0
  %2578 = vmatprep.subr.bf16.mxu0 0
  %2579 = vmatpush1.bf16.xpose.msra.mxu0 0
  %2580 = vmatprep.subr.bf16.mxu0 0
  %2581 = vmatpush1.bf16.xpose.msra.mxu0 0
  %2582 = vmatprep.subr.bf16.mxu0 0
  %2583 = vmatpush1.bf16.xpose.msra.mxu0 0
  %2584 = vmatprep.subr.bf16.mxu0 0
  %2585 = vmatpush1.bf16.xpose.msra.mxu0 0
  %2586 = vmatprep.subr.bf16.mxu0 0
  %2587 = vmatpush1.bf16.xpose.msra.mxu0 0
  %2588 = vmatprep.subr.bf16.mxu0 0
  %2589 = vmatpush1.bf16.xpose.msra.mxu0 0
  %2590 = vmatprep.subr.bf16.mxu0 0
  %2591 = vmatpush1.bf16.xpose.msra.mxu0 0
  %2592 = vmatprep.subr.bf16.mxu0 0
  %2593 = vmatpush1.bf16.xpose.msra.mxu0 0
  %2594 = vmatprep.subr.bf16.mxu0 0
  %2595 = vmatpush1.bf16.xpose.msra.mxu0 0
  %2596 = vmatprep.mubr.bf16.mxu0 0
  %2597 = vmatmul.mubr.bf16.gmra.mrb[0].mxu0 %v2547
  %v2598 = vpop.f32.mrb[0].mxu0
  %v2599 = vadd.f32 0.0, %v2598
  %v2600 = vpop.f32.mrb[0].mxu0
  %v2601 = vpop.f32.mrb[0].mxu0
  %v2602 = vadd.f32 0.0, %v2601
  %v2603 = vpop.f32.mrb[0].mxu0
  %2604 = vdwg.mxu0
  %v2605 = vld [vmem:[%s11 + $0x4] sm:$0xf]
  %v2606 = vld [vmem:[%s11 + $0x8] sm:$0x1]
  %v2607 = vpack.c.bf16 %v2602, %v2599
  %v2610 = vunpack.c.l.b16 %v2605
  %v2611 = vunpack.c.l.b16 %v2606
  %v2612 = vpack.c.b16 %v2611, %v2610
  %v2614 = vshrl.u32 %v2612, 16
  %v2616 = vshll.u32 %v2612, 16
  %v2618 = vrot.slane %v2616, 1
  %v2619 = vor.u32 %v2614, %v2618
  %2621 = vxpose.xlu0.c.b16.start [1/8] %v2619, 128
  %2622 = vxpose.xlu0.c.b16.cont [2/8] 0, 128
  %2623 = vxpose.xlu0.c.b16.cont [3/8] 0, 128
  %2624 = vxpose.xlu0.c.b16.cont [4/8] 0, 128
  %2625 = vxpose.xlu0.c.b16.cont [5/8] 0, 128
  %2626 = vxpose.xlu0.c.b16.cont [6/8] 0, 128
  %2627 = vxpose.xlu0.c.b16.cont [7/8] 0, 128
  %2628 = vxpose.xlu0.c.b16.end [8/8] 0, 128
  %v2629 = vpop.trf.xlu0
  %v2630 = vpop.trf.xlu0
  %v2631 = vpop.trf.xlu0
  %v2632 = vpop.trf.xlu0
  %v2633 = vpop.trf.xlu0
  %v2634 = vpop.trf.xlu0
  %v2635 = vpop.trf.xlu0
  %v2636 = vpop.trf.xlu0
  %v2638 = vsel %vm2023, %v2629, 0
  %v2641 = vsel %vm2023, %v2630, 0
  %v2644 = vsel %vm2023, %v2631, 0
  %v2647 = vand.u32 %v2607, %v2041
  %2649 = vmatprep.subr.bf16.mxu0 0
  %2650 = vmatpush1.bf16.msra.mxu0 %v2647
  %2651 = vmatprep.subr.bf16.mxu0 0
  %2652 = vmatpush1.bf16.msra.mxu0 0
  %2653 = vmatprep.subr.bf16.mxu0 0
  %2654 = vmatpush1.bf16.msra.mxu0 0
  %2655 = vmatprep.subr.bf16.mxu0 0
  %2656 = vmatpush1.bf16.msra.mxu0 0
  %2657 = vmatprep.subr.bf16.mxu0 0
  %2658 = vmatpush1.bf16.msra.mxu0 0
  %2659 = vmatprep.subr.bf16.mxu0 0
  %2660 = vmatpush1.bf16.msra.mxu0 0
  %2661 = vmatprep.subr.bf16.mxu0 0
  %2662 = vmatpush1.bf16.msra.mxu0 0
  %2663 = vmatprep.subr.bf16.mxu0 0
  %2664 = vmatpush1.bf16.msra.mxu0 0
  %2665 = vmatprep.subr.bf16.mxu0 0
  %2666 = vmatpush1.bf16.msra.mxu0 0
  %2667 = vmatprep.subr.bf16.mxu0 0
  %2668 = vmatpush1.bf16.msra.mxu0 0
  %2669 = vmatprep.subr.bf16.mxu0 0
  %2670 = vmatpush1.bf16.msra.mxu0 0
  %2671 = vmatprep.subr.bf16.mxu0 0
  %2672 = vmatpush1.bf16.msra.mxu0 0
  %2673 = vmatprep.subr.bf16.mxu0 0
  %2674 = vmatpush1.bf16.msra.mxu0 0
  %2675 = vmatprep.subr.bf16.mxu0 0
  %2676 = vmatpush1.bf16.msra.mxu0 0
  %2677 = vmatprep.subr.bf16.mxu0 0
  %2678 = vmatpush1.bf16.msra.mxu0 0
  %2679 = vmatprep.subr.bf16.mxu0 0
  %2680 = vmatpush1.bf16.msra.mxu0 0
  %2681 = vmatprep.mubr.bf16.mxu0 0
  %2682 = vmatmul.mubr.bf16.gmra.mrb[0].mxu0 %v2638
  %v2683 = vpop.f32.mrb[0].mxu0
  %v2684 = vadd.f32 0.0, %v2683
  %v2685 = vpop.f32.mrb[0].mxu0
  %v2686 = vpop.f32.mrb[0].mxu0
  %v2687 = vadd.f32 0.0, %v2686
  %v2688 = vpop.f32.mrb[0].mxu0
  %2689 = vmatprep.mubr.bf16.mxu0 0
  %2690 = vmatmul.mubr.bf16.gmra.mrb[0].mxu0 %v2641
  %v2691 = vpop.f32.mrb[0].mxu0
  %v2692 = vadd.f32 0.0, %v2691
  %v2693 = vpop.f32.mrb[0].mxu0
  %v2694 = vpop.f32.mrb[0].mxu0
  %v2695 = vadd.f32 0.0, %v2694
  %v2696 = vpop.f32.mrb[0].mxu0
  %2697 = vmatprep.mubr.bf16.mxu0 0
  %2698 = vmatmul.mubr.bf16.gmra.mrb[0].mxu0 %v2644
  %v2699 = vpop.f32.mrb[0].mxu0
  %v2700 = vadd.f32 0.0, %v2699
  %v2701 = vpop.f32.mrb[0].mxu0
  %v2702 = vpop.f32.mrb[0].mxu0
  %v2703 = vpop.f32.mrb[0].mxu0
  %2704 = vdwg.mxu0
  %v2707 = vunpack.c.l.b16 %v2280
  %v2708 = vunpack.c.l.b16 %v2281
  %v2709 = vpack.c.b16 %v2708, %v2707
  %2711 = vxpose.xlu0.c.b16.start [1/8] %v2709, 128
  %2712 = vxpose.xlu0.c.b16.cont [2/8] 0, 128
  %2713 = vxpose.xlu0.c.b16.cont [3/8] 0, 128
  %2714 = vxpose.xlu0.c.b16.cont [4/8] 0, 128
  %2715 = vxpose.xlu0.c.b16.cont [5/8] 0, 128
  %2716 = vxpose.xlu0.c.b16.cont [6/8] 0, 128
  %2717 = vxpose.xlu0.c.b16.cont [7/8] 0, 128
  %2718 = vxpose.xlu0.c.b16.end [8/8] 0, 128
  %v2719 = vpop.trf.xlu0
  %v2720 = vpop.trf.xlu0
  %v2721 = vpop.trf.xlu0
  %v2722 = vpop.trf.xlu0
  %v2723 = vpop.trf.xlu0
  %v2724 = vpop.trf.xlu0
  %v2725 = vpop.trf.xlu0
  %v2726 = vpop.trf.xlu0
  %v2728 = vsel %vm2023, %v2719, 0
  %v2731 = vsel %vm2023, %v2720, 0
  %v2734 = vsel %vm2023, %v2721, 0
  %v2737 = vand.u32 %v2282, %v2041
  %2739 = vmatprep.subr.bf16.mxu0 0
  %2740 = vmatpush1.bf16.msra.mxu0 %v2737
  %2741 = vmatprep.subr.bf16.mxu0 0
  %2742 = vmatpush1.bf16.msra.mxu0 0
  %2743 = vmatprep.subr.bf16.mxu0 0
  %2744 = vmatpush1.bf16.msra.mxu0 0
  %2745 = vmatprep.subr.bf16.mxu0 0
  %2746 = vmatpush1.bf16.msra.mxu0 0
  %2747 = vmatprep.subr.bf16.mxu0 0
  %2748 = vmatpush1.bf16.msra.mxu0 0
  %2749 = vmatprep.subr.bf16.mxu0 0
  %2750 = vmatpush1.bf16.msra.mxu0 0
  %2751 = vmatprep.subr.bf16.mxu0 0
  %2752 = vmatpush1.bf16.msra.mxu0 0
  %2753 = vmatprep.subr.bf16.mxu0 0
  %2754 = vmatpush1.bf16.msra.mxu0 0
  %2755 = vmatprep.subr.bf16.mxu0 0
  %2756 = vmatpush1.bf16.msra.mxu0 0
  %2757 = vmatprep.subr.bf16.mxu0 0
  %2758 = vmatpush1.bf16.msra.mxu0 0
  %2759 = vmatprep.subr.bf16.mxu0 0
  %2760 = vmatpush1.bf16.msra.mxu0 0
  %2761 = vmatprep.subr.bf16.mxu0 0
  %2762 = vmatpush1.bf16.msra.mxu0 0
  %2763 = vmatprep.subr.bf16.mxu0 0
  %2764 = vmatpush1.bf16.msra.mxu0 0
  %2765 = vmatprep.subr.bf16.mxu0 0
  %2766 = vmatpush1.bf16.msra.mxu0 0
  %2767 = vmatprep.subr.bf16.mxu0 0
  %2768 = vmatpush1.bf16.msra.mxu0 0
  %2769 = vmatprep.subr.bf16.mxu0 0
  %2770 = vmatpush1.bf16.msra.mxu0 0
  %2771 = vmatprep.mubr.bf16.mxu0 0
  %2772 = vmatmul.mubr.bf16.gmra.mrb[0].mxu0 %v2728
  %v2773 = vpop.f32.mrb[0].mxu0
  %v2774 = vadd.f32 %v2684, %v2773
  %v2775 = vpop.f32.mrb[0].mxu0
  %v2776 = vpop.f32.mrb[0].mxu0
  %v2777 = vadd.f32 %v2687, %v2776
  %v2778 = vpop.f32.mrb[0].mxu0
  %2779 = vmatprep.mubr.bf16.mxu0 0
  %2780 = vmatmul.mubr.bf16.gmra.mrb[0].mxu0 %v2731
  %v2781 = vpop.f32.mrb[0].mxu0
  %v2782 = vadd.f32 %v2692, %v2781
  %v2783 = vpop.f32.mrb[0].mxu0
  %v2784 = vpop.f32.mrb[0].mxu0
  %v2785 = vadd.f32 %v2695, %v2784
  %v2786 = vpop.f32.mrb[0].mxu0
  %2787 = vmatprep.mubr.bf16.mxu0 0
  %2788 = vmatmul.mubr.bf16.gmra.mrb[0].mxu0 %v2734
  %v2789 = vpop.f32.mrb[0].mxu0
  %v2790 = vadd.f32 %v2700, %v2789
  %v2791 = vpop.f32.mrb[0].mxu0
  %v2792 = vpop.f32.mrb[0].mxu0
  %v2793 = vpop.f32.mrb[0].mxu0
  %2794 = vdwg.mxu0
  %v2796 = vrot.slane %v1949, 1
  %2798 = vxpose.xlu0.c.b16.start [1/8] %v2796, 128
  %2799 = vxpose.xlu0.c.b16.cont [2/8] 0, 128
  %2800 = vxpose.xlu0.c.b16.cont [3/8] 0, 128
  %2801 = vxpose.xlu0.c.b16.cont [4/8] 0, 128
  %2802 = vxpose.xlu0.c.b16.cont [5/8] 0, 128
  %2803 = vxpose.xlu0.c.b16.cont [6/8] 0, 128
  %2804 = vxpose.xlu0.c.b16.cont [7/8] 0, 128
  %2805 = vxpose.xlu0.c.b16.end [8/8] 0, 128
  %v2806 = vpop.trf.xlu0
  %v2807 = vpop.trf.xlu0
  %v2808 = vpop.trf.xlu0
  %v2809 = vpop.trf.xlu0
  %v2810 = vpop.trf.xlu0
  %v2811 = vpop.trf.xlu0
  %v2812 = vpop.trf.xlu0
  %v2813 = vpop.trf.xlu0
  %v2815 = vrot.slane %v1986, 3
  %v2817 = vsel %vm2023, %v2806, 0
  %v2820 = vsel %vm2023, %v2807, 0
  %v2823 = vsel %vm2023, %v2808, 0
  %v2826 = vsel %vm2023, %v2809, 0
  %v2829 = vsel %vm2023, %v2810, 0
  %v2832 = vand.u32 %v2815, %v2041
  %2834 = vmatprep.subr.bf16.mxu0 0
  %2835 = vmatpush1.bf16.msra.mxu0 %v2832
  %2836 = vmatprep.subr.bf16.mxu0 0
  %2837 = vmatpush1.bf16.msra.mxu0 0
  %2838 = vmatprep.subr.bf16.mxu0 0
  %2839 = vmatpush1.bf16.msra.mxu0 0
  %2840 = vmatprep.subr.bf16.mxu0 0
  %2841 = vmatpush1.bf16.msra.mxu0 0
  %2842 = vmatprep.subr.bf16.mxu0 0
  %2843 = vmatpush1.bf16.msra.mxu0 0
  %2844 = vmatprep.subr.bf16.mxu0 0
  %2845 = vmatpush1.bf16.msra.mxu0 0
  %2846 = vmatprep.subr.bf16.mxu0 0
  %2847 = vmatpush1.bf16.msra.mxu0 0
  %2848 = vmatprep.subr.bf16.mxu0 0
  %2849 = vmatpush1.bf16.msra.mxu0 0
  %2850 = vmatprep.subr.bf16.mxu0 0
  %2851 = vmatpush1.bf16.msra.mxu0 0
  %2852 = vmatprep.subr.bf16.mxu0 0
  %2853 = vmatpush1.bf16.msra.mxu0 0
  %2854 = vmatprep.subr.bf16.mxu0 0
  %2855 = vmatpush1.bf16.msra.mxu0 0
  %2856 = vmatprep.subr.bf16.mxu0 0
  %2857 = vmatpush1.bf16.msra.mxu0 0
  %2858 = vmatprep.subr.bf16.mxu0 0
  %2859 = vmatpush1.bf16.msra.mxu0 0
  %2860 = vmatprep.subr.bf16.mxu0 0
  %2861 = vmatpush1.bf16.msra.mxu0 0
  %2862 = vmatprep.subr.bf16.mxu0 0
  %2863 = vmatpush1.bf16.msra.mxu0 0
  %2864 = vmatprep.subr.bf16.mxu0 0
  %2865 = vmatpush1.bf16.msra.mxu0 0
  %2866 = vmatprep.mubr.bf16.mxu0 0
  %2867 = vmatmul.mubr.bf16.gmra.mrb[0].mxu0 %v2817
  %v2868 = vpop.f32.mrb[0].mxu0
  %v2869 = vadd.f32 %v1996, %v2868
  %v2870 = vpop.f32.mrb[0].mxu0
  %v2871 = vpop.f32.mrb[0].mxu0
  %v2872 = vadd.f32 %v1997, %v2871
  %v2873 = vpop.f32.mrb[0].mxu0
  %2874 = vmatprep.mubr.bf16.mxu0 0
  %2875 = vmatmul.mubr.bf16.gmra.mrb[0].mxu0 %v2820
  %v2876 = vpop.f32.mrb[0].mxu0
  %v2877 = vadd.f32 %v1998, %v2876
  %v2878 = vpop.f32.mrb[0].mxu0
  %v2879 = vpop.f32.mrb[0].mxu0
  %v2880 = vadd.f32 %v1999, %v2879
  %v2881 = vpop.f32.mrb[0].mxu0
  %2882 = vmatprep.mubr.bf16.mxu0 0
  %2883 = vmatmul.mubr.bf16.gmra.mrb[0].mxu0 %v2823
  %v2884 = vpop.f32.mrb[0].mxu0
  %v2885 = vadd.f32 %v2000, %v2884
  %v2886 = vpop.f32.mrb[0].mxu0
  %v2887 = vpop.f32.mrb[0].mxu0
  %v2888 = vadd.f32 %v2001, %v2887
  %v2889 = vpop.f32.mrb[0].mxu0
  %2890 = vmatprep.mubr.bf16.mxu0 0
  %2891 = vmatmul.mubr.bf16.gmra.mrb[0].mxu0 %v2826
  %v2892 = vpop.f32.mrb[0].mxu0
  %v2893 = vadd.f32 %v2002, %v2892
  %v2894 = vpop.f32.mrb[0].mxu0
  %v2895 = vpop.f32.mrb[0].mxu0
  %v2896 = vadd.f32 %v2003, %v2895
  %v2897 = vpop.f32.mrb[0].mxu0
  %2898 = vmatprep.mubr.bf16.mxu0 0
  %2899 = vmatmul.mubr.bf16.gmra.mrb[0].mxu0 %v2829
  %v2900 = vpop.f32.mrb[0].mxu0
  %v2901 = vadd.f32 %v2004, %v2900
  %v2902 = vpop.f32.mrb[0].mxu0
  %v2903 = vpop.f32.mrb[0].mxu0
  %v2904 = vpop.f32.mrb[0].mxu0
  %2905 = vdwg.mxu0
  %v2906 = vsel %vm525, %v2869, -inf
  %2907 = vmax.xlane.f32.xlu0 %v2906
  %v2908 = vpop.xlane.xlu0 %2907
  %v2909 = vsel %vm525, %v2872, -inf
  %2910 = vmax.xlane.f32.xlu0 %v2909
  %v2911 = vpop.xlane.xlu0 %2910
  %v2912 = vsel %vm525, %v2877, -inf
  %2913 = vmax.xlane.f32.xlu0 %v2912
  %v2914 = vpop.xlane.xlu0 %2913
  %v2915 = vsel %vm525, %v2880, -inf
  %2916 = vmax.xlane.f32.xlu0 %v2915
  %v2917 = vpop.xlane.xlu0 %2916
  %v2918 = vsel %vm525, %v2885, -inf
  %2919 = vmax.xlane.f32.xlu0 %v2918
  %v2920 = vpop.xlane.xlu0 %2919
  %v2921 = vsel %vm525, %v2888, -inf
  %2922 = vmax.xlane.f32.xlu0 %v2921
  %v2923 = vpop.xlane.xlu0 %2922
  %v2924 = vsel %vm525, %v2893, -inf
  %2925 = vmax.xlane.f32.xlu0 %v2924
  %v2926 = vpop.xlane.xlu0 %2925
  %v2927 = vsel %vm525, %v2896, -inf
  %2928 = vmax.xlane.f32.xlu0 %v2927
  %v2929 = vpop.xlane.xlu0 %2928
  %v2930 = vsel %vm525, %v2901, -inf
  %2931 = vmax.xlane.f32.xlu0 %v2930
  %v2932 = vpop.xlane.xlu0 %2931
  %v2933 = vsub.f32 %v2869, %v2908
  %v2934 = vsub.f32 %v2872, %v2911
  %v2935 = vsub.f32 %v2877, %v2914
  %v2936 = vsub.f32 %v2880, %v2917
  %v2937 = vsub.f32 %v2885, %v2920
  %v2938 = vsub.f32 %v2888, %v2923
  %v2939 = vsub.f32 %v2893, %v2926
  %v2940 = vsub.f32 %v2896, %v2929
  %v2941 = vsub.f32 %v2901, %v2932
  %v2942 = vmul.f32 %v2933, 1.442695
  %v2943 = vpow.pop %v2942
  %v2944 = vmul.f32 %v2934, 1.442695
  %v2945 = vpow.pop %v2944
  %v2946 = vmul.f32 %v2935, 1.442695
  %v2947 = vpow.pop %v2946
  %v2948 = vmul.f32 %v2936, 1.442695
  %v2949 = vpow.pop %v2948
  %v2950 = vmul.f32 %v2937, 1.442695
  %v2951 = vpow.pop %v2950
  %v2952 = vmul.f32 %v2938, 1.442695
  %v2953 = vpow.pop %v2952
  %v2954 = vmul.f32 %v2939, 1.442695
  %v2955 = vpow.pop %v2954
  %v2956 = vmul.f32 %v2940, 1.442695
  %v2957 = vpow.pop %v2956
  %v2958 = vmul.f32 %v2941, 1.442695
  %v2959 = vpow.pop %v2958
  %v2960 = vsel %vm525, %v2943, 0.0
  %2961 = vadd.xlane.f32.xlu0 %v2960
  %v2962 = vpop.xlane.xlu0 %2961
  %v2963 = vsel %vm525, %v2945, 0.0
  %2964 = vadd.xlane.f32.xlu0 %v2963
  %v2965 = vpop.xlane.xlu0 %2964
  %v2966 = vsel %vm525, %v2947, 0.0
  %2967 = vadd.xlane.f32.xlu0 %v2966
  %v2968 = vpop.xlane.xlu0 %2967
  %v2969 = vsel %vm525, %v2949, 0.0
  %2970 = vadd.xlane.f32.xlu0 %v2969
  %v2971 = vpop.xlane.xlu0 %2970
  %v2972 = vsel %vm525, %v2951, 0.0
  %2973 = vadd.xlane.f32.xlu0 %v2972
  %v2974 = vpop.xlane.xlu0 %2973
  %v2975 = vsel %vm525, %v2953, 0.0
  %2976 = vadd.xlane.f32.xlu0 %v2975
  %v2977 = vpop.xlane.xlu0 %2976
  %v2978 = vsel %vm525, %v2955, 0.0
  %2979 = vadd.xlane.f32.xlu0 %v2978
  %v2980 = vpop.xlane.xlu0 %2979
  %v2981 = vsel %vm525, %v2957, 0.0
  %2982 = vadd.xlane.f32.xlu0 %v2981
  %v2983 = vpop.xlane.xlu0 %2982
  %v2984 = vsel %vm525, %v2959, 0.0
  %2985 = vadd.xlane.f32.xlu0 %v2984
  %v2986 = vpop.xlane.xlu0 %2985
  %v2987 = vrcp.pop %v2962
  %v2988 = vrcp.pop %v2965
  %v2989 = vrcp.pop %v2968
  %v2990 = vrcp.pop %v2971
  %v2991 = vrcp.pop %v2974
  %v2992 = vrcp.pop %v2977
  %v2993 = vrcp.pop %v2980
  %v2994 = vrcp.pop %v2983
  %v2995 = vrcp.pop %v2986
  %v2996 = vmul.f32 %v2943, %v2987
  %v2997 = vmul.f32 %v2945, %v2988
  %v2998 = vmul.f32 %v2947, %v2989
  %v2999 = vmul.f32 %v2949, %v2990
  %v3000 = vmul.f32 %v2951, %v2991
  %v3001 = vmul.f32 %v2953, %v2992
  %v3002 = vmul.f32 %v2955, %v2993
  %v3003 = vmul.f32 %v2957, %v2994
  %v3004 = vmul.f32 %v2959, %v2995
  %v3005 = vpack.c.bf16 %v2997, %v2996
  %v3006 = vpack.c.bf16 %v2999, %v2998
  %v3007 = vpack.c.bf16 %v3001, %v3000
  %v3008 = vpack.c.bf16 %v3003, %v3002
  %v3009 = vpack.c.bf16 %v3004, %v3004
  %v3011 = vrot.slane %v1994, 1
  %v3013 = vsel %vm525, %v3011, 0
  %v3016 = vsel %vm525, %v3005, 0
  %v3019 = vsel %vm525, %v3006, 0
  %v3022 = vsel %vm525, %v3007, 0
  %v3025 = vsel %vm525, %v3008, 0
  %v3028 = vsel %vm525, %v3009, 0
  %3030 = vmatprep.subr.bf16.mxu0 0
  %3031 = vmatpush1.bf16.xpose.msra.mxu0 %v3016
  %3032 = vmatprep.subr.bf16.mxu0 0
  %3033 = vmatpush1.bf16.xpose.msra.mxu0 %v3019
  %3034 = vmatprep.subr.bf16.mxu0 0
  %3035 = vmatpush1.bf16.xpose.msra.mxu0 %v3022
  %3036 = vmatprep.subr.bf16.mxu0 0
  %3037 = vmatpush1.bf16.xpose.msra.mxu0 %v3025
  %3038 = vmatprep.subr.bf16.mxu0 0
  %3039 = vmatpush1.bf16.xpose.msra.mxu0 %v3028
  %3040 = vmatprep.subr.bf16.mxu0 0
  %3041 = vmatpush1.bf16.xpose.msra.mxu0 0
  %3042 = vmatprep.subr.bf16.mxu0 0
  %3043 = vmatpush1.bf16.xpose.msra.mxu0 0
  %3044 = vmatprep.subr.bf16.mxu0 0
  %3045 = vmatpush1.bf16.xpose.msra.mxu0 0
  %3046 = vmatprep.subr.bf16.mxu0 0
  %3047 = vmatpush1.bf16.xpose.msra.mxu0 0
  %3048 = vmatprep.subr.bf16.mxu0 0
  %3049 = vmatpush1.bf16.xpose.msra.mxu0 0
  %3050 = vmatprep.subr.bf16.mxu0 0
  %3051 = vmatpush1.bf16.xpose.msra.mxu0 0
  %3052 = vmatprep.subr.bf16.mxu0 0
  %3053 = vmatpush1.bf16.xpose.msra.mxu0 0
  %3054 = vmatprep.subr.bf16.mxu0 0
  %3055 = vmatpush1.bf16.xpose.msra.mxu0 0
  %3056 = vmatprep.subr.bf16.mxu0 0
  %3057 = vmatpush1.bf16.xpose.msra.mxu0 0
  %3058 = vmatprep.subr.bf16.mxu0 0
  %3059 = vmatpush1.bf16.xpose.msra.mxu0 0
  %3060 = vmatprep.subr.bf16.mxu0 0
  %3061 = vmatpush1.bf16.xpose.msra.mxu0 0
  %3062 = vmatprep.mubr.bf16.mxu0 0
  %3063 = vmatmul.mubr.bf16.gmra.mrb[0].mxu0 %v3013
  %v3064 = vpop.f32.mrb[0].mxu0
  %v3065 = vadd.f32 0.0, %v3064
  %v3066 = vpop.f32.mrb[0].mxu0
  %v3067 = vpop.f32.mrb[0].mxu0
  %v3068 = vadd.f32 0.0, %v3067
  %v3069 = vpop.f32.mrb[0].mxu0
  %3070 = vdwg.mxu0
  %v3071 = vld [vmem:[%s11 + $0x8] sm:$0xe]
  %v3072 = vld [vmem:[%s11 + $0xc] sm:$0x3]
  %v3073 = vpack.c.bf16 %v3068, %v3065
  %v3076 = vunpack.c.l.b16 %v3071
  %v3077 = vunpack.c.l.b16 %v3072
  %v3078 = vpack.c.b16 %v3077, %v3076
  %v3079 = vrot.slane %v3078, 1
  %3081 = vxpose.xlu0.c.b16.start [1/8] %v3079, 128
  %3082 = vxpose.xlu0.c.b16.cont [2/8] 0, 128
  %3083 = vxpose.xlu0.c.b16.cont [3/8] 0, 128
  %3084 = vxpose.xlu0.c.b16.cont [4/8] 0, 128
  %3085 = vxpose.xlu0.c.b16.cont [5/8] 0, 128
  %3086 = vxpose.xlu0.c.b16.cont [6/8] 0, 128
  %3087 = vxpose.xlu0.c.b16.cont [7/8] 0, 128
  %3088 = vxpose.xlu0.c.b16.end [8/8] 0, 128
  %v3089 = vpop.trf.xlu0
  %v3090 = vpop.trf.xlu0
  %v3091 = vpop.trf.xlu0
  %v3092 = vpop.trf.xlu0
  %v3093 = vpop.trf.xlu0
  %v3094 = vpop.trf.xlu0
  %v3095 = vpop.trf.xlu0
  %v3096 = vpop.trf.xlu0
  %v3098 = vsel %vm2023, %v3089, 0
  %v3101 = vsel %vm2023, %v3090, 0
  %v3104 = vsel %vm2023, %v3091, 0
  %v3107 = vand.u32 %v3073, %v2041
  %3109 = vmatprep.subr.bf16.mxu0 0
  %3110 = vmatpush1.bf16.msra.mxu0 %v3107
  %3111 = vmatprep.subr.bf16.mxu0 0
  %3112 = vmatpush1.bf16.msra.mxu0 0
  %3113 = vmatprep.subr.bf16.mxu0 0
  %3114 = vmatpush1.bf16.msra.mxu0 0
  %3115 = vmatprep.subr.bf16.mxu0 0
  %3116 = vmatpush1.bf16.msra.mxu0 0
  %3117 = vmatprep.subr.bf16.mxu0 0
  %3118 = vmatpush1.bf16.msra.mxu0 0
  %3119 = vmatprep.subr.bf16.mxu0 0
  %3120 = vmatpush1.bf16.msra.mxu0 0
  %3121 = vmatprep.subr.bf16.mxu0 0
  %3122 = vmatpush1.bf16.msra.mxu0 0
  %3123 = vmatprep.subr.bf16.mxu0 0
  %3124 = vmatpush1.bf16.msra.mxu0 0
  %3125 = vmatprep.subr.bf16.mxu0 0
  %3126 = vmatpush1.bf16.msra.mxu0 0
  %3127 = vmatprep.subr.bf16.mxu0 0
  %3128 = vmatpush1.bf16.msra.mxu0 0
  %3129 = vmatprep.subr.bf16.mxu0 0
  %3130 = vmatpush1.bf16.msra.mxu0 0
  %3131 = vmatprep.subr.bf16.mxu0 0
  %3132 = vmatpush1.bf16.msra.mxu0 0
  %3133 = vmatprep.subr.bf16.mxu0 0
  %3134 = vmatpush1.bf16.msra.mxu0 0
  %3135 = vmatprep.subr.bf16.mxu0 0
  %3136 = vmatpush1.bf16.msra.mxu0 0
  %3137 = vmatprep.subr.bf16.mxu0 0
  %3138 = vmatpush1.bf16.msra.mxu0 0
  %3139 = vmatprep.subr.bf16.mxu0 0
  %3140 = vmatpush1.bf16.msra.mxu0 0
  %3141 = vmatprep.mubr.bf16.mxu0 0
  %3142 = vmatmul.mubr.bf16.gmra.mrb[0].mxu0 %v3098
  %v3143 = vpop.f32.mrb[0].mxu0
  %v3144 = vadd.f32 0.0, %v3143
  %v3145 = vpop.f32.mrb[0].mxu0
  %v3146 = vpop.f32.mrb[0].mxu0
  %v3147 = vadd.f32 0.0, %v3146
  %v3148 = vpop.f32.mrb[0].mxu0
  %3149 = vmatprep.mubr.bf16.mxu0 0
  %3150 = vmatmul.mubr.bf16.gmra.mrb[0].mxu0 %v3101
  %v3151 = vpop.f32.mrb[0].mxu0
  %v3152 = vadd.f32 0.0, %v3151
  %v3153 = vpop.f32.mrb[0].mxu0
  %v3154 = vpop.f32.mrb[0].mxu0
  %v3155 = vadd.f32 0.0, %v3154
  %v3156 = vpop.f32.mrb[0].mxu0
  %3157 = vmatprep.mubr.bf16.mxu0 0
  %3158 = vmatmul.mubr.bf16.gmra.mrb[0].mxu0 %v3104
  %v3159 = vpop.f32.mrb[0].mxu0
  %v3160 = vadd.f32 0.0, %v3159
  %v3161 = vpop.f32.mrb[0].mxu0
  %v3162 = vpop.f32.mrb[0].mxu0
  %v3163 = vpop.f32.mrb[0].mxu0
  %3164 = vdwg.mxu0
  %v3165 = vadd.f32 %v2774, %v3144
  %v3166 = vadd.f32 %v2777, %v3147
  %v3167 = vadd.f32 %v2782, %v3152
  %v3168 = vadd.f32 %v2785, %v3155
  %v3169 = vadd.f32 %v2790, %v3160
  %vm3170 = vsmask.f32 2304
  %v3171 = vrot.slane %v2293, 5
  %v3172 = vrot.slane %v2296, 6
  %v3173 = vor.u32 %v3171, %v3172
  %v3175 = vshrl.u32 %v1950, 16
  %v3177 = vrot.slane %v3175, 5
  %v3178 = vshll.u32 %v1950, 16
  %v3180 = vrot.slane %v3178, 6
  %v3181 = vor.u32 %v3177, %v3180
  %v3182 = vsel %vm3170, %v3173, %v3181
  %3184 = vxpose.xlu0.c.b16.start [1/8] %v3182, 128
  %3185 = vxpose.xlu0.c.b16.cont [2/8] 0, 128
  %3186 = vxpose.xlu0.c.b16.cont [3/8] 0, 128
  %3187 = vxpose.xlu0.c.b16.cont [4/8] 0, 128
  %3188 = vxpose.xlu0.c.b16.cont [5/8] 0, 128
  %3189 = vxpose.xlu0.c.b16.cont [6/8] 0, 128
  %3190 = vxpose.xlu0.c.b16.cont [7/8] 0, 128
  %3191 = vxpose.xlu0.c.b16.end [8/8] 0, 128
  %v3192 = vpop.trf.xlu0
  %v3193 = vpop.trf.xlu0
  %v3194 = vpop.trf.xlu0
  %v3195 = vpop.trf.xlu0
  %v3196 = vpop.trf.xlu0
  %v3197 = vpop.trf.xlu0
  %v3198 = vpop.trf.xlu0
  %v3199 = vpop.trf.xlu0
  %vm3200 = vsmask.f32 256
  %v3201 = vrot.slane %v2328, 7
  %v3203 = vshrl.u32 %v1987, 16
  %v3205 = vrot.slane %v3203, 7
  %v3206 = vshll.u32 %v1987, 16
  %v3208 = vor.u32 %v3205, %v3206
  %v3209 = vsel %vm3200, %v3201, %v3208
  %v3211 = vsel %vm2023, %v3192, 0
  %v3214 = vsel %vm2023, %v3193, 0
  %v3217 = vsel %vm2023, %v3194, 0
  %v3220 = vsel %vm2023, %v3195, 0
  %v3223 = vsel %vm2023, %v3196, 0
  %v3226 = vand.u32 %v3209, %v2041
  %3228 = vmatprep.subr.bf16.mxu0 0
  %3229 = vmatpush1.bf16.msra.mxu0 %v3226
  %3230 = vmatprep.subr.bf16.mxu0 0
  %3231 = vmatpush1.bf16.msra.mxu0 0
  %3232 = vmatprep.subr.bf16.mxu0 0
  %3233 = vmatpush1.bf16.msra.mxu0 0
  %3234 = vmatprep.subr.bf16.mxu0 0
  %3235 = vmatpush1.bf16.msra.mxu0 0
  %3236 = vmatprep.subr.bf16.mxu0 0
  %3237 = vmatpush1.bf16.msra.mxu0 0
  %3238 = vmatprep.subr.bf16.mxu0 0
  %3239 = vmatpush1.bf16.msra.mxu0 0
  %3240 = vmatprep.subr.bf16.mxu0 0
  %3241 = vmatpush1.bf16.msra.mxu0 0
  %3242 = vmatprep.subr.bf16.mxu0 0
  %3243 = vmatpush1.bf16.msra.mxu0 0
  %3244 = vmatprep.subr.bf16.mxu0 0
  %3245 = vmatpush1.bf16.msra.mxu0 0
  %3246 = vmatprep.subr.bf16.mxu0 0
  %3247 = vmatpush1.bf16.msra.mxu0 0
  %3248 = vmatprep.subr.bf16.mxu0 0
  %3249 = vmatpush1.bf16.msra.mxu0 0
  %3250 = vmatprep.subr.bf16.mxu0 0
  %3251 = vmatpush1.bf16.msra.mxu0 0
  %3252 = vmatprep.subr.bf16.mxu0 0
  %3253 = vmatpush1.bf16.msra.mxu0 0
  %3254 = vmatprep.subr.bf16.mxu0 0
  %3255 = vmatpush1.bf16.msra.mxu0 0
  %3256 = vmatprep.subr.bf16.mxu0 0
  %3257 = vmatpush1.bf16.msra.mxu0 0
  %3258 = vmatprep.subr.bf16.mxu0 0
  %3259 = vmatpush1.bf16.msra.mxu0 0
  %3260 = vmatprep.mubr.bf16.mxu0 0
  %3261 = vmatmul.mubr.bf16.gmra.mrb[0].mxu0 %v3211
  %v3262 = vpop.f32.mrb[0].mxu0
  %v3263 = vadd.f32 %v1996, %v3262
  %v3264 = vpop.f32.mrb[0].mxu0
  %v3265 = vpop.f32.mrb[0].mxu0
  %v3266 = vadd.f32 %v1997, %v3265
  %v3267 = vpop.f32.mrb[0].mxu0
  %3268 = vmatprep.mubr.bf16.mxu0 0
  %3269 = vmatmul.mubr.bf16.gmra.mrb[0].mxu0 %v3214
  %v3270 = vpop.f32.mrb[0].mxu0
  %v3271 = vadd.f32 %v1998, %v3270
  %v3272 = vpop.f32.mrb[0].mxu0
  %v3273 = vpop.f32.mrb[0].mxu0
  %v3274 = vadd.f32 %v1999, %v3273
  %v3275 = vpop.f32.mrb[0].mxu0
  %3276 = vmatprep.mubr.bf16.mxu0 0
  %3277 = vmatmul.mubr.bf16.gmra.mrb[0].mxu0 %v3217
  %v3278 = vpop.f32.mrb[0].mxu0
  %v3279 = vadd.f32 %v2000, %v3278
  %v3280 = vpop.f32.mrb[0].mxu0
  %v3281 = vpop.f32.mrb[0].mxu0
  %v3282 = vadd.f32 %v2001, %v3281
  %v3283 = vpop.f32.mrb[0].mxu0
  %3284 = vmatprep.mubr.bf16.mxu0 0
  %3285 = vmatmul.mubr.bf16.gmra.mrb[0].mxu0 %v3220
  %v3286 = vpop.f32.mrb[0].mxu0
  %v3287 = vadd.f32 %v2002, %v3286
  %v3288 = vpop.f32.mrb[0].mxu0
  %v3289 = vpop.f32.mrb[0].mxu0
  %v3290 = vadd.f32 %v2003, %v3289
  %v3291 = vpop.f32.mrb[0].mxu0
  %3292 = vmatprep.mubr.bf16.mxu0 0
  %3293 = vmatmul.mubr.bf16.gmra.mrb[0].mxu0 %v3223
  %v3294 = vpop.f32.mrb[0].mxu0
  %v3295 = vadd.f32 %v2004, %v3294
  %v3296 = vpop.f32.mrb[0].mxu0
  %v3297 = vpop.f32.mrb[0].mxu0
  %v3298 = vpop.f32.mrb[0].mxu0
  %3299 = vdwg.mxu0
  %v3300 = vsel %vm525, %v3263, -inf
  %3301 = vmax.xlane.f32.xlu0 %v3300
  %v3302 = vpop.xlane.xlu0 %3301
  %v3303 = vsel %vm525, %v3266, -inf
  %3304 = vmax.xlane.f32.xlu0 %v3303
  %v3305 = vpop.xlane.xlu0 %3304
  %v3306 = vsel %vm525, %v3271, -inf
  %3307 = vmax.xlane.f32.xlu0 %v3306
  %v3308 = vpop.xlane.xlu0 %3307
  %v3309 = vsel %vm525, %v3274, -inf
  %3310 = vmax.xlane.f32.xlu0 %v3309
  %v3311 = vpop.xlane.xlu0 %3310
  %v3312 = vsel %vm525, %v3279, -inf
  %3313 = vmax.xlane.f32.xlu0 %v3312
  %v3314 = vpop.xlane.xlu0 %3313
  %v3315 = vsel %vm525, %v3282, -inf
  %3316 = vmax.xlane.f32.xlu0 %v3315
  %v3317 = vpop.xlane.xlu0 %3316
  %v3318 = vsel %vm525, %v3287, -inf
  %3319 = vmax.xlane.f32.xlu0 %v3318
  %v3320 = vpop.xlane.xlu0 %3319
  %v3321 = vsel %vm525, %v3290, -inf
  %3322 = vmax.xlane.f32.xlu0 %v3321
  %v3323 = vpop.xlane.xlu0 %3322
  %v3324 = vsel %vm525, %v3295, -inf
  %3325 = vmax.xlane.f32.xlu0 %v3324
  %v3326 = vpop.xlane.xlu0 %3325
  %v3327 = vsub.f32 %v3263, %v3302
  %v3328 = vsub.f32 %v3266, %v3305
  %v3329 = vsub.f32 %v3271, %v3308
  %v3330 = vsub.f32 %v3274, %v3311
  %v3331 = vsub.f32 %v3279, %v3314
  %v3332 = vsub.f32 %v3282, %v3317
  %v3333 = vsub.f32 %v3287, %v3320
  %v3334 = vsub.f32 %v3290, %v3323
  %v3335 = vsub.f32 %v3295, %v3326
  %v3336 = vmul.f32 %v3327, 1.442695
  %v3337 = vpow.pop %v3336
  %v3338 = vmul.f32 %v3328, 1.442695
  %v3339 = vpow.pop %v3338
  %v3340 = vmul.f32 %v3329, 1.442695
  %v3341 = vpow.pop %v3340
  %v3342 = vmul.f32 %v3330, 1.442695
  %v3343 = vpow.pop %v3342
  %v3344 = vmul.f32 %v3331, 1.442695
  %v3345 = vpow.pop %v3344
  %v3346 = vmul.f32 %v3332, 1.442695
  %v3347 = vpow.pop %v3346
  %v3348 = vmul.f32 %v3333, 1.442695
  %v3349 = vpow.pop %v3348
  %v3350 = vmul.f32 %v3334, 1.442695
  %v3351 = vpow.pop %v3350
  %v3352 = vmul.f32 %v3335, 1.442695
  %v3353 = vpow.pop %v3352
  %v3354 = vsel %vm525, %v3337, 0.0
  %3355 = vadd.xlane.f32.xlu0 %v3354
  %v3356 = vpop.xlane.xlu0 %3355
  %v3357 = vsel %vm525, %v3339, 0.0
  %3358 = vadd.xlane.f32.xlu0 %v3357
  %v3359 = vpop.xlane.xlu0 %3358
  %v3360 = vsel %vm525, %v3341, 0.0
  %3361 = vadd.xlane.f32.xlu0 %v3360
  %v3362 = vpop.xlane.xlu0 %3361
  %v3363 = vsel %vm525, %v3343, 0.0
  %3364 = vadd.xlane.f32.xlu0 %v3363
  %v3365 = vpop.xlane.xlu0 %3364
  %v3366 = vsel %vm525, %v3345, 0.0
  %3367 = vadd.xlane.f32.xlu0 %v3366
  %v3368 = vpop.xlane.xlu0 %3367
  %v3369 = vsel %vm525, %v3347, 0.0
  %3370 = vadd.xlane.f32.xlu0 %v3369
  %v3371 = vpop.xlane.xlu0 %3370
  %v3372 = vsel %vm525, %v3349, 0.0
  %3373 = vadd.xlane.f32.xlu0 %v3372
  %v3374 = vpop.xlane.xlu0 %3373
  %v3375 = vsel %vm525, %v3351, 0.0
  %3376 = vadd.xlane.f32.xlu0 %v3375
  %v3377 = vpop.xlane.xlu0 %3376
  %v3378 = vsel %vm525, %v3353, 0.0
  %3379 = vadd.xlane.f32.xlu0 %v3378
  %v3380 = vpop.xlane.xlu0 %3379
  %v3381 = vrcp.pop %v3356
  %v3382 = vrcp.pop %v3359
  %v3383 = vrcp.pop %v3362
  %v3384 = vrcp.pop %v3365
  %v3385 = vrcp.pop %v3368
  %v3386 = vrcp.pop %v3371
  %v3387 = vrcp.pop %v3374
  %v3388 = vrcp.pop %v3377
  %v3389 = vrcp.pop %v3380
  %v3390 = vmul.f32 %v3337, %v3381
  %v3391 = vmul.f32 %v3339, %v3382
  %v3392 = vmul.f32 %v3341, %v3383
  %v3393 = vmul.f32 %v3343, %v3384
  %v3394 = vmul.f32 %v3345, %v3385
  %v3395 = vmul.f32 %v3347, %v3386
  %v3396 = vmul.f32 %v3349, %v3387
  %v3397 = vmul.f32 %v3351, %v3388
  %v3398 = vmul.f32 %v3353, %v3389
  %v3399 = vpack.c.bf16 %v3391, %v3390
  %v3400 = vpack.c.bf16 %v3393, %v3392
  %v3401 = vpack.c.bf16 %v3395, %v3394
  %v3402 = vpack.c.bf16 %v3397, %v3396
  %v3403 = vpack.c.bf16 %v3398, %v3398
  %v3404 = vrot.slane %v2538, 5
  %v3405 = vrot.slane %v2541, 6
  %v3406 = vor.u32 %v3404, %v3405
  %v3408 = vshrl.u32 %v1995, 16
  %v3410 = vrot.slane %v3408, 5
  %v3411 = vshll.u32 %v1995, 16
  %v3413 = vrot.slane %v3411, 6
  %v3414 = vor.u32 %v3410, %v3413
  %v3415 = vsel %vm3170, %v3406, %v3414
  %v3417 = vsel %vm525, %v3415, 0
  %v3420 = vsel %vm525, %v3399, 0
  %v3423 = vsel %vm525, %v3400, 0
  %v3426 = vsel %vm525, %v3401, 0
  %v3429 = vsel %vm525, %v3402, 0
  %v3432 = vsel %vm525, %v3403, 0
  %3434 = vmatprep.subr.bf16.mxu0 0
  %3435 = vmatpush1.bf16.xpose.msra.mxu0 %v3420
  %3436 = vmatprep.subr.bf16.mxu0 0
  %3437 = vmatpush1.bf16.xpose.msra.mxu0 %v3423
  %3438 = vmatprep.subr.bf16.mxu0 0
  %3439 = vmatpush1.bf16.xpose.msra.mxu0 %v3426
  %3440 = vmatprep.subr.bf16.mxu0 0
  %3441 = vmatpush1.bf16.xpose.msra.mxu0 %v3429
  %3442 = vmatprep.subr.bf16.mxu0 0
  %3443 = vmatpush1.bf16.xpose.msra.mxu0 %v3432
  %3444 = vmatprep.subr.bf16.mxu0 0
  %3445 = vmatpush1.bf16.xpose.msra.mxu0 0
  %3446 = vmatprep.subr.bf16.mxu0 0
  %3447 = vmatpush1.bf16.xpose.msra.mxu0 0
  %3448 = vmatprep.subr.bf16.mxu0 0
  %3449 = vmatpush1.bf16.xpose.msra.mxu0 0
  %3450 = vmatprep.subr.bf16.mxu0 0
  %3451 = vmatpush1.bf16.xpose.msra.mxu0 0
  %3452 = vmatprep.subr.bf16.mxu0 0
  %3453 = vmatpush1.bf16.xpose.msra.mxu0 0
  %3454 = vmatprep.subr.bf16.mxu0 0
  %3455 = vmatpush1.bf16.xpose.msra.mxu0 0
  %3456 = vmatprep.subr.bf16.mxu0 0
  %3457 = vmatpush1.bf16.xpose.msra.mxu0 0
  %3458 = vmatprep.subr.bf16.mxu0 0
  %3459 = vmatpush1.bf16.xpose.msra.mxu0 0
  %3460 = vmatprep.subr.bf16.mxu0 0
  %3461 = vmatpush1.bf16.xpose.msra.mxu0 0
  %3462 = vmatprep.subr.bf16.mxu0 0
  %3463 = vmatpush1.bf16.xpose.msra.mxu0 0
  %3464 = vmatprep.subr.bf16.mxu0 0
  %3465 = vmatpush1.bf16.xpose.msra.mxu0 0
  %3466 = vmatprep.mubr.bf16.mxu0 0
  %3467 = vmatmul.mubr.bf16.gmra.mrb[0].mxu0 %v3417
  %v3468 = vpop.f32.mrb[0].mxu0
  %v3469 = vadd.f32 0.0, %v3468
  %v3470 = vpop.f32.mrb[0].mxu0
  %v3471 = vpop.f32.mrb[0].mxu0
  %v3472 = vadd.f32 0.0, %v3471
  %v3473 = vpop.f32.mrb[0].mxu0
  %3474 = vdwg.mxu0
  %v3475 = vld [vmem:[%s11 + $0xc] sm:$0xe]
  %v3476 = vld [vmem:[%s11 + $0x10] sm:$0x3]
  %v3477 = vpack.c.bf16 %v3472, %v3469
  %v3480 = vunpack.c.l.b16 %v3475
  %v3481 = vunpack.c.l.b16 %v3476
  %v3482 = vpack.c.b16 %v3481, %v3480
  %v3484 = vshrl.u32 %v3482, 16
  %v3486 = vrot.slane %v3484, 1
  %v3487 = vshll.u32 %v3482, 16
  %v3489 = vrot.slane %v3487, 2
  %v3490 = vor.u32 %v3486, %v3489
  %3492 = vxpose.xlu0.c.b16.start [1/8] %v3490, 128
  %3493 = vxpose.xlu0.c.b16.cont [2/8] 0, 128
  %3494 = vxpose.xlu0.c.b16.cont [3/8] 0, 128
  %3495 = vxpose.xlu0.c.b16.cont [4/8] 0, 128
  %3496 = vxpose.xlu0.c.b16.cont [5/8] 0, 128
  %3497 = vxpose.xlu0.c.b16.cont [6/8] 0, 128
  %3498 = vxpose.xlu0.c.b16.cont [7/8] 0, 128
  %3499 = vxpose.xlu0.c.b16.end [8/8] 0, 128
  %v3500 = vpop.trf.xlu0
  %v3501 = vpop.trf.xlu0
  %v3502 = vpop.trf.xlu0
  %v3503 = vpop.trf.xlu0
  %v3504 = vpop.trf.xlu0
  %v3505 = vpop.trf.xlu0
  %v3506 = vpop.trf.xlu0
  %v3507 = vpop.trf.xlu0
  %v3509 = vsel %vm2023, %v3500, 0
  %v3512 = vsel %vm2023, %v3501, 0
  %v3515 = vsel %vm2023, %v3502, 0
  %v3518 = vand.u32 %v3477, %v2041
  %3520 = vmatprep.subr.bf16.mxu0 0
  %3521 = vmatpush1.bf16.msra.mxu0 %v3518
  %3522 = vmatprep.subr.bf16.mxu0 0
  %3523 = vmatpush1.bf16.msra.mxu0 0
  %3524 = vmatprep.subr.bf16.mxu0 0
  %3525 = vmatpush1.bf16.msra.mxu0 0
  %3526 = vmatprep.subr.bf16.mxu0 0
  %3527 = vmatpush1.bf16.msra.mxu0 0
  %3528 = vmatprep.subr.bf16.mxu0 0
  %3529 = vmatpush1.bf16.msra.mxu0 0
  %3530 = vmatprep.subr.bf16.mxu0 0
  %3531 = vmatpush1.bf16.msra.mxu0 0
  %3532 = vmatprep.subr.bf16.mxu0 0
  %3533 = vmatpush1.bf16.msra.mxu0 0
  %3534 = vmatprep.subr.bf16.mxu0 0
  %3535 = vmatpush1.bf16.msra.mxu0 0
  %3536 = vmatprep.subr.bf16.mxu0 0
  %3537 = vmatpush1.bf16.msra.mxu0 0
  %3538 = vmatprep.subr.bf16.mxu0 0
  %3539 = vmatpush1.bf16.msra.mxu0 0
  %3540 = vmatprep.subr.bf16.mxu0 0
  %3541 = vmatpush1.bf16.msra.mxu0 0
  %3542 = vmatprep.subr.bf16.mxu0 0
  %3543 = vmatpush1.bf16.msra.mxu0 0
  %3544 = vmatprep.subr.bf16.mxu0 0
  %3545 = vmatpush1.bf16.msra.mxu0 0
  %3546 = vmatprep.subr.bf16.mxu0 0
  %3547 = vmatpush1.bf16.msra.mxu0 0
  %3548 = vmatprep.subr.bf16.mxu0 0
  %3549 = vmatpush1.bf16.msra.mxu0 0
  %3550 = vmatprep.subr.bf16.mxu0 0
  %3551 = vmatpush1.bf16.msra.mxu0 0
  %3552 = vmatprep.mubr.bf16.mxu0 0
  %3553 = vmatmul.mubr.bf16.gmra.mrb[0].mxu0 %v3509
  %v3554 = vpop.f32.mrb[0].mxu0
  %v3555 = vadd.f32 0.0, %v3554
  %v3556 = vpop.f32.mrb[0].mxu0
  %v3557 = vpop.f32.mrb[0].mxu0
  %v3558 = vadd.f32 0.0, %v3557
  %v3559 = vpop.f32.mrb[0].mxu0
  %3560 = vmatprep.mubr.bf16.mxu0 0
  %3561 = vmatmul.mubr.bf16.gmra.mrb[0].mxu0 %v3512
  %v3562 = vpop.f32.mrb[0].mxu0
  %v3563 = vadd.f32 0.0, %v3562
  %v3564 = vpop.f32.mrb[0].mxu0
  %v3565 = vpop.f32.mrb[0].mxu0
  %v3566 = vadd.f32 0.0, %v3565
  %v3567 = vpop.f32.mrb[0].mxu0
  %3568 = vmatprep.mubr.bf16.mxu0 0
  %3569 = vmatmul.mubr.bf16.gmra.mrb[0].mxu0 %v3515
  %v3570 = vpop.f32.mrb[0].mxu0
  %v3571 = vadd.f32 0.0, %v3570
  %v3572 = vpop.f32.mrb[0].mxu0
  %v3573 = vpop.f32.mrb[0].mxu0
  %v3574 = vpop.f32.mrb[0].mxu0
  %3575 = vdwg.mxu0
  %v3576 = vadd.f32 %v3165, %v3555
  %v3577 = vadd.f32 %v3166, %v3558
  %v3578 = vadd.f32 %v3167, %v3563
  %v3579 = vadd.f32 %v3168, %v3566
  %v3580 = vadd.f32 %v3169, %v3571
  %3581 = vst.msk [vmem:[%s13] sm:$0xff] %vm525, %v3576
  %3582 = vst.msk [vmem:[%s13 + $0x8] sm:$0xff] %vm525, %v3577
  %3583 = vst.msk [vmem:[%s13 + $0x10] sm:$0xff] %vm525, %v3578
  %3584 = vst.msk [vmem:[%s13 + $0x18] sm:$0xff] %vm525, %v3579
  %vm3585 = vcmask 584704
  %3586 = vst.msk [vmem:[%s13 + $0x20] sm:$0xf] %vm3585, %v3580
  // Predicated region
  $region54: #{_lambda_.1} parent=0 // pred_check
    _
  $region55: #{_lambda_.1} parent=0 // pred_check_branch
    %3588 = sbr.rel (0) target = $region57
  $region56: #{_lambda_.1} parent=0 // pred_region
    _
  $region57: #{_lambda_.1} parent=0 // pred_fallthru
    _
  // Predicated region
  $region58: #{_lambda_.1} parent=0 // pred_check
    _
  $region59: #{_lambda_.1} parent=0 // pred_check_branch
    %3590 = sbr.rel (0) target = $region61
  $region60: #{_lambda_.1} parent=0 // pred_region
    _
  $region61: #{_lambda_.1} parent=0 // pred_fallthru
    _

</llo_original>
